<compile_context>
chip_gen: v7x
topology: tpu7x:2x2x1
jax: 0.10.0
libtpu: 0.0.40
codegen_flags: <defaults>
</compile_context>

<pallas_src>
import functools

import jax
import jax.numpy as jnp
from jax.experimental import pallas as pl
from jax.experimental.pallas import tpu as pltpu

EPS = 1e-5

# Encoder: input_dim -> 128 -> 128 -> 128 -> 128 -> 8   (each Linear + BN + ReLU)
# Decoder: 8 -> 128 -> 128 -> 128 -> 128 -> input_dim   (last Linear has no BN/ReLU)


def _layer_dims(input_dim):
    enc = [(input_dim, 128), (128, 128), (128, 128), (128, 128), (128, 8)]
    dec = [(8, 128), (128, 128), (128, 128), (128, 128), (128, input_dim)]
    return enc + dec


def _round_up(n, m):
    return ((n + m - 1) // m) * m


def autoencoder_kernel(n_layers, input_dim, x_ref, w_hbm, aux_ref, out_ref, wbuf, sem):
    """x_ref:(B,input_dim) f32 VMEM; w_hbm:(L,D,D) bf16 HBM; aux_ref:(L,8,D) f32 VMEM.

    aux rows per layer: [bias, gamma, beta, 0...].  Weight tiles are manually
    double-buffered so layer i+1's DMA overlaps layer i's compute.
    """

    def start_fetch(i, slot):
        pltpu.make_async_copy(w_hbm.at[i], wbuf.at[slot], sem.at[slot]).start()

    def wait_fetch(i, slot):
        pltpu.make_async_copy(w_hbm.at[i], wbuf.at[slot], sem.at[slot]).wait()

    start_fetch(0, 0)                                       # prime layer 0's weights

    h = x_ref[...]                                          # (B, input_dim) f32
    inv_b = 1.0 / h.shape[0]                                # static batch size

    for i in range(n_layers):                               # static unroll, 10 layers
        slot = i & 1
        wait_fetch(i, slot)
        if i + 1 < n_layers:
            start_fetch(i + 1, 1 - slot)                    # overlap next weight DMA

        if i == 0:
            # Only the first input_dim rows of the padded tile are real weights;
            # static, tile-aligned sublane slice -> free view.
            w = wbuf[slot, :input_dim, :]
        else:
            w = wbuf[slot]                                  # (D, D) bf16, zero-padded
        z = jnp.dot(h.astype(jnp.bfloat16), w,
                    preferred_element_type=jnp.float32)     # MXU, f32 accumulate

        a = aux_ref[i]                                      # (8, D) f32, one vreg
        if i != n_layers - 1:
            # Linear bias is mathematically cancelled by the BN mean subtraction -> dropped.
            gamma = a[1:2, :]
            beta = a[2:3, :]
            # One-pass BN statistics (f32): mean = E[z], var = E[z^2] - mean^2 (biased).
            s1 = jnp.sum(z, axis=0, keepdims=True)          # (1, D)
            s2 = jnp.sum(z * z, axis=0, keepdims=True)      # (1, D)
            mean = s1 * inv_b
            var = jnp.maximum(s2 * inv_b - mean * mean, 0.0)
            scale = gamma * jax.lax.rsqrt(var + EPS)        # (1, D)
            shift = beta - mean * scale                     # (1, D)
            h = jnp.maximum(z * scale + shift, 0.0)         # fused BN + affine + ReLU
        else:
            # Final decoder Linear keeps its bias; store only the real features.
            out_ref[...] = (z[:, :input_dim] + a[0:1, :input_dim]).astype(out_ref.dtype)


def init_params(key, input_dim):
    """Packed parameters mimicking PyTorch defaults (U(-1/sqrt(fan_in), +)).

    Returns:
      w_blob: (n_layers, d_pad, d_pad) bf16, zero-padded weights stored as (in, out).
      aux:    (n_layers, 8, d_pad) f32; row 0 = bias, row 1 = gamma, row 2 = beta.
              Padded lanes: bias 0, gamma 1, beta 0 -> padded activations stay exactly 0.
    """
    dims = _layer_dims(input_dim)
    n_layers = len(dims)
    d_pad = _round_up(max(input_dim, 128), 128)

    w_blob = jnp.zeros((n_layers, d_pad, d_pad), jnp.float32)
    aux = jnp.zeros((n_layers, 8, d_pad), jnp.float32)
    aux = aux.at[:, 1, :].set(1.0)  # gamma defaults to 1 (incl. padded lanes)

    for i, (fan_in, fan_out) in enumerate(dims):
        key, kw, kb, kg, kbe = jax.random.split(key, 5)
        bound = 1.0 / (float(fan_in) ** 0.5)
        w = jax.random.uniform(kw, (fan_in, fan_out), jnp.float32, -bound, bound)
        b = jax.random.uniform(kb, (fan_out,), jnp.float32, -bound, bound)
        w_blob = w_blob.at[i, :fan_in, :fan_out].set(w)
        aux = aux.at[i, 0, :fan_out].set(b)
        if i != n_layers - 1:
            gamma = 1.0 + 0.1 * jax.random.normal(kg, (fan_out,), jnp.float32)
            beta = 0.1 * jax.random.normal(kbe, (fan_out,), jnp.float32)
            aux = aux.at[i, 1, :fan_out].set(gamma)
            aux = aux.at[i, 2, :fan_out].set(beta)

    return w_blob.astype(jnp.bfloat16), aux


@functools.partial(jax.jit, static_argnames=("input_dim",))
def autoencoder_forward(x, w_blob, aux, *, input_dim):
    B = x.shape[0]
    n_layers, d_pad, _ = w_blob.shape

    # Tiny working set (< 1 MiB) -> single grid point; batch tiling would need a
    # cross-tile BN stats reduction first (see module docstring).
    return pl.pallas_call(
        functools.partial(autoencoder_kernel, n_layers, input_dim),
        out_shape=jax.ShapeDtypeStruct((B, input_dim), jnp.float32),
        in_specs=[
            pl.BlockSpec(memory_space=pltpu.VMEM),   # x: (B, input_dim), auto-DMA
            pl.BlockSpec(memory_space=pl.ANY),       # w_blob stays in HBM; manual DMA
            pl.BlockSpec(memory_space=pltpu.VMEM),   # aux: 40 KiB, auto-DMA
        ],
        out_specs=pl.BlockSpec(memory_space=pltpu.VMEM),
        scratch_shapes=[
            pltpu.VMEM((2, d_pad, d_pad), jnp.bfloat16),  # double-buffered weight tile
            pltpu.SemaphoreType.DMA((2,)),
        ],
    )(x, w_blob, aux)


def reference_forward(x, w_blob, aux, input_dim):
    """Pure-JAX reference mirroring the PyTorch module (Linear+bias, training-mode BN,
    ReLU), using the same bf16 weights / bf16-input f32-accumulate matmuls as the kernel."""
    dims = _layer_dims(input_dim)
    n_layers = len(dims)
    h = x.astype(jnp.float32)
    for i, (fan_in, fan_out) in enumerate(dims):
        w = w_blob[i, :fan_in, :fan_out]          # bf16 values
        b = aux[i, 0, :fan_out]
        h = jnp.dot(h.astype(jnp.bfloat16), w, preferred_element_type=jnp.float32) + b
        if i != n_layers - 1:
            gamma = aux[i, 1, :fan_out]
            beta = aux[i, 2, :fan_out]
            mean = jnp.mean(h, axis=0, keepdims=True)
            var = jnp.mean((h - mean) ** 2, axis=0, keepdims=True)
            h = (h - mean) * jax.lax.rsqrt(var + EPS) * gamma + beta
            h = jnp.maximum(h, 0.0)
    return h


if __name__ == "__main__":
    INPUT_DIM = 32
    BATCH = 256   # >= 256 rows so the MXU is fed; BN stats are exact over this batch.

    key = jax.random.PRNGKey(0)
    key, kx = jax.random.split(key)
    x = jax.random.normal(kx, (BATCH, INPUT_DIM), jnp.float32)
    w_blob, aux = init_params(key, INPUT_DIM)

    out = autoencoder_forward(x, w_blob, aux, input_dim=INPUT_DIM)
    out = jax.block_until_ready(out)

    ref = reference_forward(x, w_blob, aux, INPUT_DIM)
    assert out.shape == (BATCH, INPUT_DIM), out.shape
    max_err = float(jnp.max(jnp.abs(out - ref)))
    # Kernel drops BN-cancelled biases, uses one-pass variance, and folds BN into one FMA
    # (all mathematically identical); remaining difference is bf16/f32 rounding noise
    # through the 10-layer chain.
    assert max_err < 2e-2, max_err
    print("KERNEL_OK")
</pallas_src>

<mosaic_0001>
module attributes {stable_mosaic.version = 11 : i64} {
  func.func @autoencoder_kernel(%arg0: memref<256x32xf32, #tpu.memory_space<vmem>>, %arg1: memref<10x128x128xbf16, #tpu.memory_space<any>>, %arg2: memref<10x8x128xf32, #tpu.memory_space<vmem>>, %arg3: memref<256x32xf32, #tpu.memory_space<vmem>>, %arg4: memref<2x128x128xbf16, #tpu.memory_space<vmem>>, %arg5: memref<2x!tpu.dma_semaphore, #tpu.memory_space<semaphore_mem>>) attributes {dimension_semantics = [], scalar_prefetch = 0 : i64, scratch_operands = 2 : i64, tpu.core_type = #tpu.core_type<tc>} {
    %c0_i32 = arith.constant 0 : i32
    %c0_i32_0 = arith.constant 0 : i32
    %c0_i32_1 = arith.constant 0 : i32
    %c0_i32_2 = arith.constant 0 : i32
    %c0_i32_3 = arith.constant 0 : i32
    %0 = tpu.memref_slice %arg1[%c0_i32, %c0_i32_2, %c0_i32_3] : memref<10x128x128xbf16, #tpu.memory_space<any>> -> memref<1x128x128xbf16, #tpu.memory_space<any>>
    %1 = tpu.memref_squeeze %0 : memref<1x128x128xbf16, #tpu.memory_space<any>> -> memref<128x128xbf16, #tpu.memory_space<any>>
    %c0_i32_4 = arith.constant 0 : i32
    %c0_i32_5 = arith.constant 0 : i32
    %2 = tpu.memref_slice %arg4[%c0_i32_0, %c0_i32_4, %c0_i32_5] : memref<2x128x128xbf16, #tpu.memory_space<vmem>> -> memref<1x128x128xbf16, #tpu.memory_space<vmem>>
    %3 = tpu.memref_squeeze %2 : memref<1x128x128xbf16, #tpu.memory_space<vmem>> -> memref<128x128xbf16, #tpu.memory_space<vmem>>
    %4 = tpu.memref_slice %arg5[%c0_i32_1] : memref<2x!tpu.dma_semaphore, #tpu.memory_space<semaphore_mem>> -> memref<1x!tpu.dma_semaphore, #tpu.memory_space<semaphore_mem>>
    %5 = tpu.memref_squeeze %4 : memref<1x!tpu.dma_semaphore, #tpu.memory_space<semaphore_mem>> -> memref<!tpu.dma_semaphore, #tpu.memory_space<semaphore_mem>>
    tpu.enqueue_dma source(%1 : memref<128x128xbf16, #tpu.memory_space<any>>) target(%3 : memref<128x128xbf16, #tpu.memory_space<vmem>>) target_semaphore(%5 : memref<!tpu.dma_semaphore, #tpu.memory_space<semaphore_mem>>)
    %c0 = arith.constant 0 : index
    %c0_6 = arith.constant 0 : index
    %6 = vector.load %arg0[%c0, %c0_6] : memref<256x32xf32, #tpu.memory_space<vmem>>, vector<256x32xf32>
    %c0_i32_7 = arith.constant 0 : i32
    %c0_i32_8 = arith.constant 0 : i32
    %c0_i32_9 = arith.constant 0 : i32
    %c0_i32_10 = arith.constant 0 : i32
    %c0_i32_11 = arith.constant 0 : i32
    %7 = tpu.memref_slice %arg1[%c0_i32_7, %c0_i32_10, %c0_i32_11] : memref<10x128x128xbf16, #tpu.memory_space<any>> -> memref<1x128x128xbf16, #tpu.memory_space<any>>
    %8 = tpu.memref_squeeze %7 : memref<1x128x128xbf16, #tpu.memory_space<any>> -> memref<128x128xbf16, #tpu.memory_space<any>>
    %c0_i32_12 = arith.constant 0 : i32
    %c0_i32_13 = arith.constant 0 : i32
    %9 = tpu.memref_slice %arg4[%c0_i32_8, %c0_i32_12, %c0_i32_13] : memref<2x128x128xbf16, #tpu.memory_space<vmem>> -> memref<1x128x128xbf16, #tpu.memory_space<vmem>>
    %10 = tpu.memref_squeeze %9 : memref<1x128x128xbf16, #tpu.memory_space<vmem>> -> memref<128x128xbf16, #tpu.memory_space<vmem>>
    %11 = tpu.memref_slice %arg5[%c0_i32_9] : memref<2x!tpu.dma_semaphore, #tpu.memory_space<semaphore_mem>> -> memref<1x!tpu.dma_semaphore, #tpu.memory_space<semaphore_mem>>
    %12 = tpu.memref_squeeze %11 : memref<1x!tpu.dma_semaphore, #tpu.memory_space<semaphore_mem>> -> memref<!tpu.dma_semaphore, #tpu.memory_space<semaphore_mem>>
    tpu.wait_dma2 semaphore(%12 : memref<!tpu.dma_semaphore, #tpu.memory_space<semaphore_mem>>) src(%8 : memref<128x128xbf16, #tpu.memory_space<any>>) dst(%10 : memref<128x128xbf16, #tpu.memory_space<vmem>>)
    %c1_i32 = arith.constant 1 : i32
    %c1_i32_14 = arith.constant 1 : i32
    %c1_i32_15 = arith.constant 1 : i32
    %c0_i32_16 = arith.constant 0 : i32
    %c0_i32_17 = arith.constant 0 : i32
    %13 = tpu.memref_slice %arg1[%c1_i32, %c0_i32_16, %c0_i32_17] : memref<10x128x128xbf16, #tpu.memory_space<any>> -> memref<1x128x128xbf16, #tpu.memory_space<any>>
    %14 = tpu.memref_squeeze %13 : memref<1x128x128xbf16, #tpu.memory_space<any>> -> memref<128x128xbf16, #tpu.memory_space<any>>
    %c0_i32_18 = arith.constant 0 : i32
    %c0_i32_19 = arith.constant 0 : i32
    %15 = tpu.memref_slice %arg4[%c1_i32_14, %c0_i32_18, %c0_i32_19] : memref<2x128x128xbf16, #tpu.memory_space<vmem>> -> memref<1x128x128xbf16, #tpu.memory_space<vmem>>
    %16 = tpu.memref_squeeze %15 : memref<1x128x128xbf16, #tpu.memory_space<vmem>> -> memref<128x128xbf16, #tpu.memory_space<vmem>>
    %17 = tpu.memref_slice %arg5[%c1_i32_15] : memref<2x!tpu.dma_semaphore, #tpu.memory_space<semaphore_mem>> -> memref<1x!tpu.dma_semaphore, #tpu.memory_space<semaphore_mem>>
    %18 = tpu.memref_squeeze %17 : memref<1x!tpu.dma_semaphore, #tpu.memory_space<semaphore_mem>> -> memref<!tpu.dma_semaphore, #tpu.memory_space<semaphore_mem>>
    tpu.enqueue_dma source(%14 : memref<128x128xbf16, #tpu.memory_space<any>>) target(%16 : memref<128x128xbf16, #tpu.memory_space<vmem>>) target_semaphore(%18 : memref<!tpu.dma_semaphore, #tpu.memory_space<semaphore_mem>>)
    %c0_20 = arith.constant 0 : index
    %c0_21 = arith.constant 0 : index
    %c0_22 = arith.constant 0 : index
    %19 = vector.load %arg4[%c0_20, %c0_21, %c0_22] : memref<2x128x128xbf16, #tpu.memory_space<vmem>>, vector<1x32x128xbf16>
    %20 = vector.shape_cast %19 : vector<1x32x128xbf16> to vector<32x128xbf16>
    %21 = arith.truncf %6 : vector<256x32xf32> to vector<256x32xbf16>
    %cst = arith.constant dense<0.000000e+00> : vector<256x128xf32>
    %22 = tpu.matmul %21, %20, %cst {dimension_numbers = #tpu.dot_dimension_numbers<[1], [0], [0], [1], [0, 0, 1, 1], [], []>} : vector<256x32xbf16>, vector<32x128xbf16>, vector<256x128xf32> -> vector<256x128xf32>
    %c0_23 = arith.constant 0 : index
    %c0_24 = arith.constant 0 : index
    %c0_25 = arith.constant 0 : index
    %23 = vector.load %arg2[%c0_23, %c0_24, %c0_25] : memref<10x8x128xf32, #tpu.memory_space<vmem>>, vector<1x8x128xf32>
    %24 = vector.shape_cast %23 : vector<1x8x128xf32> to vector<8x128xf32>
    %25 = vector.extract_strided_slice %24 {offsets = [1, 0], sizes = [1, 128], strides = [1, 1]} : vector<8x128xf32> to vector<1x128xf32>
    %26 = vector.extract_strided_slice %24 {offsets = [2, 0], sizes = [1, 128], strides = [1, 1]} : vector<8x128xf32> to vector<1x128xf32>
    %cst_26 = arith.constant dense<0.000000e+00> : vector<128xf32>
    %27 = vector.multi_reduction <add>, %22, %cst_26 [0] : vector<256x128xf32> to vector<128xf32>
    %28 = vector.shape_cast %27 : vector<128xf32> to vector<1x128xf32>
    %29 = arith.mulf %22, %22 : vector<256x128xf32>
    %cst_27 = arith.constant dense<0.000000e+00> : vector<128xf32>
    %30 = vector.multi_reduction <add>, %29, %cst_27 [0] : vector<256x128xf32> to vector<128xf32>
    %31 = vector.shape_cast %30 : vector<128xf32> to vector<1x128xf32>
    %cst_28 = arith.constant 3.906250e-03 : f32
    %32 = vector.broadcast %cst_28 : f32 to vector<1x128xf32>
    %33 = arith.mulf %28, %32 : vector<1x128xf32>
    %cst_29 = arith.constant 3.906250e-03 : f32
    %34 = vector.broadcast %cst_29 : f32 to vector<1x128xf32>
    %35 = arith.mulf %31, %34 : vector<1x128xf32>
    %36 = arith.mulf %33, %33 : vector<1x128xf32>
    %37 = arith.subf %35, %36 : vector<1x128xf32>
    %cst_30 = arith.constant 0.000000e+00 : f32
    %38 = vector.broadcast %cst_30 : f32 to vector<1x128xf32>
    %39 = arith.maximumf %37, %38 : vector<1x128xf32>
    %cst_31 = arith.constant 9.99999974E-6 : f32
    %40 = vector.broadcast %cst_31 : f32 to vector<1x128xf32>
    %41 = arith.addf %39, %40 : vector<1x128xf32>
    %42 = math.rsqrt %41 : vector<1x128xf32>
    %43 = arith.mulf %25, %42 : vector<1x128xf32>
    %44 = arith.mulf %33, %43 : vector<1x128xf32>
    %45 = arith.subf %26, %44 : vector<1x128xf32>
    %46 = vector.broadcast %43 : vector<1x128xf32> to vector<256x128xf32>
    %47 = arith.mulf %22, %46 : vector<256x128xf32>
    %48 = vector.broadcast %45 : vector<1x128xf32> to vector<256x128xf32>
    %49 = arith.addf %47, %48 : vector<256x128xf32>
    %cst_32 = arith.constant 0.000000e+00 : f32
    %50 = vector.broadcast %cst_32 : f32 to vector<256x128xf32>
    %51 = arith.maximumf %49, %50 : vector<256x128xf32>
    %c1_i32_33 = arith.constant 1 : i32
    %c1_i32_34 = arith.constant 1 : i32
    %c1_i32_35 = arith.constant 1 : i32
    %c0_i32_36 = arith.constant 0 : i32
    %c0_i32_37 = arith.constant 0 : i32
    %52 = tpu.memref_slice %arg1[%c1_i32_33, %c0_i32_36, %c0_i32_37] : memref<10x128x128xbf16, #tpu.memory_space<any>> -> memref<1x128x128xbf16, #tpu.memory_space<any>>
    %53 = tpu.memref_squeeze %52 : memref<1x128x128xbf16, #tpu.memory_space<any>> -> memref<128x128xbf16, #tpu.memory_space<any>>
    %c0_i32_38 = arith.constant 0 : i32
    %c0_i32_39 = arith.constant 0 : i32
    %54 = tpu.memref_slice %arg4[%c1_i32_34, %c0_i32_38, %c0_i32_39] : memref<2x128x128xbf16, #tpu.memory_space<vmem>> -> memref<1x128x128xbf16, #tpu.memory_space<vmem>>
    %55 = tpu.memref_squeeze %54 : memref<1x128x128xbf16, #tpu.memory_space<vmem>> -> memref<128x128xbf16, #tpu.memory_space<vmem>>
    %56 = tpu.memref_slice %arg5[%c1_i32_35] : memref<2x!tpu.dma_semaphore, #tpu.memory_space<semaphore_mem>> -> memref<1x!tpu.dma_semaphore, #tpu.memory_space<semaphore_mem>>
    %57 = tpu.memref_squeeze %56 : memref<1x!tpu.dma_semaphore, #tpu.memory_space<semaphore_mem>> -> memref<!tpu.dma_semaphore, #tpu.memory_space<semaphore_mem>>
    tpu.wait_dma2 semaphore(%57 : memref<!tpu.dma_semaphore, #tpu.memory_space<semaphore_mem>>) src(%53 : memref<128x128xbf16, #tpu.memory_space<any>>) dst(%55 : memref<128x128xbf16, #tpu.memory_space<vmem>>)
    %c2_i32 = arith.constant 2 : i32
    %c0_i32_40 = arith.constant 0 : i32
    %c0_i32_41 = arith.constant 0 : i32
    %c0_i32_42 = arith.constant 0 : i32
    %c0_i32_43 = arith.constant 0 : i32
    %58 = tpu.memref_slice %arg1[%c2_i32, %c0_i32_42, %c0_i32_43] : memref<10x128x128xbf16, #tpu.memory_space<any>> -> memref<1x128x128xbf16, #tpu.memory_space<any>>
    %59 = tpu.memref_squeeze %58 : memref<1x128x128xbf16, #tpu.memory_space<any>> -> memref<128x128xbf16, #tpu.memory_space<any>>
    %c0_i32_44 = arith.constant 0 : i32
    %c0_i32_45 = arith.constant 0 : i32
    %60 = tpu.memref_slice %arg4[%c0_i32_40, %c0_i32_44, %c0_i32_45] : memref<2x128x128xbf16, #tpu.memory_space<vmem>> -> memref<1x128x128xbf16, #tpu.memory_space<vmem>>
    %61 = tpu.memref_squeeze %60 : memref<1x128x128xbf16, #tpu.memory_space<vmem>> -> memref<128x128xbf16, #tpu.memory_space<vmem>>
    %62 = tpu.memref_slice %arg5[%c0_i32_41] : memref<2x!tpu.dma_semaphore, #tpu.memory_space<semaphore_mem>> -> memref<1x!tpu.dma_semaphore, #tpu.memory_space<semaphore_mem>>
    %63 = tpu.memref_squeeze %62 : memref<1x!tpu.dma_semaphore, #tpu.memory_space<semaphore_mem>> -> memref<!tpu.dma_semaphore, #tpu.memory_space<semaphore_mem>>
    tpu.enqueue_dma source(%59 : memref<128x128xbf16, #tpu.memory_space<any>>) target(%61 : memref<128x128xbf16, #tpu.memory_space<vmem>>) target_semaphore(%63 : memref<!tpu.dma_semaphore, #tpu.memory_space<semaphore_mem>>)
    %c1 = arith.constant 1 : index
    %c0_46 = arith.constant 0 : index
    %c0_47 = arith.constant 0 : index
    %64 = vector.load %arg4[%c1, %c0_46, %c0_47] : memref<2x128x128xbf16, #tpu.memory_space<vmem>>, vector<1x128x128xbf16>
    %65 = vector.shape_cast %64 : vector<1x128x128xbf16> to vector<128x128xbf16>
    %66 = arith.truncf %51 : vector<256x128xf32> to vector<256x128xbf16>
    %cst_48 = arith.constant dense<0.000000e+00> : vector<256x128xf32>
    %67 = tpu.matmul %66, %65, %cst_48 {dimension_numbers = #tpu.dot_dimension_numbers<[1], [0], [0], [1], [0, 0, 1, 1], [], []>} : vector<256x128xbf16>, vector<128x128xbf16>, vector<256x128xf32> -> vector<256x128xf32>
    %c1_49 = arith.constant 1 : index
    %c0_50 = arith.constant 0 : index
    %c0_51 = arith.constant 0 : index
    %68 = vector.load %arg2[%c1_49, %c0_50, %c0_51] : memref<10x8x128xf32, #tpu.memory_space<vmem>>, vector<1x8x128xf32>
    %69 = vector.shape_cast %68 : vector<1x8x128xf32> to vector<8x128xf32>
    %70 = vector.extract_strided_slice %69 {offsets = [1, 0], sizes = [1, 128], strides = [1, 1]} : vector<8x128xf32> to vector<1x128xf32>
    %71 = vector.extract_strided_slice %69 {offsets = [2, 0], sizes = [1, 128], strides = [1, 1]} : vector<8x128xf32> to vector<1x128xf32>
    %cst_52 = arith.constant dense<0.000000e+00> : vector<128xf32>
    %72 = vector.multi_reduction <add>, %67, %cst_52 [0] : vector<256x128xf32> to vector<128xf32>
    %73 = vector.shape_cast %72 : vector<128xf32> to vector<1x128xf32>
    %74 = arith.mulf %67, %67 : vector<256x128xf32>
    %cst_53 = arith.constant dense<0.000000e+00> : vector<128xf32>
    %75 = vector.multi_reduction <add>, %74, %cst_53 [0] : vector<256x128xf32> to vector<128xf32>
    %76 = vector.shape_cast %75 : vector<128xf32> to vector<1x128xf32>
    %cst_54 = arith.constant 3.906250e-03 : f32
    %77 = vector.broadcast %cst_54 : f32 to vector<1x128xf32>
    %78 = arith.mulf %73, %77 : vector<1x128xf32>
    %cst_55 = arith.constant 3.906250e-03 : f32
    %79 = vector.broadcast %cst_55 : f32 to vector<1x128xf32>
    %80 = arith.mulf %76, %79 : vector<1x128xf32>
    %81 = arith.mulf %78, %78 : vector<1x128xf32>
    %82 = arith.subf %80, %81 : vector<1x128xf32>
    %cst_56 = arith.constant 0.000000e+00 : f32
    %83 = vector.broadcast %cst_56 : f32 to vector<1x128xf32>
    %84 = arith.maximumf %82, %83 : vector<1x128xf32>
    %cst_57 = arith.constant 9.99999974E-6 : f32
    %85 = vector.broadcast %cst_57 : f32 to vector<1x128xf32>
    %86 = arith.addf %84, %85 : vector<1x128xf32>
    %87 = math.rsqrt %86 : vector<1x128xf32>
    %88 = arith.mulf %70, %87 : vector<1x128xf32>
    %89 = arith.mulf %78, %88 : vector<1x128xf32>
    %90 = arith.subf %71, %89 : vector<1x128xf32>
    %91 = vector.broadcast %88 : vector<1x128xf32> to vector<256x128xf32>
    %92 = arith.mulf %67, %91 : vector<256x128xf32>
    %93 = vector.broadcast %90 : vector<1x128xf32> to vector<256x128xf32>
    %94 = arith.addf %92, %93 : vector<256x128xf32>
    %cst_58 = arith.constant 0.000000e+00 : f32
    %95 = vector.broadcast %cst_58 : f32 to vector<256x128xf32>
    %96 = arith.maximumf %94, %95 : vector<256x128xf32>
    %c2_i32_59 = arith.constant 2 : i32
    %c0_i32_60 = arith.constant 0 : i32
    %c0_i32_61 = arith.constant 0 : i32
    %c0_i32_62 = arith.constant 0 : i32
    %c0_i32_63 = arith.constant 0 : i32
    %97 = tpu.memref_slice %arg1[%c2_i32_59, %c0_i32_62, %c0_i32_63] : memref<10x128x128xbf16, #tpu.memory_space<any>> -> memref<1x128x128xbf16, #tpu.memory_space<any>>
    %98 = tpu.memref_squeeze %97 : memref<1x128x128xbf16, #tpu.memory_space<any>> -> memref<128x128xbf16, #tpu.memory_space<any>>
    %c0_i32_64 = arith.constant 0 : i32
    %c0_i32_65 = arith.constant 0 : i32
    %99 = tpu.memref_slice %arg4[%c0_i32_60, %c0_i32_64, %c0_i32_65] : memref<2x128x128xbf16, #tpu.memory_space<vmem>> -> memref<1x128x128xbf16, #tpu.memory_space<vmem>>
    %100 = tpu.memref_squeeze %99 : memref<1x128x128xbf16, #tpu.memory_space<vmem>> -> memref<128x128xbf16, #tpu.memory_space<vmem>>
    %101 = tpu.memref_slice %arg5[%c0_i32_61] : memref<2x!tpu.dma_semaphore, #tpu.memory_space<semaphore_mem>> -> memref<1x!tpu.dma_semaphore, #tpu.memory_space<semaphore_mem>>
    %102 = tpu.memref_squeeze %101 : memref<1x!tpu.dma_semaphore, #tpu.memory_space<semaphore_mem>> -> memref<!tpu.dma_semaphore, #tpu.memory_space<semaphore_mem>>
    tpu.wait_dma2 semaphore(%102 : memref<!tpu.dma_semaphore, #tpu.memory_space<semaphore_mem>>) src(%98 : memref<128x128xbf16, #tpu.memory_space<any>>) dst(%100 : memref<128x128xbf16, #tpu.memory_space<vmem>>)
    %c3_i32 = arith.constant 3 : i32
    %c1_i32_66 = arith.constant 1 : i32
    %c1_i32_67 = arith.constant 1 : i32
    %c0_i32_68 = arith.constant 0 : i32
    %c0_i32_69 = arith.constant 0 : i32
    %103 = tpu.memref_slice %arg1[%c3_i32, %c0_i32_68, %c0_i32_69] : memref<10x128x128xbf16, #tpu.memory_space<any>> -> memref<1x128x128xbf16, #tpu.memory_space<any>>
    %104 = tpu.memref_squeeze %103 : memref<1x128x128xbf16, #tpu.memory_space<any>> -> memref<128x128xbf16, #tpu.memory_space<any>>
    %c0_i32_70 = arith.constant 0 : i32
    %c0_i32_71 = arith.constant 0 : i32
    %105 = tpu.memref_slice %arg4[%c1_i32_66, %c0_i32_70, %c0_i32_71] : memref<2x128x128xbf16, #tpu.memory_space<vmem>> -> memref<1x128x128xbf16, #tpu.memory_space<vmem>>
    %106 = tpu.memref_squeeze %105 : memref<1x128x128xbf16, #tpu.memory_space<vmem>> -> memref<128x128xbf16, #tpu.memory_space<vmem>>
    %107 = tpu.memref_slice %arg5[%c1_i32_67] : memref<2x!tpu.dma_semaphore, #tpu.memory_space<semaphore_mem>> -> memref<1x!tpu.dma_semaphore, #tpu.memory_space<semaphore_mem>>
    %108 = tpu.memref_squeeze %107 : memref<1x!tpu.dma_semaphore, #tpu.memory_space<semaphore_mem>> -> memref<!tpu.dma_semaphore, #tpu.memory_space<semaphore_mem>>
    tpu.enqueue_dma source(%104 : memref<128x128xbf16, #tpu.memory_space<any>>) target(%106 : memref<128x128xbf16, #tpu.memory_space<vmem>>) target_semaphore(%108 : memref<!tpu.dma_semaphore, #tpu.memory_space<semaphore_mem>>)
    %c0_72 = arith.constant 0 : index
    %c0_73 = arith.constant 0 : index
    %c0_74 = arith.constant 0 : index
    %109 = vector.load %arg4[%c0_72, %c0_73, %c0_74] : memref<2x128x128xbf16, #tpu.memory_space<vmem>>, vector<1x128x128xbf16>
    %110 = vector.shape_cast %109 : vector<1x128x128xbf16> to vector<128x128xbf16>
    %111 = arith.truncf %96 : vector<256x128xf32> to vector<256x128xbf16>
    %cst_75 = arith.constant dense<0.000000e+00> : vector<256x128xf32>
    %112 = tpu.matmul %111, %110, %cst_75 {dimension_numbers = #tpu.dot_dimension_numbers<[1], [0], [0], [1], [0, 0, 1, 1], [], []>} : vector<256x128xbf16>, vector<128x128xbf16>, vector<256x128xf32> -> vector<256x128xf32>
    %c2 = arith.constant 2 : index
    %c0_76 = arith.constant 0 : index
    %c0_77 = arith.constant 0 : index
    %113 = vector.load %arg2[%c2, %c0_76, %c0_77] : memref<10x8x128xf32, #tpu.memory_space<vmem>>, vector<1x8x128xf32>
    %114 = vector.shape_cast %113 : vector<1x8x128xf32> to vector<8x128xf32>
    %115 = vector.extract_strided_slice %114 {offsets = [1, 0], sizes = [1, 128], strides = [1, 1]} : vector<8x128xf32> to vector<1x128xf32>
    %116 = vector.extract_strided_slice %114 {offsets = [2, 0], sizes = [1, 128], strides = [1, 1]} : vector<8x128xf32> to vector<1x128xf32>
    %cst_78 = arith.constant dense<0.000000e+00> : vector<128xf32>
    %117 = vector.multi_reduction <add>, %112, %cst_78 [0] : vector<256x128xf32> to vector<128xf32>
    %118 = vector.shape_cast %117 : vector<128xf32> to vector<1x128xf32>
    %119 = arith.mulf %112, %112 : vector<256x128xf32>
    %cst_79 = arith.constant dense<0.000000e+00> : vector<128xf32>
    %120 = vector.multi_reduction <add>, %119, %cst_79 [0] : vector<256x128xf32> to vector<128xf32>
    %121 = vector.shape_cast %120 : vector<128xf32> to vector<1x128xf32>
    %cst_80 = arith.constant 3.906250e-03 : f32
    %122 = vector.broadcast %cst_80 : f32 to vector<1x128xf32>
    %123 = arith.mulf %118, %122 : vector<1x128xf32>
    %cst_81 = arith.constant 3.906250e-03 : f32
    %124 = vector.broadcast %cst_81 : f32 to vector<1x128xf32>
    %125 = arith.mulf %121, %124 : vector<1x128xf32>
    %126 = arith.mulf %123, %123 : vector<1x128xf32>
    %127 = arith.subf %125, %126 : vector<1x128xf32>
    %cst_82 = arith.constant 0.000000e+00 : f32
    %128 = vector.broadcast %cst_82 : f32 to vector<1x128xf32>
    %129 = arith.maximumf %127, %128 : vector<1x128xf32>
    %cst_83 = arith.constant 9.99999974E-6 : f32
    %130 = vector.broadcast %cst_83 : f32 to vector<1x128xf32>
    %131 = arith.addf %129, %130 : vector<1x128xf32>
    %132 = math.rsqrt %131 : vector<1x128xf32>
    %133 = arith.mulf %115, %132 : vector<1x128xf32>
    %134 = arith.mulf %123, %133 : vector<1x128xf32>
    %135 = arith.subf %116, %134 : vector<1x128xf32>
    %136 = vector.broadcast %133 : vector<1x128xf32> to vector<256x128xf32>
    %137 = arith.mulf %112, %136 : vector<256x128xf32>
    %138 = vector.broadcast %135 : vector<1x128xf32> to vector<256x128xf32>
    %139 = arith.addf %137, %138 : vector<256x128xf32>
    %cst_84 = arith.constant 0.000000e+00 : f32
    %140 = vector.broadcast %cst_84 : f32 to vector<256x128xf32>
    %141 = arith.maximumf %139, %140 : vector<256x128xf32>
    %c3_i32_85 = arith.constant 3 : i32
    %c1_i32_86 = arith.constant 1 : i32
    %c1_i32_87 = arith.constant 1 : i32
    %c0_i32_88 = arith.constant 0 : i32
    %c0_i32_89 = arith.constant 0 : i32
    %142 = tpu.memref_slice %arg1[%c3_i32_85, %c0_i32_88, %c0_i32_89] : memref<10x128x128xbf16, #tpu.memory_space<any>> -> memref<1x128x128xbf16, #tpu.memory_space<any>>
    %143 = tpu.memref_squeeze %142 : memref<1x128x128xbf16, #tpu.memory_space<any>> -> memref<128x128xbf16, #tpu.memory_space<any>>
    %c0_i32_90 = arith.constant 0 : i32
    %c0_i32_91 = arith.constant 0 : i32
    %144 = tpu.memref_slice %arg4[%c1_i32_86, %c0_i32_90, %c0_i32_91] : memref<2x128x128xbf16, #tpu.memory_space<vmem>> -> memref<1x128x128xbf16, #tpu.memory_space<vmem>>
    %145 = tpu.memref_squeeze %144 : memref<1x128x128xbf16, #tpu.memory_space<vmem>> -> memref<128x128xbf16, #tpu.memory_space<vmem>>
    %146 = tpu.memref_slice %arg5[%c1_i32_87] : memref<2x!tpu.dma_semaphore, #tpu.memory_space<semaphore_mem>> -> memref<1x!tpu.dma_semaphore, #tpu.memory_space<semaphore_mem>>
    %147 = tpu.memref_squeeze %146 : memref<1x!tpu.dma_semaphore, #tpu.memory_space<semaphore_mem>> -> memref<!tpu.dma_semaphore, #tpu.memory_space<semaphore_mem>>
    tpu.wait_dma2 semaphore(%147 : memref<!tpu.dma_semaphore, #tpu.memory_space<semaphore_mem>>) src(%143 : memref<128x128xbf16, #tpu.memory_space<any>>) dst(%145 : memref<128x128xbf16, #tpu.memory_space<vmem>>)
    %c4_i32 = arith.constant 4 : i32
    %c0_i32_92 = arith.constant 0 : i32
    %c0_i32_93 = arith.constant 0 : i32
    %c0_i32_94 = arith.constant 0 : i32
    %c0_i32_95 = arith.constant 0 : i32
    %148 = tpu.memref_slice %arg1[%c4_i32, %c0_i32_94, %c0_i32_95] : memref<10x128x128xbf16, #tpu.memory_space<any>> -> memref<1x128x128xbf16, #tpu.memory_space<any>>
    %149 = tpu.memref_squeeze %148 : memref<1x128x128xbf16, #tpu.memory_space<any>> -> memref<128x128xbf16, #tpu.memory_space<any>>
    %c0_i32_96 = arith.constant 0 : i32
    %c0_i32_97 = arith.constant 0 : i32
    %150 = tpu.memref_slice %arg4[%c0_i32_92, %c0_i32_96, %c0_i32_97] : memref<2x128x128xbf16, #tpu.memory_space<vmem>> -> memref<1x128x128xbf16, #tpu.memory_space<vmem>>
    %151 = tpu.memref_squeeze %150 : memref<1x128x128xbf16, #tpu.memory_space<vmem>> -> memref<128x128xbf16, #tpu.memory_space<vmem>>
    %152 = tpu.memref_slice %arg5[%c0_i32_93] : memref<2x!tpu.dma_semaphore, #tpu.memory_space<semaphore_mem>> -> memref<1x!tpu.dma_semaphore, #tpu.memory_space<semaphore_mem>>
    %153 = tpu.memref_squeeze %152 : memref<1x!tpu.dma_semaphore, #tpu.memory_space<semaphore_mem>> -> memref<!tpu.dma_semaphore, #tpu.memory_space<semaphore_mem>>
    tpu.enqueue_dma source(%149 : memref<128x128xbf16, #tpu.memory_space<any>>) target(%151 : memref<128x128xbf16, #tpu.memory_space<vmem>>) target_semaphore(%153 : memref<!tpu.dma_semaphore, #tpu.memory_space<semaphore_mem>>)
    %c1_98 = arith.constant 1 : index
    %c0_99 = arith.constant 0 : index
    %c0_100 = arith.constant 0 : index
    %154 = vector.load %arg4[%c1_98, %c0_99, %c0_100] : memref<2x128x128xbf16, #tpu.memory_space<vmem>>, vector<1x128x128xbf16>
    %155 = vector.shape_cast %154 : vector<1x128x128xbf16> to vector<128x128xbf16>
    %156 = arith.truncf %141 : vector<256x128xf32> to vector<256x128xbf16>
    %cst_101 = arith.constant dense<0.000000e+00> : vector<256x128xf32>
    %157 = tpu.matmul %156, %155, %cst_101 {dimension_numbers = #tpu.dot_dimension_numbers<[1], [0], [0], [1], [0, 0, 1, 1], [], []>} : vector<256x128xbf16>, vector<128x128xbf16>, vector<256x128xf32> -> vector<256x128xf32>
    %c3 = arith.constant 3 : index
    %c0_102 = arith.constant 0 : index
    %c0_103 = arith.constant 0 : index
    %158 = vector.load %arg2[%c3, %c0_102, %c0_103] : memref<10x8x128xf32, #tpu.memory_space<vmem>>, vector<1x8x128xf32>
    %159 = vector.shape_cast %158 : vector<1x8x128xf32> to vector<8x128xf32>
    %160 = vector.extract_strided_slice %159 {offsets = [1, 0], sizes = [1, 128], strides = [1, 1]} : vector<8x128xf32> to vector<1x128xf32>
    %161 = vector.extract_strided_slice %159 {offsets = [2, 0], sizes = [1, 128], strides = [1, 1]} : vector<8x128xf32> to vector<1x128xf32>
    %cst_104 = arith.constant dense<0.000000e+00> : vector<128xf32>
    %162 = vector.multi_reduction <add>, %157, %cst_104 [0] : vector<256x128xf32> to vector<128xf32>
    %163 = vector.shape_cast %162 : vector<128xf32> to vector<1x128xf32>
    %164 = arith.mulf %157, %157 : vector<256x128xf32>
    %cst_105 = arith.constant dense<0.000000e+00> : vector<128xf32>
    %165 = vector.multi_reduction <add>, %164, %cst_105 [0] : vector<256x128xf32> to vector<128xf32>
    %166 = vector.shape_cast %165 : vector<128xf32> to vector<1x128xf32>
    %cst_106 = arith.constant 3.906250e-03 : f32
    %167 = vector.broadcast %cst_106 : f32 to vector<1x128xf32>
    %168 = arith.mulf %163, %167 : vector<1x128xf32>
    %cst_107 = arith.constant 3.906250e-03 : f32
    %169 = vector.broadcast %cst_107 : f32 to vector<1x128xf32>
    %170 = arith.mulf %166, %169 : vector<1x128xf32>
    %171 = arith.mulf %168, %168 : vector<1x128xf32>
    %172 = arith.subf %170, %171 : vector<1x128xf32>
    %cst_108 = arith.constant 0.000000e+00 : f32
    %173 = vector.broadcast %cst_108 : f32 to vector<1x128xf32>
    %174 = arith.maximumf %172, %173 : vector<1x128xf32>
    %cst_109 = arith.constant 9.99999974E-6 : f32
    %175 = vector.broadcast %cst_109 : f32 to vector<1x128xf32>
    %176 = arith.addf %174, %175 : vector<1x128xf32>
    %177 = math.rsqrt %176 : vector<1x128xf32>
    %178 = arith.mulf %160, %177 : vector<1x128xf32>
    %179 = arith.mulf %168, %178 : vector<1x128xf32>
    %180 = arith.subf %161, %179 : vector<1x128xf32>
    %181 = vector.broadcast %178 : vector<1x128xf32> to vector<256x128xf32>
    %182 = arith.mulf %157, %181 : vector<256x128xf32>
    %183 = vector.broadcast %180 : vector<1x128xf32> to vector<256x128xf32>
    %184 = arith.addf %182, %183 : vector<256x128xf32>
    %cst_110 = arith.constant 0.000000e+00 : f32
    %185 = vector.broadcast %cst_110 : f32 to vector<256x128xf32>
    %186 = arith.maximumf %184, %185 : vector<256x128xf32>
    %c4_i32_111 = arith.constant 4 : i32
    %c0_i32_112 = arith.constant 0 : i32
    %c0_i32_113 = arith.constant 0 : i32
    %c0_i32_114 = arith.constant 0 : i32
    %c0_i32_115 = arith.constant 0 : i32
    %187 = tpu.memref_slice %arg1[%c4_i32_111, %c0_i32_114, %c0_i32_115] : memref<10x128x128xbf16, #tpu.memory_space<any>> -> memref<1x128x128xbf16, #tpu.memory_space<any>>
    %188 = tpu.memref_squeeze %187 : memref<1x128x128xbf16, #tpu.memory_space<any>> -> memref<128x128xbf16, #tpu.memory_space<any>>
    %c0_i32_116 = arith.constant 0 : i32
    %c0_i32_117 = arith.constant 0 : i32
    %189 = tpu.memref_slice %arg4[%c0_i32_112, %c0_i32_116, %c0_i32_117] : memref<2x128x128xbf16, #tpu.memory_space<vmem>> -> memref<1x128x128xbf16, #tpu.memory_space<vmem>>
    %190 = tpu.memref_squeeze %189 : memref<1x128x128xbf16, #tpu.memory_space<vmem>> -> memref<128x128xbf16, #tpu.memory_space<vmem>>
    %191 = tpu.memref_slice %arg5[%c0_i32_113] : memref<2x!tpu.dma_semaphore, #tpu.memory_space<semaphore_mem>> -> memref<1x!tpu.dma_semaphore, #tpu.memory_space<semaphore_mem>>
    %192 = tpu.memref_squeeze %191 : memref<1x!tpu.dma_semaphore, #tpu.memory_space<semaphore_mem>> -> memref<!tpu.dma_semaphore, #tpu.memory_space<semaphore_mem>>
    tpu.wait_dma2 semaphore(%192 : memref<!tpu.dma_semaphore, #tpu.memory_space<semaphore_mem>>) src(%188 : memref<128x128xbf16, #tpu.memory_space<any>>) dst(%190 : memref<128x128xbf16, #tpu.memory_space<vmem>>)
    %c5_i32 = arith.constant 5 : i32
    %c1_i32_118 = arith.constant 1 : i32
    %c1_i32_119 = arith.constant 1 : i32
    %c0_i32_120 = arith.constant 0 : i32
    %c0_i32_121 = arith.constant 0 : i32
    %193 = tpu.memref_slice %arg1[%c5_i32, %c0_i32_120, %c0_i32_121] : memref<10x128x128xbf16, #tpu.memory_space<any>> -> memref<1x128x128xbf16, #tpu.memory_space<any>>
    %194 = tpu.memref_squeeze %193 : memref<1x128x128xbf16, #tpu.memory_space<any>> -> memref<128x128xbf16, #tpu.memory_space<any>>
    %c0_i32_122 = arith.constant 0 : i32
    %c0_i32_123 = arith.constant 0 : i32
    %195 = tpu.memref_slice %arg4[%c1_i32_118, %c0_i32_122, %c0_i32_123] : memref<2x128x128xbf16, #tpu.memory_space<vmem>> -> memref<1x128x128xbf16, #tpu.memory_space<vmem>>
    %196 = tpu.memref_squeeze %195 : memref<1x128x128xbf16, #tpu.memory_space<vmem>> -> memref<128x128xbf16, #tpu.memory_space<vmem>>
    %197 = tpu.memref_slice %arg5[%c1_i32_119] : memref<2x!tpu.dma_semaphore, #tpu.memory_space<semaphore_mem>> -> memref<1x!tpu.dma_semaphore, #tpu.memory_space<semaphore_mem>>
    %198 = tpu.memref_squeeze %197 : memref<1x!tpu.dma_semaphore, #tpu.memory_space<semaphore_mem>> -> memref<!tpu.dma_semaphore, #tpu.memory_space<semaphore_mem>>
    tpu.enqueue_dma source(%194 : memref<128x128xbf16, #tpu.memory_space<any>>) target(%196 : memref<128x128xbf16, #tpu.memory_space<vmem>>) target_semaphore(%198 : memref<!tpu.dma_semaphore, #tpu.memory_space<semaphore_mem>>)
    %c0_124 = arith.constant 0 : index
    %c0_125 = arith.constant 0 : index
    %c0_126 = arith.constant 0 : index
    %199 = vector.load %arg4[%c0_124, %c0_125, %c0_126] : memref<2x128x128xbf16, #tpu.memory_space<vmem>>, vector<1x128x128xbf16>
    %200 = vector.shape_cast %199 : vector<1x128x128xbf16> to vector<128x128xbf16>
    %201 = arith.truncf %186 : vector<256x128xf32> to vector<256x128xbf16>
    %cst_127 = arith.constant dense<0.000000e+00> : vector<256x128xf32>
    %202 = tpu.matmul %201, %200, %cst_127 {dimension_numbers = #tpu.dot_dimension_numbers<[1], [0], [0], [1], [0, 0, 1, 1], [], []>} : vector<256x128xbf16>, vector<128x128xbf16>, vector<256x128xf32> -> vector<256x128xf32>
    %c4 = arith.constant 4 : index
    %c0_128 = arith.constant 0 : index
    %c0_129 = arith.constant 0 : index
    %203 = vector.load %arg2[%c4, %c0_128, %c0_129] : memref<10x8x128xf32, #tpu.memory_space<vmem>>, vector<1x8x128xf32>
    %204 = vector.shape_cast %203 : vector<1x8x128xf32> to vector<8x128xf32>
    %205 = vector.extract_strided_slice %204 {offsets = [1, 0], sizes = [1, 128], strides = [1, 1]} : vector<8x128xf32> to vector<1x128xf32>
    %206 = vector.extract_strided_slice %204 {offsets = [2, 0], sizes = [1, 128], strides = [1, 1]} : vector<8x128xf32> to vector<1x128xf32>
    %cst_130 = arith.constant dense<0.000000e+00> : vector<128xf32>
    %207 = vector.multi_reduction <add>, %202, %cst_130 [0] : vector<256x128xf32> to vector<128xf32>
    %208 = vector.shape_cast %207 : vector<128xf32> to vector<1x128xf32>
    %209 = arith.mulf %202, %202 : vector<256x128xf32>
    %cst_131 = arith.constant dense<0.000000e+00> : vector<128xf32>
    %210 = vector.multi_reduction <add>, %209, %cst_131 [0] : vector<256x128xf32> to vector<128xf32>
    %211 = vector.shape_cast %210 : vector<128xf32> to vector<1x128xf32>
    %cst_132 = arith.constant 3.906250e-03 : f32
    %212 = vector.broadcast %cst_132 : f32 to vector<1x128xf32>
    %213 = arith.mulf %208, %212 : vector<1x128xf32>
    %cst_133 = arith.constant 3.906250e-03 : f32
    %214 = vector.broadcast %cst_133 : f32 to vector<1x128xf32>
    %215 = arith.mulf %211, %214 : vector<1x128xf32>
    %216 = arith.mulf %213, %213 : vector<1x128xf32>
    %217 = arith.subf %215, %216 : vector<1x128xf32>
    %cst_134 = arith.constant 0.000000e+00 : f32
    %218 = vector.broadcast %cst_134 : f32 to vector<1x128xf32>
    %219 = arith.maximumf %217, %218 : vector<1x128xf32>
    %cst_135 = arith.constant 9.99999974E-6 : f32
    %220 = vector.broadcast %cst_135 : f32 to vector<1x128xf32>
    %221 = arith.addf %219, %220 : vector<1x128xf32>
    %222 = math.rsqrt %221 : vector<1x128xf32>
    %223 = arith.mulf %205, %222 : vector<1x128xf32>
    %224 = arith.mulf %213, %223 : vector<1x128xf32>
    %225 = arith.subf %206, %224 : vector<1x128xf32>
    %226 = vector.broadcast %223 : vector<1x128xf32> to vector<256x128xf32>
    %227 = arith.mulf %202, %226 : vector<256x128xf32>
    %228 = vector.broadcast %225 : vector<1x128xf32> to vector<256x128xf32>
    %229 = arith.addf %227, %228 : vector<256x128xf32>
    %cst_136 = arith.constant 0.000000e+00 : f32
    %230 = vector.broadcast %cst_136 : f32 to vector<256x128xf32>
    %231 = arith.maximumf %229, %230 : vector<256x128xf32>
    %c5_i32_137 = arith.constant 5 : i32
    %c1_i32_138 = arith.constant 1 : i32
    %c1_i32_139 = arith.constant 1 : i32
    %c0_i32_140 = arith.constant 0 : i32
    %c0_i32_141 = arith.constant 0 : i32
    %232 = tpu.memref_slice %arg1[%c5_i32_137, %c0_i32_140, %c0_i32_141] : memref<10x128x128xbf16, #tpu.memory_space<any>> -> memref<1x128x128xbf16, #tpu.memory_space<any>>
    %233 = tpu.memref_squeeze %232 : memref<1x128x128xbf16, #tpu.memory_space<any>> -> memref<128x128xbf16, #tpu.memory_space<any>>
    %c0_i32_142 = arith.constant 0 : i32
    %c0_i32_143 = arith.constant 0 : i32
    %234 = tpu.memref_slice %arg4[%c1_i32_138, %c0_i32_142, %c0_i32_143] : memref<2x128x128xbf16, #tpu.memory_space<vmem>> -> memref<1x128x128xbf16, #tpu.memory_space<vmem>>
    %235 = tpu.memref_squeeze %234 : memref<1x128x128xbf16, #tpu.memory_space<vmem>> -> memref<128x128xbf16, #tpu.memory_space<vmem>>
    %236 = tpu.memref_slice %arg5[%c1_i32_139] : memref<2x!tpu.dma_semaphore, #tpu.memory_space<semaphore_mem>> -> memref<1x!tpu.dma_semaphore, #tpu.memory_space<semaphore_mem>>
    %237 = tpu.memref_squeeze %236 : memref<1x!tpu.dma_semaphore, #tpu.memory_space<semaphore_mem>> -> memref<!tpu.dma_semaphore, #tpu.memory_space<semaphore_mem>>
    tpu.wait_dma2 semaphore(%237 : memref<!tpu.dma_semaphore, #tpu.memory_space<semaphore_mem>>) src(%233 : memref<128x128xbf16, #tpu.memory_space<any>>) dst(%235 : memref<128x128xbf16, #tpu.memory_space<vmem>>)
    %c6_i32 = arith.constant 6 : i32
    %c0_i32_144 = arith.constant 0 : i32
    %c0_i32_145 = arith.constant 0 : i32
    %c0_i32_146 = arith.constant 0 : i32
    %c0_i32_147 = arith.constant 0 : i32
    %238 = tpu.memref_slice %arg1[%c6_i32, %c0_i32_146, %c0_i32_147] : memref<10x128x128xbf16, #tpu.memory_space<any>> -> memref<1x128x128xbf16, #tpu.memory_space<any>>
    %239 = tpu.memref_squeeze %238 : memref<1x128x128xbf16, #tpu.memory_space<any>> -> memref<128x128xbf16, #tpu.memory_space<any>>
    %c0_i32_148 = arith.constant 0 : i32
    %c0_i32_149 = arith.constant 0 : i32
    %240 = tpu.memref_slice %arg4[%c0_i32_144, %c0_i32_148, %c0_i32_149] : memref<2x128x128xbf16, #tpu.memory_space<vmem>> -> memref<1x128x128xbf16, #tpu.memory_space<vmem>>
    %241 = tpu.memref_squeeze %240 : memref<1x128x128xbf16, #tpu.memory_space<vmem>> -> memref<128x128xbf16, #tpu.memory_space<vmem>>
    %242 = tpu.memref_slice %arg5[%c0_i32_145] : memref<2x!tpu.dma_semaphore, #tpu.memory_space<semaphore_mem>> -> memref<1x!tpu.dma_semaphore, #tpu.memory_space<semaphore_mem>>
    %243 = tpu.memref_squeeze %242 : memref<1x!tpu.dma_semaphore, #tpu.memory_space<semaphore_mem>> -> memref<!tpu.dma_semaphore, #tpu.memory_space<semaphore_mem>>
    tpu.enqueue_dma source(%239 : memref<128x128xbf16, #tpu.memory_space<any>>) target(%241 : memref<128x128xbf16, #tpu.memory_space<vmem>>) target_semaphore(%243 : memref<!tpu.dma_semaphore, #tpu.memory_space<semaphore_mem>>)
    %c1_150 = arith.constant 1 : index
    %c0_151 = arith.constant 0 : index
    %c0_152 = arith.constant 0 : index
    %244 = vector.load %arg4[%c1_150, %c0_151, %c0_152] : memref<2x128x128xbf16, #tpu.memory_space<vmem>>, vector<1x128x128xbf16>
    %245 = vector.shape_cast %244 : vector<1x128x128xbf16> to vector<128x128xbf16>
    %246 = arith.truncf %231 : vector<256x128xf32> to vector<256x128xbf16>
    %cst_153 = arith.constant dense<0.000000e+00> : vector<256x128xf32>
    %247 = tpu.matmul %246, %245, %cst_153 {dimension_numbers = #tpu.dot_dimension_numbers<[1], [0], [0], [1], [0, 0, 1, 1], [], []>} : vector<256x128xbf16>, vector<128x128xbf16>, vector<256x128xf32> -> vector<256x128xf32>
    %c5 = arith.constant 5 : index
    %c0_154 = arith.constant 0 : index
    %c0_155 = arith.constant 0 : index
    %248 = vector.load %arg2[%c5, %c0_154, %c0_155] : memref<10x8x128xf32, #tpu.memory_space<vmem>>, vector<1x8x128xf32>
    %249 = vector.shape_cast %248 : vector<1x8x128xf32> to vector<8x128xf32>
    %250 = vector.extract_strided_slice %249 {offsets = [1, 0], sizes = [1, 128], strides = [1, 1]} : vector<8x128xf32> to vector<1x128xf32>
    %251 = vector.extract_strided_slice %249 {offsets = [2, 0], sizes = [1, 128], strides = [1, 1]} : vector<8x128xf32> to vector<1x128xf32>
    %cst_156 = arith.constant dense<0.000000e+00> : vector<128xf32>
    %252 = vector.multi_reduction <add>, %247, %cst_156 [0] : vector<256x128xf32> to vector<128xf32>
    %253 = vector.shape_cast %252 : vector<128xf32> to vector<1x128xf32>
    %254 = arith.mulf %247, %247 : vector<256x128xf32>
    %cst_157 = arith.constant dense<0.000000e+00> : vector<128xf32>
    %255 = vector.multi_reduction <add>, %254, %cst_157 [0] : vector<256x128xf32> to vector<128xf32>
    %256 = vector.shape_cast %255 : vector<128xf32> to vector<1x128xf32>
    %cst_158 = arith.constant 3.906250e-03 : f32
    %257 = vector.broadcast %cst_158 : f32 to vector<1x128xf32>
    %258 = arith.mulf %253, %257 : vector<1x128xf32>
    %cst_159 = arith.constant 3.906250e-03 : f32
    %259 = vector.broadcast %cst_159 : f32 to vector<1x128xf32>
    %260 = arith.mulf %256, %259 : vector<1x128xf32>
    %261 = arith.mulf %258, %258 : vector<1x128xf32>
    %262 = arith.subf %260, %261 : vector<1x128xf32>
    %cst_160 = arith.constant 0.000000e+00 : f32
    %263 = vector.broadcast %cst_160 : f32 to vector<1x128xf32>
    %264 = arith.maximumf %262, %263 : vector<1x128xf32>
    %cst_161 = arith.constant 9.99999974E-6 : f32
    %265 = vector.broadcast %cst_161 : f32 to vector<1x128xf32>
    %266 = arith.addf %264, %265 : vector<1x128xf32>
    %267 = math.rsqrt %266 : vector<1x128xf32>
    %268 = arith.mulf %250, %267 : vector<1x128xf32>
    %269 = arith.mulf %258, %268 : vector<1x128xf32>
    %270 = arith.subf %251, %269 : vector<1x128xf32>
    %271 = vector.broadcast %268 : vector<1x128xf32> to vector<256x128xf32>
    %272 = arith.mulf %247, %271 : vector<256x128xf32>
    %273 = vector.broadcast %270 : vector<1x128xf32> to vector<256x128xf32>
    %274 = arith.addf %272, %273 : vector<256x128xf32>
    %cst_162 = arith.constant 0.000000e+00 : f32
    %275 = vector.broadcast %cst_162 : f32 to vector<256x128xf32>
    %276 = arith.maximumf %274, %275 : vector<256x128xf32>
    %c6_i32_163 = arith.constant 6 : i32
    %c0_i32_164 = arith.constant 0 : i32
    %c0_i32_165 = arith.constant 0 : i32
    %c0_i32_166 = arith.constant 0 : i32
    %c0_i32_167 = arith.constant 0 : i32
    %277 = tpu.memref_slice %arg1[%c6_i32_163, %c0_i32_166, %c0_i32_167] : memref<10x128x128xbf16, #tpu.memory_space<any>> -> memref<1x128x128xbf16, #tpu.memory_space<any>>
    %278 = tpu.memref_squeeze %277 : memref<1x128x128xbf16, #tpu.memory_space<any>> -> memref<128x128xbf16, #tpu.memory_space<any>>
    %c0_i32_168 = arith.constant 0 : i32
    %c0_i32_169 = arith.constant 0 : i32
    %279 = tpu.memref_slice %arg4[%c0_i32_164, %c0_i32_168, %c0_i32_169] : memref<2x128x128xbf16, #tpu.memory_space<vmem>> -> memref<1x128x128xbf16, #tpu.memory_space<vmem>>
    %280 = tpu.memref_squeeze %279 : memref<1x128x128xbf16, #tpu.memory_space<vmem>> -> memref<128x128xbf16, #tpu.memory_space<vmem>>
    %281 = tpu.memref_slice %arg5[%c0_i32_165] : memref<2x!tpu.dma_semaphore, #tpu.memory_space<semaphore_mem>> -> memref<1x!tpu.dma_semaphore, #tpu.memory_space<semaphore_mem>>
    %282 = tpu.memref_squeeze %281 : memref<1x!tpu.dma_semaphore, #tpu.memory_space<semaphore_mem>> -> memref<!tpu.dma_semaphore, #tpu.memory_space<semaphore_mem>>
    tpu.wait_dma2 semaphore(%282 : memref<!tpu.dma_semaphore, #tpu.memory_space<semaphore_mem>>) src(%278 : memref<128x128xbf16, #tpu.memory_space<any>>) dst(%280 : memref<128x128xbf16, #tpu.memory_space<vmem>>)
    %c7_i32 = arith.constant 7 : i32
    %c1_i32_170 = arith.constant 1 : i32
    %c1_i32_171 = arith.constant 1 : i32
    %c0_i32_172 = arith.constant 0 : i32
    %c0_i32_173 = arith.constant 0 : i32
    %283 = tpu.memref_slice %arg1[%c7_i32, %c0_i32_172, %c0_i32_173] : memref<10x128x128xbf16, #tpu.memory_space<any>> -> memref<1x128x128xbf16, #tpu.memory_space<any>>
    %284 = tpu.memref_squeeze %283 : memref<1x128x128xbf16, #tpu.memory_space<any>> -> memref<128x128xbf16, #tpu.memory_space<any>>
    %c0_i32_174 = arith.constant 0 : i32
    %c0_i32_175 = arith.constant 0 : i32
    %285 = tpu.memref_slice %arg4[%c1_i32_170, %c0_i32_174, %c0_i32_175] : memref<2x128x128xbf16, #tpu.memory_space<vmem>> -> memref<1x128x128xbf16, #tpu.memory_space<vmem>>
    %286 = tpu.memref_squeeze %285 : memref<1x128x128xbf16, #tpu.memory_space<vmem>> -> memref<128x128xbf16, #tpu.memory_space<vmem>>
    %287 = tpu.memref_slice %arg5[%c1_i32_171] : memref<2x!tpu.dma_semaphore, #tpu.memory_space<semaphore_mem>> -> memref<1x!tpu.dma_semaphore, #tpu.memory_space<semaphore_mem>>
    %288 = tpu.memref_squeeze %287 : memref<1x!tpu.dma_semaphore, #tpu.memory_space<semaphore_mem>> -> memref<!tpu.dma_semaphore, #tpu.memory_space<semaphore_mem>>
    tpu.enqueue_dma source(%284 : memref<128x128xbf16, #tpu.memory_space<any>>) target(%286 : memref<128x128xbf16, #tpu.memory_space<vmem>>) target_semaphore(%288 : memref<!tpu.dma_semaphore, #tpu.memory_space<semaphore_mem>>)
    %c0_176 = arith.constant 0 : index
    %c0_177 = arith.constant 0 : index
    %c0_178 = arith.constant 0 : index
    %289 = vector.load %arg4[%c0_176, %c0_177, %c0_178] : memref<2x128x128xbf16, #tpu.memory_space<vmem>>, vector<1x128x128xbf16>
    %290 = vector.shape_cast %289 : vector<1x128x128xbf16> to vector<128x128xbf16>
    %291 = arith.truncf %276 : vector<256x128xf32> to vector<256x128xbf16>
    %cst_179 = arith.constant dense<0.000000e+00> : vector<256x128xf32>
    %292 = tpu.matmul %291, %290, %cst_179 {dimension_numbers = #tpu.dot_dimension_numbers<[1], [0], [0], [1], [0, 0, 1, 1], [], []>} : vector<256x128xbf16>, vector<128x128xbf16>, vector<256x128xf32> -> vector<256x128xf32>
    %c6 = arith.constant 6 : index
    %c0_180 = arith.constant 0 : index
    %c0_181 = arith.constant 0 : index
    %293 = vector.load %arg2[%c6, %c0_180, %c0_181] : memref<10x8x128xf32, #tpu.memory_space<vmem>>, vector<1x8x128xf32>
    %294 = vector.shape_cast %293 : vector<1x8x128xf32> to vector<8x128xf32>
    %295 = vector.extract_strided_slice %294 {offsets = [1, 0], sizes = [1, 128], strides = [1, 1]} : vector<8x128xf32> to vector<1x128xf32>
    %296 = vector.extract_strided_slice %294 {offsets = [2, 0], sizes = [1, 128], strides = [1, 1]} : vector<8x128xf32> to vector<1x128xf32>
    %cst_182 = arith.constant dense<0.000000e+00> : vector<128xf32>
    %297 = vector.multi_reduction <add>, %292, %cst_182 [0] : vector<256x128xf32> to vector<128xf32>
    %298 = vector.shape_cast %297 : vector<128xf32> to vector<1x128xf32>
    %299 = arith.mulf %292, %292 : vector<256x128xf32>
    %cst_183 = arith.constant dense<0.000000e+00> : vector<128xf32>
    %300 = vector.multi_reduction <add>, %299, %cst_183 [0] : vector<256x128xf32> to vector<128xf32>
    %301 = vector.shape_cast %300 : vector<128xf32> to vector<1x128xf32>
    %cst_184 = arith.constant 3.906250e-03 : f32
    %302 = vector.broadcast %cst_184 : f32 to vector<1x128xf32>
    %303 = arith.mulf %298, %302 : vector<1x128xf32>
    %cst_185 = arith.constant 3.906250e-03 : f32
    %304 = vector.broadcast %cst_185 : f32 to vector<1x128xf32>
    %305 = arith.mulf %301, %304 : vector<1x128xf32>
    %306 = arith.mulf %303, %303 : vector<1x128xf32>
    %307 = arith.subf %305, %306 : vector<1x128xf32>
    %cst_186 = arith.constant 0.000000e+00 : f32
    %308 = vector.broadcast %cst_186 : f32 to vector<1x128xf32>
    %309 = arith.maximumf %307, %308 : vector<1x128xf32>
    %cst_187 = arith.constant 9.99999974E-6 : f32
    %310 = vector.broadcast %cst_187 : f32 to vector<1x128xf32>
    %311 = arith.addf %309, %310 : vector<1x128xf32>
    %312 = math.rsqrt %311 : vector<1x128xf32>
    %313 = arith.mulf %295, %312 : vector<1x128xf32>
    %314 = arith.mulf %303, %313 : vector<1x128xf32>
    %315 = arith.subf %296, %314 : vector<1x128xf32>
    %316 = vector.broadcast %313 : vector<1x128xf32> to vector<256x128xf32>
    %317 = arith.mulf %292, %316 : vector<256x128xf32>
    %318 = vector.broadcast %315 : vector<1x128xf32> to vector<256x128xf32>
    %319 = arith.addf %317, %318 : vector<256x128xf32>
    %cst_188 = arith.constant 0.000000e+00 : f32
    %320 = vector.broadcast %cst_188 : f32 to vector<256x128xf32>
    %321 = arith.maximumf %319, %320 : vector<256x128xf32>
    %c7_i32_189 = arith.constant 7 : i32
    %c1_i32_190 = arith.constant 1 : i32
    %c1_i32_191 = arith.constant 1 : i32
    %c0_i32_192 = arith.constant 0 : i32
    %c0_i32_193 = arith.constant 0 : i32
    %322 = tpu.memref_slice %arg1[%c7_i32_189, %c0_i32_192, %c0_i32_193] : memref<10x128x128xbf16, #tpu.memory_space<any>> -> memref<1x128x128xbf16, #tpu.memory_space<any>>
    %323 = tpu.memref_squeeze %322 : memref<1x128x128xbf16, #tpu.memory_space<any>> -> memref<128x128xbf16, #tpu.memory_space<any>>
    %c0_i32_194 = arith.constant 0 : i32
    %c0_i32_195 = arith.constant 0 : i32
    %324 = tpu.memref_slice %arg4[%c1_i32_190, %c0_i32_194, %c0_i32_195] : memref<2x128x128xbf16, #tpu.memory_space<vmem>> -> memref<1x128x128xbf16, #tpu.memory_space<vmem>>
    %325 = tpu.memref_squeeze %324 : memref<1x128x128xbf16, #tpu.memory_space<vmem>> -> memref<128x128xbf16, #tpu.memory_space<vmem>>
    %326 = tpu.memref_slice %arg5[%c1_i32_191] : memref<2x!tpu.dma_semaphore, #tpu.memory_space<semaphore_mem>> -> memref<1x!tpu.dma_semaphore, #tpu.memory_space<semaphore_mem>>
    %327 = tpu.memref_squeeze %326 : memref<1x!tpu.dma_semaphore, #tpu.memory_space<semaphore_mem>> -> memref<!tpu.dma_semaphore, #tpu.memory_space<semaphore_mem>>
    tpu.wait_dma2 semaphore(%327 : memref<!tpu.dma_semaphore, #tpu.memory_space<semaphore_mem>>) src(%323 : memref<128x128xbf16, #tpu.memory_space<any>>) dst(%325 : memref<128x128xbf16, #tpu.memory_space<vmem>>)
    %c8_i32 = arith.constant 8 : i32
    %c0_i32_196 = arith.constant 0 : i32
    %c0_i32_197 = arith.constant 0 : i32
    %c0_i32_198 = arith.constant 0 : i32
    %c0_i32_199 = arith.constant 0 : i32
    %328 = tpu.memref_slice %arg1[%c8_i32, %c0_i32_198, %c0_i32_199] : memref<10x128x128xbf16, #tpu.memory_space<any>> -> memref<1x128x128xbf16, #tpu.memory_space<any>>
    %329 = tpu.memref_squeeze %328 : memref<1x128x128xbf16, #tpu.memory_space<any>> -> memref<128x128xbf16, #tpu.memory_space<any>>
    %c0_i32_200 = arith.constant 0 : i32
    %c0_i32_201 = arith.constant 0 : i32
    %330 = tpu.memref_slice %arg4[%c0_i32_196, %c0_i32_200, %c0_i32_201] : memref<2x128x128xbf16, #tpu.memory_space<vmem>> -> memref<1x128x128xbf16, #tpu.memory_space<vmem>>
    %331 = tpu.memref_squeeze %330 : memref<1x128x128xbf16, #tpu.memory_space<vmem>> -> memref<128x128xbf16, #tpu.memory_space<vmem>>
    %332 = tpu.memref_slice %arg5[%c0_i32_197] : memref<2x!tpu.dma_semaphore, #tpu.memory_space<semaphore_mem>> -> memref<1x!tpu.dma_semaphore, #tpu.memory_space<semaphore_mem>>
    %333 = tpu.memref_squeeze %332 : memref<1x!tpu.dma_semaphore, #tpu.memory_space<semaphore_mem>> -> memref<!tpu.dma_semaphore, #tpu.memory_space<semaphore_mem>>
    tpu.enqueue_dma source(%329 : memref<128x128xbf16, #tpu.memory_space<any>>) target(%331 : memref<128x128xbf16, #tpu.memory_space<vmem>>) target_semaphore(%333 : memref<!tpu.dma_semaphore, #tpu.memory_space<semaphore_mem>>)
    %c1_202 = arith.constant 1 : index
    %c0_203 = arith.constant 0 : index
    %c0_204 = arith.constant 0 : index
    %334 = vector.load %arg4[%c1_202, %c0_203, %c0_204] : memref<2x128x128xbf16, #tpu.memory_space<vmem>>, vector<1x128x128xbf16>
    %335 = vector.shape_cast %334 : vector<1x128x128xbf16> to vector<128x128xbf16>
    %336 = arith.truncf %321 : vector<256x128xf32> to vector<256x128xbf16>
    %cst_205 = arith.constant dense<0.000000e+00> : vector<256x128xf32>
    %337 = tpu.matmul %336, %335, %cst_205 {dimension_numbers = #tpu.dot_dimension_numbers<[1], [0], [0], [1], [0, 0, 1, 1], [], []>} : vector<256x128xbf16>, vector<128x128xbf16>, vector<256x128xf32> -> vector<256x128xf32>
    %c7 = arith.constant 7 : index
    %c0_206 = arith.constant 0 : index
    %c0_207 = arith.constant 0 : index
    %338 = vector.load %arg2[%c7, %c0_206, %c0_207] : memref<10x8x128xf32, #tpu.memory_space<vmem>>, vector<1x8x128xf32>
    %339 = vector.shape_cast %338 : vector<1x8x128xf32> to vector<8x128xf32>
    %340 = vector.extract_strided_slice %339 {offsets = [1, 0], sizes = [1, 128], strides = [1, 1]} : vector<8x128xf32> to vector<1x128xf32>
    %341 = vector.extract_strided_slice %339 {offsets = [2, 0], sizes = [1, 128], strides = [1, 1]} : vector<8x128xf32> to vector<1x128xf32>
    %cst_208 = arith.constant dense<0.000000e+00> : vector<128xf32>
    %342 = vector.multi_reduction <add>, %337, %cst_208 [0] : vector<256x128xf32> to vector<128xf32>
    %343 = vector.shape_cast %342 : vector<128xf32> to vector<1x128xf32>
    %344 = arith.mulf %337, %337 : vector<256x128xf32>
    %cst_209 = arith.constant dense<0.000000e+00> : vector<128xf32>
    %345 = vector.multi_reduction <add>, %344, %cst_209 [0] : vector<256x128xf32> to vector<128xf32>
    %346 = vector.shape_cast %345 : vector<128xf32> to vector<1x128xf32>
    %cst_210 = arith.constant 3.906250e-03 : f32
    %347 = vector.broadcast %cst_210 : f32 to vector<1x128xf32>
    %348 = arith.mulf %343, %347 : vector<1x128xf32>
    %cst_211 = arith.constant 3.906250e-03 : f32
    %349 = vector.broadcast %cst_211 : f32 to vector<1x128xf32>
    %350 = arith.mulf %346, %349 : vector<1x128xf32>
    %351 = arith.mulf %348, %348 : vector<1x128xf32>
    %352 = arith.subf %350, %351 : vector<1x128xf32>
    %cst_212 = arith.constant 0.000000e+00 : f32
    %353 = vector.broadcast %cst_212 : f32 to vector<1x128xf32>
    %354 = arith.maximumf %352, %353 : vector<1x128xf32>
    %cst_213 = arith.constant 9.99999974E-6 : f32
    %355 = vector.broadcast %cst_213 : f32 to vector<1x128xf32>
    %356 = arith.addf %354, %355 : vector<1x128xf32>
    %357 = math.rsqrt %356 : vector<1x128xf32>
    %358 = arith.mulf %340, %357 : vector<1x128xf32>
    %359 = arith.mulf %348, %358 : vector<1x128xf32>
    %360 = arith.subf %341, %359 : vector<1x128xf32>
    %361 = vector.broadcast %358 : vector<1x128xf32> to vector<256x128xf32>
    %362 = arith.mulf %337, %361 : vector<256x128xf32>
    %363 = vector.broadcast %360 : vector<1x128xf32> to vector<256x128xf32>
    %364 = arith.addf %362, %363 : vector<256x128xf32>
    %cst_214 = arith.constant 0.000000e+00 : f32
    %365 = vector.broadcast %cst_214 : f32 to vector<256x128xf32>
    %366 = arith.maximumf %364, %365 : vector<256x128xf32>
    %c8_i32_215 = arith.constant 8 : i32
    %c0_i32_216 = arith.constant 0 : i32
    %c0_i32_217 = arith.constant 0 : i32
    %c0_i32_218 = arith.constant 0 : i32
    %c0_i32_219 = arith.constant 0 : i32
    %367 = tpu.memref_slice %arg1[%c8_i32_215, %c0_i32_218, %c0_i32_219] : memref<10x128x128xbf16, #tpu.memory_space<any>> -> memref<1x128x128xbf16, #tpu.memory_space<any>>
    %368 = tpu.memref_squeeze %367 : memref<1x128x128xbf16, #tpu.memory_space<any>> -> memref<128x128xbf16, #tpu.memory_space<any>>
    %c0_i32_220 = arith.constant 0 : i32
    %c0_i32_221 = arith.constant 0 : i32
    %369 = tpu.memref_slice %arg4[%c0_i32_216, %c0_i32_220, %c0_i32_221] : memref<2x128x128xbf16, #tpu.memory_space<vmem>> -> memref<1x128x128xbf16, #tpu.memory_space<vmem>>
    %370 = tpu.memref_squeeze %369 : memref<1x128x128xbf16, #tpu.memory_space<vmem>> -> memref<128x128xbf16, #tpu.memory_space<vmem>>
    %371 = tpu.memref_slice %arg5[%c0_i32_217] : memref<2x!tpu.dma_semaphore, #tpu.memory_space<semaphore_mem>> -> memref<1x!tpu.dma_semaphore, #tpu.memory_space<semaphore_mem>>
    %372 = tpu.memref_squeeze %371 : memref<1x!tpu.dma_semaphore, #tpu.memory_space<semaphore_mem>> -> memref<!tpu.dma_semaphore, #tpu.memory_space<semaphore_mem>>
    tpu.wait_dma2 semaphore(%372 : memref<!tpu.dma_semaphore, #tpu.memory_space<semaphore_mem>>) src(%368 : memref<128x128xbf16, #tpu.memory_space<any>>) dst(%370 : memref<128x128xbf16, #tpu.memory_space<vmem>>)
    %c9_i32 = arith.constant 9 : i32
    %c1_i32_222 = arith.constant 1 : i32
    %c1_i32_223 = arith.constant 1 : i32
    %c0_i32_224 = arith.constant 0 : i32
    %c0_i32_225 = arith.constant 0 : i32
    %373 = tpu.memref_slice %arg1[%c9_i32, %c0_i32_224, %c0_i32_225] : memref<10x128x128xbf16, #tpu.memory_space<any>> -> memref<1x128x128xbf16, #tpu.memory_space<any>>
    %374 = tpu.memref_squeeze %373 : memref<1x128x128xbf16, #tpu.memory_space<any>> -> memref<128x128xbf16, #tpu.memory_space<any>>
    %c0_i32_226 = arith.constant 0 : i32
    %c0_i32_227 = arith.constant 0 : i32
    %375 = tpu.memref_slice %arg4[%c1_i32_222, %c0_i32_226, %c0_i32_227] : memref<2x128x128xbf16, #tpu.memory_space<vmem>> -> memref<1x128x128xbf16, #tpu.memory_space<vmem>>
    %376 = tpu.memref_squeeze %375 : memref<1x128x128xbf16, #tpu.memory_space<vmem>> -> memref<128x128xbf16, #tpu.memory_space<vmem>>
    %377 = tpu.memref_slice %arg5[%c1_i32_223] : memref<2x!tpu.dma_semaphore, #tpu.memory_space<semaphore_mem>> -> memref<1x!tpu.dma_semaphore, #tpu.memory_space<semaphore_mem>>
    %378 = tpu.memref_squeeze %377 : memref<1x!tpu.dma_semaphore, #tpu.memory_space<semaphore_mem>> -> memref<!tpu.dma_semaphore, #tpu.memory_space<semaphore_mem>>
    tpu.enqueue_dma source(%374 : memref<128x128xbf16, #tpu.memory_space<any>>) target(%376 : memref<128x128xbf16, #tpu.memory_space<vmem>>) target_semaphore(%378 : memref<!tpu.dma_semaphore, #tpu.memory_space<semaphore_mem>>)
    %c0_228 = arith.constant 0 : index
    %c0_229 = arith.constant 0 : index
    %c0_230 = arith.constant 0 : index
    %379 = vector.load %arg4[%c0_228, %c0_229, %c0_230] : memref<2x128x128xbf16, #tpu.memory_space<vmem>>, vector<1x128x128xbf16>
    %380 = vector.shape_cast %379 : vector<1x128x128xbf16> to vector<128x128xbf16>
    %381 = arith.truncf %366 : vector<256x128xf32> to vector<256x128xbf16>
    %cst_231 = arith.constant dense<0.000000e+00> : vector<256x128xf32>
    %382 = tpu.matmul %381, %380, %cst_231 {dimension_numbers = #tpu.dot_dimension_numbers<[1], [0], [0], [1], [0, 0, 1, 1], [], []>} : vector<256x128xbf16>, vector<128x128xbf16>, vector<256x128xf32> -> vector<256x128xf32>
    %c8 = arith.constant 8 : index
    %c0_232 = arith.constant 0 : index
    %c0_233 = arith.constant 0 : index
    %383 = vector.load %arg2[%c8, %c0_232, %c0_233] : memref<10x8x128xf32, #tpu.memory_space<vmem>>, vector<1x8x128xf32>
    %384 = vector.shape_cast %383 : vector<1x8x128xf32> to vector<8x128xf32>
    %385 = vector.extract_strided_slice %384 {offsets = [1, 0], sizes = [1, 128], strides = [1, 1]} : vector<8x128xf32> to vector<1x128xf32>
    %386 = vector.extract_strided_slice %384 {offsets = [2, 0], sizes = [1, 128], strides = [1, 1]} : vector<8x128xf32> to vector<1x128xf32>
    %cst_234 = arith.constant dense<0.000000e+00> : vector<128xf32>
    %387 = vector.multi_reduction <add>, %382, %cst_234 [0] : vector<256x128xf32> to vector<128xf32>
    %388 = vector.shape_cast %387 : vector<128xf32> to vector<1x128xf32>
    %389 = arith.mulf %382, %382 : vector<256x128xf32>
    %cst_235 = arith.constant dense<0.000000e+00> : vector<128xf32>
    %390 = vector.multi_reduction <add>, %389, %cst_235 [0] : vector<256x128xf32> to vector<128xf32>
    %391 = vector.shape_cast %390 : vector<128xf32> to vector<1x128xf32>
    %cst_236 = arith.constant 3.906250e-03 : f32
    %392 = vector.broadcast %cst_236 : f32 to vector<1x128xf32>
    %393 = arith.mulf %388, %392 : vector<1x128xf32>
    %cst_237 = arith.constant 3.906250e-03 : f32
    %394 = vector.broadcast %cst_237 : f32 to vector<1x128xf32>
    %395 = arith.mulf %391, %394 : vector<1x128xf32>
    %396 = arith.mulf %393, %393 : vector<1x128xf32>
    %397 = arith.subf %395, %396 : vector<1x128xf32>
    %cst_238 = arith.constant 0.000000e+00 : f32
    %398 = vector.broadcast %cst_238 : f32 to vector<1x128xf32>
    %399 = arith.maximumf %397, %398 : vector<1x128xf32>
    %cst_239 = arith.constant 9.99999974E-6 : f32
    %400 = vector.broadcast %cst_239 : f32 to vector<1x128xf32>
    %401 = arith.addf %399, %400 : vector<1x128xf32>
    %402 = math.rsqrt %401 : vector<1x128xf32>
    %403 = arith.mulf %385, %402 : vector<1x128xf32>
    %404 = arith.mulf %393, %403 : vector<1x128xf32>
    %405 = arith.subf %386, %404 : vector<1x128xf32>
    %406 = vector.broadcast %403 : vector<1x128xf32> to vector<256x128xf32>
    %407 = arith.mulf %382, %406 : vector<256x128xf32>
    %408 = vector.broadcast %405 : vector<1x128xf32> to vector<256x128xf32>
    %409 = arith.addf %407, %408 : vector<256x128xf32>
    %cst_240 = arith.constant 0.000000e+00 : f32
    %410 = vector.broadcast %cst_240 : f32 to vector<256x128xf32>
    %411 = arith.maximumf %409, %410 : vector<256x128xf32>
    %c9_i32_241 = arith.constant 9 : i32
    %c1_i32_242 = arith.constant 1 : i32
    %c1_i32_243 = arith.constant 1 : i32
    %c0_i32_244 = arith.constant 0 : i32
    %c0_i32_245 = arith.constant 0 : i32
    %412 = tpu.memref_slice %arg1[%c9_i32_241, %c0_i32_244, %c0_i32_245] : memref<10x128x128xbf16, #tpu.memory_space<any>> -> memref<1x128x128xbf16, #tpu.memory_space<any>>
    %413 = tpu.memref_squeeze %412 : memref<1x128x128xbf16, #tpu.memory_space<any>> -> memref<128x128xbf16, #tpu.memory_space<any>>
    %c0_i32_246 = arith.constant 0 : i32
    %c0_i32_247 = arith.constant 0 : i32
    %414 = tpu.memref_slice %arg4[%c1_i32_242, %c0_i32_246, %c0_i32_247] : memref<2x128x128xbf16, #tpu.memory_space<vmem>> -> memref<1x128x128xbf16, #tpu.memory_space<vmem>>
    %415 = tpu.memref_squeeze %414 : memref<1x128x128xbf16, #tpu.memory_space<vmem>> -> memref<128x128xbf16, #tpu.memory_space<vmem>>
    %416 = tpu.memref_slice %arg5[%c1_i32_243] : memref<2x!tpu.dma_semaphore, #tpu.memory_space<semaphore_mem>> -> memref<1x!tpu.dma_semaphore, #tpu.memory_space<semaphore_mem>>
    %417 = tpu.memref_squeeze %416 : memref<1x!tpu.dma_semaphore, #tpu.memory_space<semaphore_mem>> -> memref<!tpu.dma_semaphore, #tpu.memory_space<semaphore_mem>>
    tpu.wait_dma2 semaphore(%417 : memref<!tpu.dma_semaphore, #tpu.memory_space<semaphore_mem>>) src(%413 : memref<128x128xbf16, #tpu.memory_space<any>>) dst(%415 : memref<128x128xbf16, #tpu.memory_space<vmem>>)
    %c1_248 = arith.constant 1 : index
    %c0_249 = arith.constant 0 : index
    %c0_250 = arith.constant 0 : index
    %418 = vector.load %arg4[%c1_248, %c0_249, %c0_250] : memref<2x128x128xbf16, #tpu.memory_space<vmem>>, vector<1x128x128xbf16>
    %419 = vector.shape_cast %418 : vector<1x128x128xbf16> to vector<128x128xbf16>
    %420 = arith.truncf %411 : vector<256x128xf32> to vector<256x128xbf16>
    %cst_251 = arith.constant dense<0.000000e+00> : vector<256x128xf32>
    %421 = tpu.matmul %420, %419, %cst_251 {dimension_numbers = #tpu.dot_dimension_numbers<[1], [0], [0], [1], [0, 0, 1, 1], [], []>} : vector<256x128xbf16>, vector<128x128xbf16>, vector<256x128xf32> -> vector<256x128xf32>
    %c9 = arith.constant 9 : index
    %c0_252 = arith.constant 0 : index
    %c0_253 = arith.constant 0 : index
    %422 = vector.load %arg2[%c9, %c0_252, %c0_253] : memref<10x8x128xf32, #tpu.memory_space<vmem>>, vector<1x8x128xf32>
    %423 = vector.shape_cast %422 : vector<1x8x128xf32> to vector<8x128xf32>
    %424 = vector.extract_strided_slice %421 {offsets = [0, 0], sizes = [256, 32], strides = [1, 1]} : vector<256x128xf32> to vector<256x32xf32>
    %425 = vector.extract_strided_slice %423 {offsets = [0, 0], sizes = [1, 32], strides = [1, 1]} : vector<8x128xf32> to vector<1x32xf32>
    %426 = vector.broadcast %425 : vector<1x32xf32> to vector<256x32xf32>
    %427 = arith.addf %424, %426 : vector<256x32xf32>
    %c0_254 = arith.constant 0 : index
    %c0_255 = arith.constant 0 : index
    %428 = vector.load %arg3[%c0_254, %c0_255] : memref<256x32xf32, #tpu.memory_space<vmem>>, vector<256x32xf32>
    tpu.vector_store %arg3[%c0_254, %c0_255], %427 {strides = array<i32>} : memref<256x32xf32, #tpu.memory_space<vmem>>, vector<256x32xf32>,
    return
  }
}

</mosaic_0001>

<llo_original>
// kernel: autoencoder_forward.1
$region0: #{autoencoder_forward.1}
  #allocation0 [shape = 'u32[]', space=smem, size = 0x4, offset = 0x4, fixed_abs, tag = 'smem constant byte address 0x4 - core index']
  #allocation1 [shape = 'u32[144,128]{1,0:T(1,128)}', space=vmem, size = 0x12000, scoped, tag = 'internal scratch']
  #allocation2 [shape = 'bf16[2,128,128]{2,1,0:T(16,128)(2,1)}', space=vmem, size = 0x10000, scoped, tag = 'scratch operand']
  #allocation3 [shape = 's32[2]{0}', space=sflag, size = 0x8, scoped, tag = 'scratch operand']
  #allocation4 [shape = 's32[]', space=sflag, size = 0x4, offset = 0, fixed_abs, tag = 'sflag constant byte address 0x0 - dummy sync flag']
  #allocation5 [shape = 's32[]', space=sflag, size = 0x4, offset = 0, fixed_abs, tag = 'sflag constant byte address 0x0 - dummy sync flag']
  #allocation6 [shape = 'u32[]', space=smem, size = 0x4, offset = 0x44, fixed_abs, tag = 'smem constant byte address 0x44 - assertion arg 0']
  #allocation7 [shape = 'u32[]', space=smem, size = 0x4, offset = 0x48, fixed_abs, tag = 'smem constant byte address 0x48 - assertion arg 1']
  #allocation8 [shape = 's32[]', space=sflag, size = 0x4, offset = 0, fixed_abs, tag = 'sflag constant byte address 0x0 - dummy sync flag']
  #allocation9 [shape = 's32[]', space=sflag, size = 0x4, offset = 0, fixed_abs, tag = 'sflag constant byte address 0x0 - dummy sync flag']
  #allocation10 [shape = 's32[]', space=sflag, size = 0x4, offset = 0, fixed_abs, tag = 'sflag constant byte address 0x0 - dummy sync flag']
  #allocation11 [shape = 's32[]', space=sflag, size = 0x4, offset = 0, fixed_abs, tag = 'sflag constant byte address 0x0 - dummy sync flag']
  #allocation12 [shape = 's32[]', space=sflag, size = 0x4, offset = 0, fixed_abs, tag = 'sflag constant byte address 0x0 - dummy sync flag']
  #allocation13 [shape = 's32[]', space=sflag, size = 0x4, offset = 0, fixed_abs, tag = 'sflag constant byte address 0x0 - dummy sync flag']
  #allocation14 [shape = 's32[]', space=sflag, size = 0x4, offset = 0, fixed_abs, tag = 'sflag constant byte address 0x0 - dummy sync flag']
  #allocation15 [shape = 's32[]', space=sflag, size = 0x4, offset = 0, fixed_abs, tag = 'sflag constant byte address 0x0 - dummy sync flag']
  #allocation16 [shape = 's32[]', space=sflag, size = 0x4, offset = 0, fixed_abs, tag = 'sflag constant byte address 0x0 - dummy sync flag']
  #allocation17 [shape = 's32[]', space=sflag, size = 0x4, offset = 0, fixed_abs, tag = 'sflag constant byte address 0x0 - dummy sync flag']
  #allocation18 [shape = 's32[]', space=sflag, size = 0x4, offset = 0, fixed_abs, tag = 'sflag constant byte address 0x0 - dummy sync flag']
  #allocation19 [shape = 's32[]', space=sflag, size = 0x4, offset = 0, fixed_abs, tag = 'sflag constant byte address 0x0 - dummy sync flag']
  #allocation20 [shape = 's32[]', space=sflag, size = 0x4, offset = 0, fixed_abs, tag = 'sflag constant byte address 0x0 - dummy sync flag']
  #allocation21 [shape = 's32[]', space=sflag, size = 0x4, offset = 0, fixed_abs, tag = 'sflag constant byte address 0x0 - dummy sync flag']
  #allocation22 [shape = 's32[]', space=sflag, size = 0x4, offset = 0, fixed_abs, tag = 'sflag constant byte address 0x0 - dummy sync flag']
  #allocation23 [shape = 's32[]', space=sflag, size = 0x4, offset = 0, fixed_abs, tag = 'sflag constant byte address 0x0 - dummy sync flag']
  #allocation24 [shape = 's32[]', space=sflag, size = 0x4, offset = 0, fixed_abs, tag = 'sflag constant byte address 0x0 - dummy sync flag']
  #allocation25 [shape = 's32[]', space=sflag, size = 0x4, offset = 0, fixed_abs, tag = 'sflag constant byte address 0x0 - dummy sync flag']
  %s0 = inlined_call_operand.vmem [shape: f32[256,32], index: 0, kind: input, shape index: {}]
  %s1 = inlined_call_operand.hbm [shape: bf16[10,128,128], index: 1, kind: input, shape index: {}]
  %s2 = inlined_call_operand.vmem [shape: f32[10,8,128], index: 2, kind: input, shape index: {}]
  %s3 = inlined_call_operand.vmem [shape: f32[256,32], index: 3, kind: output, shape index: {}]
  %s4 = sld [smem:[#allocation0]]
  $region58: #{autoencoder_forward.1} parent=0
    _
  %s6 = ssub.s32 1, %s4
  %s7 = scalar_select 0, %s6, %s4
  // Predicated region
  $region2: #{autoencoder_forward.1} parent=0 // pred_check
    _
  $region3: #{autoencoder_forward.1} parent=0 // pred_check_branch
    %9 = sbr.rel (0) target = $region5
  $region4: #{autoencoder_forward.1} parent=0 // pred_region
    _
  $region5: #{autoencoder_forward.1} parent=0 // pred_fallthru
    _
  // Predicated region
  $region6: #{autoencoder_forward.1} parent=0 // pred_check
    _
  $region7: #{autoencoder_forward.1} parent=0 // pred_check_branch
    %11 = sbr.rel (0) target = $region9
  $region8: #{autoencoder_forward.1} parent=0 // pred_region
    _
  $region9: #{autoencoder_forward.1} parent=0 // pred_fallthru
    _
  // Predicated region
  $region10: #{autoencoder_forward.1} parent=0 // pred_check
    _
  $region11: #{autoencoder_forward.1} parent=0 // pred_check_branch
    %14 = sbr.rel target = $region13
  $region12: #{autoencoder_forward.1} parent=0 // pred_region
    %15 = sst [smem:[#allocation6]] [#allocation5]
    %16 = sst [smem:[#allocation7]] [#allocation4]
  $region13: #{autoencoder_forward.1} parent=0 // pred_fallthru
    _
  %18 = shalt.err (0)
  %s20 = sshll.u32 [#allocation2], 4
  %s21 = int_to_ptr.vmem [resolvable:$true] %s20
  %23 = dma.hbm_to_vmem [thread:$0]  %s1, 1024, %s21, [#allocation3]
  %v24 = vld [vmem:[%s0] sm:$0xff]
  %v25 = vld [vmem:[%s0 + $0x8] sm:$0xff]
  %v26 = vld [vmem:[%s0 + $0x10] sm:$0xff]
  %v27 = vld [vmem:[%s0 + $0x18] sm:$0xff]
  %v28 = vld [vmem:[%s0 + $0x20] sm:$0xff]
  %v29 = vld [vmem:[%s0 + $0x28] sm:$0xff]
  %v30 = vld [vmem:[%s0 + $0x30] sm:$0xff]
  %v31 = vld [vmem:[%s0 + $0x38] sm:$0xff]
  %v32 = vld [vmem:[%s0 + $0x40] sm:$0xff]
  %v33 = vld [vmem:[%s0 + $0x48] sm:$0xff]
  %v34 = vld [vmem:[%s0 + $0x50] sm:$0xff]
  %v35 = vld [vmem:[%s0 + $0x58] sm:$0xff]
  %v36 = vld [vmem:[%s0 + $0x60] sm:$0xff]
  %v37 = vld [vmem:[%s0 + $0x68] sm:$0xff]
  %v38 = vld [vmem:[%s0 + $0x70] sm:$0xff]
  %v39 = vld [vmem:[%s0 + $0x78] sm:$0xff]
  %v40 = vld [vmem:[%s0 + $0x80] sm:$0xff]
  %v41 = vld [vmem:[%s0 + $0x88] sm:$0xff]
  %v42 = vld [vmem:[%s0 + $0x90] sm:$0xff]
  %v43 = vld [vmem:[%s0 + $0x98] sm:$0xff]
  %v44 = vld [vmem:[%s0 + $0xa0] sm:$0xff]
  %v45 = vld [vmem:[%s0 + $0xa8] sm:$0xff]
  %v46 = vld [vmem:[%s0 + $0xb0] sm:$0xff]
  %v47 = vld [vmem:[%s0 + $0xb8] sm:$0xff]
  %v48 = vld [vmem:[%s0 + $0xc0] sm:$0xff]
  %v49 = vld [vmem:[%s0 + $0xc8] sm:$0xff]
  %v50 = vld [vmem:[%s0 + $0xd0] sm:$0xff]
  %v51 = vld [vmem:[%s0 + $0xd8] sm:$0xff]
  %v52 = vld [vmem:[%s0 + $0xe0] sm:$0xff]
  %v53 = vld [vmem:[%s0 + $0xe8] sm:$0xff]
  %v54 = vld [vmem:[%s0 + $0xf0] sm:$0xff]
  %v55 = vld [vmem:[%s0 + $0xf8] sm:$0xff]
  %s56 = smul.u32 4, 16
  %s57 = smul.u32 %s56, 1
  %s58 = sshll.u32 %s57, 4
  %59 = dma.done [#allocation3], %s58
  %s60 = scalar_lea.hbm %s1, 1024
  %s61 = scalar_lea.vmem [#allocation2], 64
  %s62 = scalar_lea.sflag [#allocation3], 1
  // Predicated region
  $region14: #{autoencoder_forward.1} parent=0 // pred_check
    _
  $region15: #{autoencoder_forward.1} parent=0 // pred_check_branch
    %64 = sbr.rel target = $region17
  $region16: #{autoencoder_forward.1} parent=0 // pred_region
    %65 = sst [smem:[#allocation6]] [#allocation9]
    %66 = sst [smem:[#allocation7]] [#allocation8]
  $region17: #{autoencoder_forward.1} parent=0 // pred_fallthru
    _
  %68 = shalt.err (0)
  %s70 = sshll.u32 %s61, 4
  %s71 = int_to_ptr.vmem [resolvable:$true] %s70
  %73 = dma.hbm_to_vmem [thread:$0]  %s60, 1024, %s71, %s62
  %v74 = vld [vmem:[#allocation2] sm:$0xff]
  %v75 = vld [vmem:[#allocation2 + $0x8] sm:$0xff]
  %v76 = vpack.c.bf16 %v25, %v24
  %v77 = vpack.c.bf16 %v27, %v26
  %v78 = vpack.c.bf16 %v29, %v28
  %v79 = vpack.c.bf16 %v31, %v30
  %v80 = vpack.c.bf16 %v33, %v32
  %v81 = vpack.c.bf16 %v35, %v34
  %v82 = vpack.c.bf16 %v37, %v36
  %v83 = vpack.c.bf16 %v39, %v38
  %v84 = vpack.c.bf16 %v41, %v40
  %v85 = vpack.c.bf16 %v43, %v42
  %v86 = vpack.c.bf16 %v45, %v44
  %v87 = vpack.c.bf16 %v47, %v46
  %v88 = vpack.c.bf16 %v49, %v48
  %v89 = vpack.c.bf16 %v51, %v50
  %v90 = vpack.c.bf16 %v53, %v52
  %v91 = vpack.c.bf16 %v55, %v54
  %vm92 = vcmask 261120
  %v94 = vsel %vm92, %v76, 0
  %v97 = vsel %vm92, %v77, 0
  %v100 = vsel %vm92, %v78, 0
  %v103 = vsel %vm92, %v79, 0
  %v106 = vsel %vm92, %v80, 0
  %v109 = vsel %vm92, %v81, 0
  %v112 = vsel %vm92, %v82, 0
  %v115 = vsel %vm92, %v83, 0
  %v118 = vsel %vm92, %v84, 0
  %v121 = vsel %vm92, %v85, 0
  %v124 = vsel %vm92, %v86, 0
  %v127 = vsel %vm92, %v87, 0
  %v130 = vsel %vm92, %v88, 0
  %v133 = vsel %vm92, %v89, 0
  %v136 = vsel %vm92, %v90, 0
  %v139 = vsel %vm92, %v91, 0
  %141 = vmatprep.subr.bf16.mxu0 0
  %142 = vmatpush1.bf16.msra.mxu0 %v74
  %143 = vmatprep.subr.bf16.mxu0 0
  %144 = vmatpush1.bf16.msra.mxu0 %v75
  %145 = vmatprep.subr.bf16.mxu0 0
  %146 = vmatpush1.bf16.msra.mxu0 0
  %147 = vmatprep.subr.bf16.mxu0 0
  %148 = vmatpush1.bf16.msra.mxu0 0
  %149 = vmatprep.subr.bf16.mxu0 0
  %150 = vmatpush1.bf16.msra.mxu0 0
  %151 = vmatprep.subr.bf16.mxu0 0
  %152 = vmatpush1.bf16.msra.mxu0 0
  %153 = vmatprep.subr.bf16.mxu0 0
  %154 = vmatpush1.bf16.msra.mxu0 0
  %155 = vmatprep.subr.bf16.mxu0 0
  %156 = vmatpush1.bf16.msra.mxu0 0
  %157 = vmatprep.subr.bf16.mxu0 0
  %158 = vmatpush1.bf16.msra.mxu0 0
  %159 = vmatprep.subr.bf16.mxu0 0
  %160 = vmatpush1.bf16.msra.mxu0 0
  %161 = vmatprep.subr.bf16.mxu0 0
  %162 = vmatpush1.bf16.msra.mxu0 0
  %163 = vmatprep.subr.bf16.mxu0 0
  %164 = vmatpush1.bf16.msra.mxu0 0
  %165 = vmatprep.subr.bf16.mxu0 0
  %166 = vmatpush1.bf16.msra.mxu0 0
  %167 = vmatprep.subr.bf16.mxu0 0
  %168 = vmatpush1.bf16.msra.mxu0 0
  %169 = vmatprep.subr.bf16.mxu0 0
  %170 = vmatpush1.bf16.msra.mxu0 0
  %171 = vmatprep.subr.bf16.mxu0 0
  %172 = vmatpush1.bf16.msra.mxu0 0
  %173 = vmatprep.mubr.bf16.mxu0 0
  %174 = vmatmul.mubr.bf16.gmra.mrb[0].mxu0 %v94
  %v175 = vpop.f32.mrb[0].mxu0
  %v176 = vadd.f32 0.0, %v175
  %v177 = vpop.f32.mrb[0].mxu0
  %v178 = vpop.f32.mrb[0].mxu0
  %v179 = vadd.f32 0.0, %v178
  %v180 = vpop.f32.mrb[0].mxu0
  %181 = vmatprep.mubr.bf16.mxu0 0
  %182 = vmatmul.mubr.bf16.gmra.mrb[0].mxu0 %v97
  %v183 = vpop.f32.mrb[0].mxu0
  %v184 = vadd.f32 0.0, %v183
  %v185 = vpop.f32.mrb[0].mxu0
  %v186 = vpop.f32.mrb[0].mxu0
  %v187 = vadd.f32 0.0, %v186
  %v188 = vpop.f32.mrb[0].mxu0
  %189 = vmatprep.mubr.bf16.mxu0 0
  %190 = vmatmul.mubr.bf16.gmra.mrb[0].mxu0 %v100
  %v191 = vpop.f32.mrb[0].mxu0
  %v192 = vadd.f32 0.0, %v191
  %v193 = vpop.f32.mrb[0].mxu0
  %v194 = vpop.f32.mrb[0].mxu0
  %v195 = vadd.f32 0.0, %v194
  %v196 = vpop.f32.mrb[0].mxu0
  %197 = vmatprep.mubr.bf16.mxu0 0
  %198 = vmatmul.mubr.bf16.gmra.mrb[0].mxu0 %v103
  %v199 = vpop.f32.mrb[0].mxu0
  %v200 = vadd.f32 0.0, %v199
  %v201 = vpop.f32.mrb[0].mxu0
  %v202 = vpop.f32.mrb[0].mxu0
  %v203 = vadd.f32 0.0, %v202
  %v204 = vpop.f32.mrb[0].mxu0
  %205 = vmatprep.mubr.bf16.mxu0 0
  %206 = vmatmul.mubr.bf16.gmra.mrb[0].mxu0 %v106
  %v207 = vpop.f32.mrb[0].mxu0
  %v208 = vadd.f32 0.0, %v207
  %v209 = vpop.f32.mrb[0].mxu0
  %v210 = vpop.f32.mrb[0].mxu0
  %v211 = vadd.f32 0.0, %v210
  %v212 = vpop.f32.mrb[0].mxu0
  %213 = vmatprep.mubr.bf16.mxu0 0
  %214 = vmatmul.mubr.bf16.gmra.mrb[0].mxu0 %v109
  %v215 = vpop.f32.mrb[0].mxu0
  %v216 = vadd.f32 0.0, %v215
  %v217 = vpop.f32.mrb[0].mxu0
  %v218 = vpop.f32.mrb[0].mxu0
  %v219 = vadd.f32 0.0, %v218
  %v220 = vpop.f32.mrb[0].mxu0
  %221 = vmatprep.mubr.bf16.mxu0 0
  %222 = vmatmul.mubr.bf16.gmra.mrb[0].mxu0 %v112
  %v223 = vpop.f32.mrb[0].mxu0
  %v224 = vadd.f32 0.0, %v223
  %v225 = vpop.f32.mrb[0].mxu0
  %v226 = vpop.f32.mrb[0].mxu0
  %v227 = vadd.f32 0.0, %v226
  %v228 = vpop.f32.mrb[0].mxu0
  %229 = vmatprep.mubr.bf16.mxu0 0
  %230 = vmatmul.mubr.bf16.gmra.mrb[0].mxu0 %v115
  %v231 = vpop.f32.mrb[0].mxu0
  %v232 = vadd.f32 0.0, %v231
  %v233 = vpop.f32.mrb[0].mxu0
  %v234 = vpop.f32.mrb[0].mxu0
  %v235 = vadd.f32 0.0, %v234
  %v236 = vpop.f32.mrb[0].mxu0
  %237 = vmatprep.mubr.bf16.mxu0 0
  %238 = vmatmul.mubr.bf16.gmra.mrb[0].mxu0 %v118
  %v239 = vpop.f32.mrb[0].mxu0
  %v240 = vadd.f32 0.0, %v239
  %v241 = vpop.f32.mrb[0].mxu0
  %v242 = vpop.f32.mrb[0].mxu0
  %v243 = vadd.f32 0.0, %v242
  %v244 = vpop.f32.mrb[0].mxu0
  %245 = vmatprep.mubr.bf16.mxu0 0
  %246 = vmatmul.mubr.bf16.gmra.mrb[0].mxu0 %v121
  %v247 = vpop.f32.mrb[0].mxu0
  %v248 = vadd.f32 0.0, %v247
  %v249 = vpop.f32.mrb[0].mxu0
  %v250 = vpop.f32.mrb[0].mxu0
  %v251 = vadd.f32 0.0, %v250
  %v252 = vpop.f32.mrb[0].mxu0
  %253 = vmatprep.mubr.bf16.mxu0 0
  %254 = vmatmul.mubr.bf16.gmra.mrb[0].mxu0 %v124
  %v255 = vpop.f32.mrb[0].mxu0
  %v256 = vadd.f32 0.0, %v255
  %v257 = vpop.f32.mrb[0].mxu0
  %v258 = vpop.f32.mrb[0].mxu0
  %v259 = vadd.f32 0.0, %v258
  %v260 = vpop.f32.mrb[0].mxu0
  %261 = vmatprep.mubr.bf16.mxu0 0
  %262 = vmatmul.mubr.bf16.gmra.mrb[0].mxu0 %v127
  %v263 = vpop.f32.mrb[0].mxu0
  %v264 = vadd.f32 0.0, %v263
  %v265 = vpop.f32.mrb[0].mxu0
  %v266 = vpop.f32.mrb[0].mxu0
  %v267 = vadd.f32 0.0, %v266
  %v268 = vpop.f32.mrb[0].mxu0
  %269 = vmatprep.mubr.bf16.mxu0 0
  %270 = vmatmul.mubr.bf16.gmra.mrb[0].mxu0 %v130
  %v271 = vpop.f32.mrb[0].mxu0
  %v272 = vadd.f32 0.0, %v271
  %v273 = vpop.f32.mrb[0].mxu0
  %v274 = vpop.f32.mrb[0].mxu0
  %v275 = vadd.f32 0.0, %v274
  %v276 = vpop.f32.mrb[0].mxu0
  %277 = vmatprep.mubr.bf16.mxu0 0
  %278 = vmatmul.mubr.bf16.gmra.mrb[0].mxu0 %v133
  %v279 = vpop.f32.mrb[0].mxu0
  %v280 = vadd.f32 0.0, %v279
  %v281 = vpop.f32.mrb[0].mxu0
  %v282 = vpop.f32.mrb[0].mxu0
  %v283 = vadd.f32 0.0, %v282
  %v284 = vpop.f32.mrb[0].mxu0
  %285 = vmatprep.mubr.bf16.mxu0 0
  %286 = vmatmul.mubr.bf16.gmra.mrb[0].mxu0 %v136
  %v287 = vpop.f32.mrb[0].mxu0
  %v288 = vadd.f32 0.0, %v287
  %v289 = vpop.f32.mrb[0].mxu0
  %v290 = vpop.f32.mrb[0].mxu0
  %v291 = vadd.f32 0.0, %v290
  %v292 = vpop.f32.mrb[0].mxu0
  %293 = vmatprep.mubr.bf16.mxu0 0
  %294 = vmatmul.mubr.bf16.gmra.mrb[0].mxu0 %v139
  %v295 = vpop.f32.mrb[0].mxu0
  %v296 = vadd.f32 0.0, %v295
  %v297 = vpop.f32.mrb[0].mxu0
  %v298 = vpop.f32.mrb[0].mxu0
  %v299 = vadd.f32 0.0, %v298
  %v300 = vpop.f32.mrb[0].mxu0
  %301 = vdwg.mxu0
  %v302 = vld [vmem:[%s2] sm:$0xff]
  %v303 = vadd.f32 %v176, %v179
  %v304 = vadd.f32 %v303, %v184
  %v305 = vadd.f32 %v304, %v187
  %v306 = vadd.f32 %v305, %v192
  %v307 = vadd.f32 %v306, %v195
  %v308 = vadd.f32 %v307, %v200
  %v309 = vadd.f32 %v308, %v203
  %v310 = vadd.f32 %v309, %v208
  %v311 = vadd.f32 %v310, %v211
  %v312 = vadd.f32 %v311, %v216
  %v313 = vadd.f32 %v312, %v219
  %v314 = vadd.f32 %v313, %v224
  %v315 = vadd.f32 %v314, %v227
  %v316 = vadd.f32 %v315, %v232
  %v317 = vadd.f32 %v316, %v235
  %v318 = vadd.f32 %v317, %v240
  %v319 = vadd.f32 %v318, %v243
  %v320 = vadd.f32 %v319, %v248
  %v321 = vadd.f32 %v320, %v251
  %v322 = vadd.f32 %v321, %v256
  %v323 = vadd.f32 %v322, %v259
  %v324 = vadd.f32 %v323, %v264
  %v325 = vadd.f32 %v324, %v267
  %v326 = vadd.f32 %v325, %v272
  %v327 = vadd.f32 %v326, %v275
  %v328 = vadd.f32 %v327, %v280
  %v329 = vadd.f32 %v328, %v283
  %v330 = vadd.f32 %v329, %v288
  %v331 = vadd.f32 %v330, %v291
  %v332 = vadd.f32 %v331, %v296
  %v333 = vadd.f32 %v332, %v299
  %v334 = vrot.slane %v333, 4
  %v335 = vadd.f32 %v333, %v334
  %v336 = vrot.slane %v335, 2
  %v337 = vadd.f32 %v335, %v336
  %v338 = vrot.slane %v337, 1
  %v339 = vadd.f32 %v337, %v338
  %v340 = vmul.f32 %v176, %v176
  %v341 = vmul.f32 %v179, %v179
  %v342 = vmul.f32 %v184, %v184
  %v343 = vmul.f32 %v187, %v187
  %v344 = vmul.f32 %v192, %v192
  %v345 = vmul.f32 %v195, %v195
  %v346 = vmul.f32 %v200, %v200
  %v347 = vmul.f32 %v203, %v203
  %v348 = vmul.f32 %v208, %v208
  %v349 = vmul.f32 %v211, %v211
  %v350 = vmul.f32 %v216, %v216
  %v351 = vmul.f32 %v219, %v219
  %v352 = vmul.f32 %v224, %v224
  %v353 = vmul.f32 %v227, %v227
  %v354 = vmul.f32 %v232, %v232
  %v355 = vmul.f32 %v235, %v235
  %v356 = vmul.f32 %v240, %v240
  %v357 = vmul.f32 %v243, %v243
  %v358 = vmul.f32 %v248, %v248
  %v359 = vmul.f32 %v251, %v251
  %v360 = vmul.f32 %v256, %v256
  %v361 = vmul.f32 %v259, %v259
  %v362 = vmul.f32 %v264, %v264
  %v363 = vmul.f32 %v267, %v267
  %v364 = vmul.f32 %v272, %v272
  %v365 = vmul.f32 %v275, %v275
  %v366 = vmul.f32 %v280, %v280
  %v367 = vmul.f32 %v283, %v283
  %v368 = vmul.f32 %v288, %v288
  %v369 = vmul.f32 %v291, %v291
  %v370 = vmul.f32 %v296, %v296
  %v371 = vmul.f32 %v299, %v299
  %v372 = vadd.f32 %v340, %v341
  %v373 = vadd.f32 %v372, %v342
  %v374 = vadd.f32 %v373, %v343
  %v375 = vadd.f32 %v374, %v344
  %v376 = vadd.f32 %v375, %v345
  %v377 = vadd.f32 %v376, %v346
  %v378 = vadd.f32 %v377, %v347
  %v379 = vadd.f32 %v378, %v348
  %v380 = vadd.f32 %v379, %v349
  %v381 = vadd.f32 %v380, %v350
  %v382 = vadd.f32 %v381, %v351
  %v383 = vadd.f32 %v382, %v352
  %v384 = vadd.f32 %v383, %v353
  %v385 = vadd.f32 %v384, %v354
  %v386 = vadd.f32 %v385, %v355
  %v387 = vadd.f32 %v386, %v356
  %v388 = vadd.f32 %v387, %v357
  %v389 = vadd.f32 %v388, %v358
  %v390 = vadd.f32 %v389, %v359
  %v391 = vadd.f32 %v390, %v360
  %v392 = vadd.f32 %v391, %v361
  %v393 = vadd.f32 %v392, %v362
  %v394 = vadd.f32 %v393, %v363
  %v395 = vadd.f32 %v394, %v364
  %v396 = vadd.f32 %v395, %v365
  %v397 = vadd.f32 %v396, %v366
  %v398 = vadd.f32 %v397, %v367
  %v399 = vadd.f32 %v398, %v368
  %v400 = vadd.f32 %v399, %v369
  %v401 = vadd.f32 %v400, %v370
  %v402 = vadd.f32 %v401, %v371
  %v403 = vrot.slane %v402, 4
  %v404 = vadd.f32 %v402, %v403
  %v405 = vrot.slane %v404, 2
  %v406 = vadd.f32 %v404, %v405
  %v407 = vrot.slane %v406, 1
  %v408 = vadd.f32 %v406, %v407
  %v409 = vmul.f32 %v339, 0.00390625
  %v410 = vmul.f32 %v408, 0.00390625
  %v411 = vmul.f32 %v409, %v409
  %v412 = vsub.f32 %v410, %v411
  %v413 = vmax.f32 %v412, 0.0
  %v414 = vadd.f32 %v413, 1e-05
  %v415 = vrsqrt.pop %v414
  %v416 = vmul.f32 %v302, %v415
  %v417 = vmul.f32 %v409, %v416
  %v419 = vrot.slane %v417, 7
  %v421 = vsub.f32 %v302, %v419
  %v422 = vlaneseq
  %v423 = vshrl.u32 %v422, 7
  %v424 = vsub.s32 1, %v423
  %v425 = vrot.slane %v416, %v424
  %v426 = vmul.f32 %v176, %v425
  %v427 = vmul.f32 %v179, %v425
  %v428 = vmul.f32 %v184, %v425
  %v429 = vmul.f32 %v187, %v425
  %v430 = vmul.f32 %v192, %v425
  %v431 = vmul.f32 %v195, %v425
  %v432 = vmul.f32 %v200, %v425
  %v433 = vmul.f32 %v203, %v425
  %v434 = vmul.f32 %v208, %v425
  %v435 = vmul.f32 %v211, %v425
  %v436 = vmul.f32 %v216, %v425
  %v437 = vmul.f32 %v219, %v425
  %v438 = vmul.f32 %v224, %v425
  %v439 = vmul.f32 %v227, %v425
  %v440 = vmul.f32 %v232, %v425
  %v441 = vmul.f32 %v235, %v425
  %v442 = vmul.f32 %v240, %v425
  %v443 = vmul.f32 %v243, %v425
  %v444 = vmul.f32 %v248, %v425
  %v445 = vmul.f32 %v251, %v425
  %v446 = vmul.f32 %v256, %v425
  %v447 = vmul.f32 %v259, %v425
  %v448 = vmul.f32 %v264, %v425
  %v449 = vmul.f32 %v267, %v425
  %v450 = vmul.f32 %v272, %v425
  %v451 = vmul.f32 %v275, %v425
  %v452 = vmul.f32 %v280, %v425
  %v453 = vmul.f32 %v283, %v425
  %v454 = vmul.f32 %v288, %v425
  %v455 = vmul.f32 %v291, %v425
  %v456 = vmul.f32 %v296, %v425
  %v457 = vmul.f32 %v299, %v425
  %v458 = vlaneseq
  %v459 = vshrl.u32 %v458, 7
  %v460 = vsub.s32 2, %v459
  %v461 = vrot.slane %v421, %v460
  %v462 = vadd.f32 %v426, %v461
  %v463 = vadd.f32 %v427, %v461
  %v464 = vadd.f32 %v428, %v461
  %v465 = vadd.f32 %v429, %v461
  %v466 = vadd.f32 %v430, %v461
  %v467 = vadd.f32 %v431, %v461
  %v468 = vadd.f32 %v432, %v461
  %v469 = vadd.f32 %v433, %v461
  %v470 = vadd.f32 %v434, %v461
  %v471 = vadd.f32 %v435, %v461
  %v472 = vadd.f32 %v436, %v461
  %v473 = vadd.f32 %v437, %v461
  %v474 = vadd.f32 %v438, %v461
  %v475 = vadd.f32 %v439, %v461
  %v476 = vadd.f32 %v440, %v461
  %v477 = vadd.f32 %v441, %v461
  %v478 = vadd.f32 %v442, %v461
  %v479 = vadd.f32 %v443, %v461
  %v480 = vadd.f32 %v444, %v461
  %v481 = vadd.f32 %v445, %v461
  %v482 = vadd.f32 %v446, %v461
  %v483 = vadd.f32 %v447, %v461
  %v484 = vadd.f32 %v448, %v461
  %v485 = vadd.f32 %v449, %v461
  %v486 = vadd.f32 %v450, %v461
  %v487 = vadd.f32 %v451, %v461
  %v488 = vadd.f32 %v452, %v461
  %v489 = vadd.f32 %v453, %v461
  %v490 = vadd.f32 %v454, %v461
  %v491 = vadd.f32 %v455, %v461
  %v492 = vadd.f32 %v456, %v461
  %v493 = vadd.f32 %v457, %v461
  %v494 = vmax.f32 %v462, 0.0
  %v495 = vmax.f32 %v463, 0.0
  %v496 = vmax.f32 %v464, 0.0
  %v497 = vmax.f32 %v465, 0.0
  %v498 = vmax.f32 %v466, 0.0
  %v499 = vmax.f32 %v467, 0.0
  %v500 = vmax.f32 %v468, 0.0
  %v501 = vmax.f32 %v469, 0.0
  %v502 = vmax.f32 %v470, 0.0
  %v503 = vmax.f32 %v471, 0.0
  %v504 = vmax.f32 %v472, 0.0
  %v505 = vmax.f32 %v473, 0.0
  %v506 = vmax.f32 %v474, 0.0
  %v507 = vmax.f32 %v475, 0.0
  %v508 = vmax.f32 %v476, 0.0
  %v509 = vmax.f32 %v477, 0.0
  %v510 = vmax.f32 %v478, 0.0
  %v511 = vmax.f32 %v479, 0.0
  %v512 = vmax.f32 %v480, 0.0
  %v513 = vmax.f32 %v481, 0.0
  %v514 = vmax.f32 %v482, 0.0
  %v515 = vmax.f32 %v483, 0.0
  %v516 = vmax.f32 %v484, 0.0
  %v517 = vmax.f32 %v485, 0.0
  %v518 = vmax.f32 %v486, 0.0
  %v519 = vmax.f32 %v487, 0.0
  %v520 = vmax.f32 %v488, 0.0
  %v521 = vmax.f32 %v489, 0.0
  %v522 = vmax.f32 %v490, 0.0
  %v523 = vmax.f32 %v491, 0.0
  %v524 = vmax.f32 %v492, 0.0
  %v525 = vmax.f32 %v493, 0.0
  %s526 = sshll.u32 %s57, 4
  %527 = dma.done %s62, %s526
  %s528 = scalar_lea.hbm %s1, 2048
  // Predicated region
  $region18: #{autoencoder_forward.1} parent=0 // pred_check
    _
  $region19: #{autoencoder_forward.1} parent=0 // pred_check_branch
    %530 = sbr.rel target = $region21
  $region20: #{autoencoder_forward.1} parent=0 // pred_region
    %531 = sst [smem:[#allocation6]] [#allocation11]
    %532 = sst [smem:[#allocation7]] [#allocation10]
  $region21: #{autoencoder_forward.1} parent=0 // pred_fallthru
    _
  %534 = shalt.err (0)
  %s536 = sshll.u32 [#allocation2], 4
  %s537 = int_to_ptr.vmem [resolvable:$true] %s536
  %539 = dma.hbm_to_vmem [thread:$0]  %s528, 1024, %s537, [#allocation3]
  %v540 = vld [vmem:[%s61] sm:$0xff]
  %v541 = vld [vmem:[%s61 + $0x8] sm:$0xff]
  %v542 = vld [vmem:[%s61 + $0x10] sm:$0xff]
  %v543 = vld [vmem:[%s61 + $0x18] sm:$0xff]
  %v544 = vld [vmem:[%s61 + $0x20] sm:$0xff]
  %v545 = vld [vmem:[%s61 + $0x28] sm:$0xff]
  %v546 = vld [vmem:[%s61 + $0x30] sm:$0xff]
  %v547 = vld [vmem:[%s61 + $0x38] sm:$0xff]
  %v548 = vpack.c.bf16 %v495, %v494
  %v549 = vpack.c.bf16 %v497, %v496
  %v550 = vpack.c.bf16 %v499, %v498
  %v551 = vpack.c.bf16 %v501, %v500
  %v552 = vpack.c.bf16 %v503, %v502
  %v553 = vpack.c.bf16 %v505, %v504
  %v554 = vpack.c.bf16 %v507, %v506
  %v555 = vpack.c.bf16 %v509, %v508
  %v556 = vpack.c.bf16 %v511, %v510
  %v557 = vpack.c.bf16 %v513, %v512
  %v558 = vpack.c.bf16 %v515, %v514
  %v559 = vpack.c.bf16 %v517, %v516
  %v560 = vpack.c.bf16 %v519, %v518
  %v561 = vpack.c.bf16 %v521, %v520
  %v562 = vpack.c.bf16 %v523, %v522
  %v563 = vpack.c.bf16 %v525, %v524
  %564 = vmatprep.subr.bf16.mxu0 0
  %565 = vmatpush1.bf16.msra.mxu0 %v540
  %566 = vmatprep.subr.bf16.mxu0 0
  %567 = vmatpush1.bf16.msra.mxu0 %v541
  %568 = vmatprep.subr.bf16.mxu0 0
  %569 = vmatpush1.bf16.msra.mxu0 %v542
  %570 = vmatprep.subr.bf16.mxu0 0
  %571 = vmatpush1.bf16.msra.mxu0 %v543
  %572 = vmatprep.subr.bf16.mxu0 0
  %573 = vmatpush1.bf16.msra.mxu0 %v544
  %574 = vmatprep.subr.bf16.mxu0 0
  %575 = vmatpush1.bf16.msra.mxu0 %v545
  %576 = vmatprep.subr.bf16.mxu0 0
  %577 = vmatpush1.bf16.msra.mxu0 %v546
  %578 = vmatprep.subr.bf16.mxu0 0
  %579 = vmatpush1.bf16.msra.mxu0 %v547
  %580 = vmatprep.subr.bf16.mxu0 0
  %581 = vmatpush1.bf16.msra.mxu0 0
  %582 = vmatprep.subr.bf16.mxu0 0
  %583 = vmatpush1.bf16.msra.mxu0 0
  %584 = vmatprep.subr.bf16.mxu0 0
  %585 = vmatpush1.bf16.msra.mxu0 0
  %586 = vmatprep.subr.bf16.mxu0 0
  %587 = vmatpush1.bf16.msra.mxu0 0
  %588 = vmatprep.subr.bf16.mxu0 0
  %589 = vmatpush1.bf16.msra.mxu0 0
  %590 = vmatprep.subr.bf16.mxu0 0
  %591 = vmatpush1.bf16.msra.mxu0 0
  %592 = vmatprep.subr.bf16.mxu0 0
  %593 = vmatpush1.bf16.msra.mxu0 0
  %594 = vmatprep.subr.bf16.mxu0 0
  %595 = vmatpush1.bf16.msra.mxu0 0
  %596 = vmatprep.mubr.bf16.mxu0 0
  %597 = vmatmul.mubr.bf16.gmra.mrb[0].mxu0 %v548
  %v598 = vpop.f32.mrb[0].mxu0
  %v599 = vadd.f32 0.0, %v598
  %v600 = vpop.f32.mrb[0].mxu0
  %v601 = vpop.f32.mrb[0].mxu0
  %v602 = vadd.f32 0.0, %v601
  %v603 = vpop.f32.mrb[0].mxu0
  %604 = vmatprep.mubr.bf16.mxu0 0
  %605 = vmatmul.mubr.bf16.gmra.mrb[0].mxu0 %v549
  %v606 = vpop.f32.mrb[0].mxu0
  %v607 = vadd.f32 0.0, %v606
  %v608 = vpop.f32.mrb[0].mxu0
  %v609 = vpop.f32.mrb[0].mxu0
  %v610 = vadd.f32 0.0, %v609
  %v611 = vpop.f32.mrb[0].mxu0
  %612 = vmatprep.mubr.bf16.mxu0 0
  %613 = vmatmul.mubr.bf16.gmra.mrb[0].mxu0 %v550
  %v614 = vpop.f32.mrb[0].mxu0
  %v615 = vadd.f32 0.0, %v614
  %v616 = vpop.f32.mrb[0].mxu0
  %v617 = vpop.f32.mrb[0].mxu0
  %v618 = vadd.f32 0.0, %v617
  %v619 = vpop.f32.mrb[0].mxu0
  %620 = vmatprep.mubr.bf16.mxu0 0
  %621 = vmatmul.mubr.bf16.gmra.mrb[0].mxu0 %v551
  %v622 = vpop.f32.mrb[0].mxu0
  %v623 = vadd.f32 0.0, %v622
  %v624 = vpop.f32.mrb[0].mxu0
  %v625 = vpop.f32.mrb[0].mxu0
  %v626 = vadd.f32 0.0, %v625
  %v627 = vpop.f32.mrb[0].mxu0
  %628 = vmatprep.mubr.bf16.mxu0 0
  %629 = vmatmul.mubr.bf16.gmra.mrb[0].mxu0 %v552
  %v630 = vpop.f32.mrb[0].mxu0
  %v631 = vadd.f32 0.0, %v630
  %v632 = vpop.f32.mrb[0].mxu0
  %v633 = vpop.f32.mrb[0].mxu0
  %v634 = vadd.f32 0.0, %v633
  %v635 = vpop.f32.mrb[0].mxu0
  %636 = vmatprep.mubr.bf16.mxu0 0
  %637 = vmatmul.mubr.bf16.gmra.mrb[0].mxu0 %v553
  %v638 = vpop.f32.mrb[0].mxu0
  %v639 = vadd.f32 0.0, %v638
  %v640 = vpop.f32.mrb[0].mxu0
  %v641 = vpop.f32.mrb[0].mxu0
  %v642 = vadd.f32 0.0, %v641
  %v643 = vpop.f32.mrb[0].mxu0
  %644 = vmatprep.mubr.bf16.mxu0 0
  %645 = vmatmul.mubr.bf16.gmra.mrb[0].mxu0 %v554
  %v646 = vpop.f32.mrb[0].mxu0
  %v647 = vadd.f32 0.0, %v646
  %v648 = vpop.f32.mrb[0].mxu0
  %v649 = vpop.f32.mrb[0].mxu0
  %v650 = vadd.f32 0.0, %v649
  %v651 = vpop.f32.mrb[0].mxu0
  %652 = vmatprep.mubr.bf16.mxu0 0
  %653 = vmatmul.mubr.bf16.gmra.mrb[0].mxu0 %v555
  %v654 = vpop.f32.mrb[0].mxu0
  %v655 = vadd.f32 0.0, %v654
  %v656 = vpop.f32.mrb[0].mxu0
  %v657 = vpop.f32.mrb[0].mxu0
  %v658 = vadd.f32 0.0, %v657
  %v659 = vpop.f32.mrb[0].mxu0
  %660 = vmatprep.mubr.bf16.mxu0 0
  %661 = vmatmul.mubr.bf16.gmra.mrb[0].mxu0 %v556
  %v662 = vpop.f32.mrb[0].mxu0
  %v663 = vadd.f32 0.0, %v662
  %v664 = vpop.f32.mrb[0].mxu0
  %v665 = vpop.f32.mrb[0].mxu0
  %v666 = vadd.f32 0.0, %v665
  %v667 = vpop.f32.mrb[0].mxu0
  %668 = vmatprep.mubr.bf16.mxu0 0
  %669 = vmatmul.mubr.bf16.gmra.mrb[0].mxu0 %v557
  %v670 = vpop.f32.mrb[0].mxu0
  %v671 = vadd.f32 0.0, %v670
  %v672 = vpop.f32.mrb[0].mxu0
  %v673 = vpop.f32.mrb[0].mxu0
  %v674 = vadd.f32 0.0, %v673
  %v675 = vpop.f32.mrb[0].mxu0
  %676 = vmatprep.mubr.bf16.mxu0 0
  %677 = vmatmul.mubr.bf16.gmra.mrb[0].mxu0 %v558
  %v678 = vpop.f32.mrb[0].mxu0
  %v679 = vadd.f32 0.0, %v678
  %v680 = vpop.f32.mrb[0].mxu0
  %v681 = vpop.f32.mrb[0].mxu0
  %v682 = vadd.f32 0.0, %v681
  %v683 = vpop.f32.mrb[0].mxu0
  %684 = vmatprep.mubr.bf16.mxu0 0
  %685 = vmatmul.mubr.bf16.gmra.mrb[0].mxu0 %v559
  %v686 = vpop.f32.mrb[0].mxu0
  %v687 = vadd.f32 0.0, %v686
  %v688 = vpop.f32.mrb[0].mxu0
  %v689 = vpop.f32.mrb[0].mxu0
  %v690 = vadd.f32 0.0, %v689
  %v691 = vpop.f32.mrb[0].mxu0
  %692 = vmatprep.mubr.bf16.mxu0 0
  %693 = vmatmul.mubr.bf16.gmra.mrb[0].mxu0 %v560
  %v694 = vpop.f32.mrb[0].mxu0
  %v695 = vadd.f32 0.0, %v694
  %v696 = vpop.f32.mrb[0].mxu0
  %v697 = vpop.f32.mrb[0].mxu0
  %v698 = vadd.f32 0.0, %v697
  %v699 = vpop.f32.mrb[0].mxu0
  %700 = vmatprep.mubr.bf16.mxu0 0
  %701 = vmatmul.mubr.bf16.gmra.mrb[0].mxu0 %v561
  %v702 = vpop.f32.mrb[0].mxu0
  %v703 = vadd.f32 0.0, %v702
  %v704 = vpop.f32.mrb[0].mxu0
  %v705 = vpop.f32.mrb[0].mxu0
  %v706 = vadd.f32 0.0, %v705
  %v707 = vpop.f32.mrb[0].mxu0
  %708 = vmatprep.mubr.bf16.mxu0 0
  %709 = vmatmul.mubr.bf16.gmra.mrb[0].mxu0 %v562
  %v710 = vpop.f32.mrb[0].mxu0
  %v711 = vadd.f32 0.0, %v710
  %v712 = vpop.f32.mrb[0].mxu0
  %v713 = vpop.f32.mrb[0].mxu0
  %v714 = vadd.f32 0.0, %v713
  %v715 = vpop.f32.mrb[0].mxu0
  %716 = vmatprep.mubr.bf16.mxu0 0
  %717 = vmatmul.mubr.bf16.gmra.mrb[0].mxu0 %v563
  %v718 = vpop.f32.mrb[0].mxu0
  %v719 = vadd.f32 0.0, %v718
  %v720 = vpop.f32.mrb[0].mxu0
  %v721 = vpop.f32.mrb[0].mxu0
  %v722 = vadd.f32 0.0, %v721
  %v723 = vpop.f32.mrb[0].mxu0
  %724 = vdwg.mxu0
  %s725 = scalar_lea.vmem %s2, 8
  %v726 = vld [vmem:[%s725] sm:$0xff]
  %v727 = vadd.f32 %v599, %v602
  %v728 = vadd.f32 %v727, %v607
  %v729 = vadd.f32 %v728, %v610
  %v730 = vadd.f32 %v729, %v615
  %v731 = vadd.f32 %v730, %v618
  %v732 = vadd.f32 %v731, %v623
  %v733 = vadd.f32 %v732, %v626
  %v734 = vadd.f32 %v733, %v631
  %v735 = vadd.f32 %v734, %v634
  %v736 = vadd.f32 %v735, %v639
  %v737 = vadd.f32 %v736, %v642
  %v738 = vadd.f32 %v737, %v647
  %v739 = vadd.f32 %v738, %v650
  %v740 = vadd.f32 %v739, %v655
  %v741 = vadd.f32 %v740, %v658
  %v742 = vadd.f32 %v741, %v663
  %v743 = vadd.f32 %v742, %v666
  %v744 = vadd.f32 %v743, %v671
  %v745 = vadd.f32 %v744, %v674
  %v746 = vadd.f32 %v745, %v679
  %v747 = vadd.f32 %v746, %v682
  %v748 = vadd.f32 %v747, %v687
  %v749 = vadd.f32 %v748, %v690
  %v750 = vadd.f32 %v749, %v695
  %v751 = vadd.f32 %v750, %v698
  %v752 = vadd.f32 %v751, %v703
  %v753 = vadd.f32 %v752, %v706
  %v754 = vadd.f32 %v753, %v711
  %v755 = vadd.f32 %v754, %v714
  %v756 = vadd.f32 %v755, %v719
  %v757 = vadd.f32 %v756, %v722
  %v758 = vrot.slane %v757, 4
  %v759 = vadd.f32 %v757, %v758
  %v760 = vrot.slane %v759, 2
  %v761 = vadd.f32 %v759, %v760
  %v762 = vrot.slane %v761, 1
  %v763 = vadd.f32 %v761, %v762
  %v764 = vmul.f32 %v599, %v599
  %v765 = vmul.f32 %v602, %v602
  %v766 = vmul.f32 %v607, %v607
  %v767 = vmul.f32 %v610, %v610
  %v768 = vmul.f32 %v615, %v615
  %v769 = vmul.f32 %v618, %v618
  %v770 = vmul.f32 %v623, %v623
  %v771 = vmul.f32 %v626, %v626
  %v772 = vmul.f32 %v631, %v631
  %v773 = vmul.f32 %v634, %v634
  %v774 = vmul.f32 %v639, %v639
  %v775 = vmul.f32 %v642, %v642
  %v776 = vmul.f32 %v647, %v647
  %v777 = vmul.f32 %v650, %v650
  %v778 = vmul.f32 %v655, %v655
  %v779 = vmul.f32 %v658, %v658
  %v780 = vmul.f32 %v663, %v663
  %v781 = vmul.f32 %v666, %v666
  %v782 = vmul.f32 %v671, %v671
  %v783 = vmul.f32 %v674, %v674
  %v784 = vmul.f32 %v679, %v679
  %v785 = vmul.f32 %v682, %v682
  %v786 = vmul.f32 %v687, %v687
  %v787 = vmul.f32 %v690, %v690
  %v788 = vmul.f32 %v695, %v695
  %v789 = vmul.f32 %v698, %v698
  %v790 = vmul.f32 %v703, %v703
  %v791 = vmul.f32 %v706, %v706
  %v792 = vmul.f32 %v711, %v711
  %v793 = vmul.f32 %v714, %v714
  %v794 = vmul.f32 %v719, %v719
  %v795 = vmul.f32 %v722, %v722
  %v796 = vadd.f32 %v764, %v765
  %v797 = vadd.f32 %v796, %v766
  %v798 = vadd.f32 %v797, %v767
  %v799 = vadd.f32 %v798, %v768
  %v800 = vadd.f32 %v799, %v769
  %v801 = vadd.f32 %v800, %v770
  %v802 = vadd.f32 %v801, %v771
  %v803 = vadd.f32 %v802, %v772
  %v804 = vadd.f32 %v803, %v773
  %v805 = vadd.f32 %v804, %v774
  %v806 = vadd.f32 %v805, %v775
  %v807 = vadd.f32 %v806, %v776
  %v808 = vadd.f32 %v807, %v777
  %v809 = vadd.f32 %v808, %v778
  %v810 = vadd.f32 %v809, %v779
  %v811 = vadd.f32 %v810, %v780
  %v812 = vadd.f32 %v811, %v781
  %v813 = vadd.f32 %v812, %v782
  %v814 = vadd.f32 %v813, %v783
  %v815 = vadd.f32 %v814, %v784
  %v816 = vadd.f32 %v815, %v785
  %v817 = vadd.f32 %v816, %v786
  %v818 = vadd.f32 %v817, %v787
  %v819 = vadd.f32 %v818, %v788
  %v820 = vadd.f32 %v819, %v789
  %v821 = vadd.f32 %v820, %v790
  %v822 = vadd.f32 %v821, %v791
  %v823 = vadd.f32 %v822, %v792
  %v824 = vadd.f32 %v823, %v793
  %v825 = vadd.f32 %v824, %v794
  %v826 = vadd.f32 %v825, %v795
  %v827 = vrot.slane %v826, 4
  %v828 = vadd.f32 %v826, %v827
  %v829 = vrot.slane %v828, 2
  %v830 = vadd.f32 %v828, %v829
  %v831 = vrot.slane %v830, 1
  %v832 = vadd.f32 %v830, %v831
  %v833 = vmul.f32 %v763, 0.00390625
  %v834 = vmul.f32 %v832, 0.00390625
  %v835 = vmul.f32 %v833, %v833
  %v836 = vsub.f32 %v834, %v835
  %v837 = vmax.f32 %v836, 0.0
  %v838 = vadd.f32 %v837, 1e-05
  %v839 = vrsqrt.pop %v838
  %v840 = vmul.f32 %v726, %v839
  %v841 = vmul.f32 %v833, %v840
  %v843 = vrot.slane %v841, 7
  %v845 = vsub.f32 %v726, %v843
  %v846 = vlaneseq
  %v847 = vshrl.u32 %v846, 7
  %v848 = vsub.s32 1, %v847
  %v849 = vrot.slane %v840, %v848
  %v850 = vmul.f32 %v599, %v849
  %v851 = vmul.f32 %v602, %v849
  %v852 = vmul.f32 %v607, %v849
  %v853 = vmul.f32 %v610, %v849
  %v854 = vmul.f32 %v615, %v849
  %v855 = vmul.f32 %v618, %v849
  %v856 = vmul.f32 %v623, %v849
  %v857 = vmul.f32 %v626, %v849
  %v858 = vmul.f32 %v631, %v849
  %v859 = vmul.f32 %v634, %v849
  %v860 = vmul.f32 %v639, %v849
  %v861 = vmul.f32 %v642, %v849
  %v862 = vmul.f32 %v647, %v849
  %v863 = vmul.f32 %v650, %v849
  %v864 = vmul.f32 %v655, %v849
  %v865 = vmul.f32 %v658, %v849
  %v866 = vmul.f32 %v663, %v849
  %v867 = vmul.f32 %v666, %v849
  %v868 = vmul.f32 %v671, %v849
  %v869 = vmul.f32 %v674, %v849
  %v870 = vmul.f32 %v679, %v849
  %v871 = vmul.f32 %v682, %v849
  %v872 = vmul.f32 %v687, %v849
  %v873 = vmul.f32 %v690, %v849
  %v874 = vmul.f32 %v695, %v849
  %v875 = vmul.f32 %v698, %v849
  %v876 = vmul.f32 %v703, %v849
  %v877 = vmul.f32 %v706, %v849
  %v878 = vmul.f32 %v711, %v849
  %v879 = vmul.f32 %v714, %v849
  %v880 = vmul.f32 %v719, %v849
  %v881 = vmul.f32 %v722, %v849
  %v882 = vlaneseq
  %v883 = vshrl.u32 %v882, 7
  %v884 = vsub.s32 2, %v883
  %v885 = vrot.slane %v845, %v884
  %v886 = vadd.f32 %v850, %v885
  %v887 = vadd.f32 %v851, %v885
  %v888 = vadd.f32 %v852, %v885
  %v889 = vadd.f32 %v853, %v885
  %v890 = vadd.f32 %v854, %v885
  %v891 = vadd.f32 %v855, %v885
  %v892 = vadd.f32 %v856, %v885
  %v893 = vadd.f32 %v857, %v885
  %v894 = vadd.f32 %v858, %v885
  %v895 = vadd.f32 %v859, %v885
  %v896 = vadd.f32 %v860, %v885
  %v897 = vadd.f32 %v861, %v885
  %v898 = vadd.f32 %v862, %v885
  %v899 = vadd.f32 %v863, %v885
  %v900 = vadd.f32 %v864, %v885
  %v901 = vadd.f32 %v865, %v885
  %v902 = vadd.f32 %v866, %v885
  %v903 = vadd.f32 %v867, %v885
  %v904 = vadd.f32 %v868, %v885
  %v905 = vadd.f32 %v869, %v885
  %v906 = vadd.f32 %v870, %v885
  %v907 = vadd.f32 %v871, %v885
  %v908 = vadd.f32 %v872, %v885
  %v909 = vadd.f32 %v873, %v885
  %v910 = vadd.f32 %v874, %v885
  %v911 = vadd.f32 %v875, %v885
  %v912 = vadd.f32 %v876, %v885
  %v913 = vadd.f32 %v877, %v885
  %v914 = vadd.f32 %v878, %v885
  %v915 = vadd.f32 %v879, %v885
  %v916 = vadd.f32 %v880, %v885
  %v917 = vadd.f32 %v881, %v885
  %v918 = vmax.f32 %v886, 0.0
  %v919 = vmax.f32 %v887, 0.0
  %v920 = vmax.f32 %v888, 0.0
  %v921 = vmax.f32 %v889, 0.0
  %v922 = vmax.f32 %v890, 0.0
  %v923 = vmax.f32 %v891, 0.0
  %v924 = vmax.f32 %v892, 0.0
  %v925 = vmax.f32 %v893, 0.0
  %v926 = vmax.f32 %v894, 0.0
  %v927 = vmax.f32 %v895, 0.0
  %v928 = vmax.f32 %v896, 0.0
  %v929 = vmax.f32 %v897, 0.0
  %v930 = vmax.f32 %v898, 0.0
  %v931 = vmax.f32 %v899, 0.0
  %v932 = vmax.f32 %v900, 0.0
  %v933 = vmax.f32 %v901, 0.0
  %v934 = vmax.f32 %v902, 0.0
  %v935 = vmax.f32 %v903, 0.0
  %v936 = vmax.f32 %v904, 0.0
  %v937 = vmax.f32 %v905, 0.0
  %v938 = vmax.f32 %v906, 0.0
  %v939 = vmax.f32 %v907, 0.0
  %v940 = vmax.f32 %v908, 0.0
  %v941 = vmax.f32 %v909, 0.0
  %v942 = vmax.f32 %v910, 0.0
  %v943 = vmax.f32 %v911, 0.0
  %v944 = vmax.f32 %v912, 0.0
  %v945 = vmax.f32 %v913, 0.0
  %v946 = vmax.f32 %v914, 0.0
  %v947 = vmax.f32 %v915, 0.0
  %v948 = vmax.f32 %v916, 0.0
  %v949 = vmax.f32 %v917, 0.0
  %s950 = sshll.u32 %s57, 4
  %951 = dma.done [#allocation3], %s950
  %s952 = scalar_lea.hbm %s1, 3072
  // Predicated region
  $region22: #{autoencoder_forward.1} parent=0 // pred_check
    _
  $region23: #{autoencoder_forward.1} parent=0 // pred_check_branch
    %954 = sbr.rel target = $region25
  $region24: #{autoencoder_forward.1} parent=0 // pred_region
    %955 = sst [smem:[#allocation6]] [#allocation13]
    %956 = sst [smem:[#allocation7]] [#allocation12]
  $region25: #{autoencoder_forward.1} parent=0 // pred_fallthru
    _
  %958 = shalt.err (0)
  %s960 = sshll.u32 %s61, 4
  %s961 = int_to_ptr.vmem [resolvable:$true] %s960
  %963 = dma.hbm_to_vmem [thread:$0]  %s952, 1024, %s961, %s62
  %v964 = vld [vmem:[#allocation2] sm:$0xff]
  %v965 = vld [vmem:[#allocation2 + $0x8] sm:$0xff]
  %v966 = vld [vmem:[#allocation2 + $0x10] sm:$0xff]
  %v967 = vld [vmem:[#allocation2 + $0x18] sm:$0xff]
  %v968 = vld [vmem:[#allocation2 + $0x20] sm:$0xff]
  %v969 = vld [vmem:[#allocation2 + $0x28] sm:$0xff]
  %v970 = vld [vmem:[#allocation2 + $0x30] sm:$0xff]
  %v971 = vld [vmem:[#allocation2 + $0x38] sm:$0xff]
  %v972 = vpack.c.bf16 %v919, %v918
  %v973 = vpack.c.bf16 %v921, %v920
  %v974 = vpack.c.bf16 %v923, %v922
  %v975 = vpack.c.bf16 %v925, %v924
  %v976 = vpack.c.bf16 %v927, %v926
  %v977 = vpack.c.bf16 %v929, %v928
  %v978 = vpack.c.bf16 %v931, %v930
  %v979 = vpack.c.bf16 %v933, %v932
  %v980 = vpack.c.bf16 %v935, %v934
  %v981 = vpack.c.bf16 %v937, %v936
  %v982 = vpack.c.bf16 %v939, %v938
  %v983 = vpack.c.bf16 %v941, %v940
  %v984 = vpack.c.bf16 %v943, %v942
  %v985 = vpack.c.bf16 %v945, %v944
  %v986 = vpack.c.bf16 %v947, %v946
  %v987 = vpack.c.bf16 %v949, %v948
  %988 = vmatprep.subr.bf16.mxu0 0
  %989 = vmatpush1.bf16.msra.mxu0 %v964
  %990 = vmatprep.subr.bf16.mxu0 0
  %991 = vmatpush1.bf16.msra.mxu0 %v965
  %992 = vmatprep.subr.bf16.mxu0 0
  %993 = vmatpush1.bf16.msra.mxu0 %v966
  %994 = vmatprep.subr.bf16.mxu0 0
  %995 = vmatpush1.bf16.msra.mxu0 %v967
  %996 = vmatprep.subr.bf16.mxu0 0
  %997 = vmatpush1.bf16.msra.mxu0 %v968
  %998 = vmatprep.subr.bf16.mxu0 0
  %999 = vmatpush1.bf16.msra.mxu0 %v969
  %1000 = vmatprep.subr.bf16.mxu0 0
  %1001 = vmatpush1.bf16.msra.mxu0 %v970
  %1002 = vmatprep.subr.bf16.mxu0 0
  %1003 = vmatpush1.bf16.msra.mxu0 %v971
  %1004 = vmatprep.subr.bf16.mxu0 0
  %1005 = vmatpush1.bf16.msra.mxu0 0
  %1006 = vmatprep.subr.bf16.mxu0 0
  %1007 = vmatpush1.bf16.msra.mxu0 0
  %1008 = vmatprep.subr.bf16.mxu0 0
  %1009 = vmatpush1.bf16.msra.mxu0 0
  %1010 = vmatprep.subr.bf16.mxu0 0
  %1011 = vmatpush1.bf16.msra.mxu0 0
  %1012 = vmatprep.subr.bf16.mxu0 0
  %1013 = vmatpush1.bf16.msra.mxu0 0
  %1014 = vmatprep.subr.bf16.mxu0 0
  %1015 = vmatpush1.bf16.msra.mxu0 0
  %1016 = vmatprep.subr.bf16.mxu0 0
  %1017 = vmatpush1.bf16.msra.mxu0 0
  %1018 = vmatprep.subr.bf16.mxu0 0
  %1019 = vmatpush1.bf16.msra.mxu0 0
  %1020 = vmatprep.mubr.bf16.mxu0 0
  %1021 = vmatmul.mubr.bf16.gmra.mrb[0].mxu0 %v972
  %v1022 = vpop.f32.mrb[0].mxu0
  %v1023 = vadd.f32 0.0, %v1022
  %v1024 = vpop.f32.mrb[0].mxu0
  %v1025 = vpop.f32.mrb[0].mxu0
  %v1026 = vadd.f32 0.0, %v1025
  %v1027 = vpop.f32.mrb[0].mxu0
  %1028 = vmatprep.mubr.bf16.mxu0 0
  %1029 = vmatmul.mubr.bf16.gmra.mrb[0].mxu0 %v973
  %v1030 = vpop.f32.mrb[0].mxu0
  %v1031 = vadd.f32 0.0, %v1030
  %v1032 = vpop.f32.mrb[0].mxu0
  %v1033 = vpop.f32.mrb[0].mxu0
  %v1034 = vadd.f32 0.0, %v1033
  %v1035 = vpop.f32.mrb[0].mxu0
  %1036 = vmatprep.mubr.bf16.mxu0 0
  %1037 = vmatmul.mubr.bf16.gmra.mrb[0].mxu0 %v974
  %v1038 = vpop.f32.mrb[0].mxu0
  %v1039 = vadd.f32 0.0, %v1038
  %v1040 = vpop.f32.mrb[0].mxu0
  %v1041 = vpop.f32.mrb[0].mxu0
  %v1042 = vadd.f32 0.0, %v1041
  %v1043 = vpop.f32.mrb[0].mxu0
  %1044 = vmatprep.mubr.bf16.mxu0 0
  %1045 = vmatmul.mubr.bf16.gmra.mrb[0].mxu0 %v975
  %v1046 = vpop.f32.mrb[0].mxu0
  %v1047 = vadd.f32 0.0, %v1046
  %v1048 = vpop.f32.mrb[0].mxu0
  %v1049 = vpop.f32.mrb[0].mxu0
  %v1050 = vadd.f32 0.0, %v1049
  %v1051 = vpop.f32.mrb[0].mxu0
  %1052 = vmatprep.mubr.bf16.mxu0 0
  %1053 = vmatmul.mubr.bf16.gmra.mrb[0].mxu0 %v976
  %v1054 = vpop.f32.mrb[0].mxu0
  %v1055 = vadd.f32 0.0, %v1054
  %v1056 = vpop.f32.mrb[0].mxu0
  %v1057 = vpop.f32.mrb[0].mxu0
  %v1058 = vadd.f32 0.0, %v1057
  %v1059 = vpop.f32.mrb[0].mxu0
  %1060 = vmatprep.mubr.bf16.mxu0 0
  %1061 = vmatmul.mubr.bf16.gmra.mrb[0].mxu0 %v977
  %v1062 = vpop.f32.mrb[0].mxu0
  %v1063 = vadd.f32 0.0, %v1062
  %v1064 = vpop.f32.mrb[0].mxu0
  %v1065 = vpop.f32.mrb[0].mxu0
  %v1066 = vadd.f32 0.0, %v1065
  %v1067 = vpop.f32.mrb[0].mxu0
  %1068 = vmatprep.mubr.bf16.mxu0 0
  %1069 = vmatmul.mubr.bf16.gmra.mrb[0].mxu0 %v978
  %v1070 = vpop.f32.mrb[0].mxu0
  %v1071 = vadd.f32 0.0, %v1070
  %v1072 = vpop.f32.mrb[0].mxu0
  %v1073 = vpop.f32.mrb[0].mxu0
  %v1074 = vadd.f32 0.0, %v1073
  %v1075 = vpop.f32.mrb[0].mxu0
  %1076 = vmatprep.mubr.bf16.mxu0 0
  %1077 = vmatmul.mubr.bf16.gmra.mrb[0].mxu0 %v979
  %v1078 = vpop.f32.mrb[0].mxu0
  %v1079 = vadd.f32 0.0, %v1078
  %v1080 = vpop.f32.mrb[0].mxu0
  %v1081 = vpop.f32.mrb[0].mxu0
  %v1082 = vadd.f32 0.0, %v1081
  %v1083 = vpop.f32.mrb[0].mxu0
  %1084 = vmatprep.mubr.bf16.mxu0 0
  %1085 = vmatmul.mubr.bf16.gmra.mrb[0].mxu0 %v980
  %v1086 = vpop.f32.mrb[0].mxu0
  %v1087 = vadd.f32 0.0, %v1086
  %v1088 = vpop.f32.mrb[0].mxu0
  %v1089 = vpop.f32.mrb[0].mxu0
  %v1090 = vadd.f32 0.0, %v1089
  %v1091 = vpop.f32.mrb[0].mxu0
  %1092 = vmatprep.mubr.bf16.mxu0 0
  %1093 = vmatmul.mubr.bf16.gmra.mrb[0].mxu0 %v981
  %v1094 = vpop.f32.mrb[0].mxu0
  %v1095 = vadd.f32 0.0, %v1094
  %v1096 = vpop.f32.mrb[0].mxu0
  %v1097 = vpop.f32.mrb[0].mxu0
  %v1098 = vadd.f32 0.0, %v1097
  %v1099 = vpop.f32.mrb[0].mxu0
  %1100 = vmatprep.mubr.bf16.mxu0 0
  %1101 = vmatmul.mubr.bf16.gmra.mrb[0].mxu0 %v982
  %v1102 = vpop.f32.mrb[0].mxu0
  %v1103 = vadd.f32 0.0, %v1102
  %v1104 = vpop.f32.mrb[0].mxu0
  %v1105 = vpop.f32.mrb[0].mxu0
  %v1106 = vadd.f32 0.0, %v1105
  %v1107 = vpop.f32.mrb[0].mxu0
  %1108 = vmatprep.mubr.bf16.mxu0 0
  %1109 = vmatmul.mubr.bf16.gmra.mrb[0].mxu0 %v983
  %v1110 = vpop.f32.mrb[0].mxu0
  %v1111 = vadd.f32 0.0, %v1110
  %v1112 = vpop.f32.mrb[0].mxu0
  %v1113 = vpop.f32.mrb[0].mxu0
  %v1114 = vadd.f32 0.0, %v1113
  %v1115 = vpop.f32.mrb[0].mxu0
  %1116 = vmatprep.mubr.bf16.mxu0 0
  %1117 = vmatmul.mubr.bf16.gmra.mrb[0].mxu0 %v984
  %v1118 = vpop.f32.mrb[0].mxu0
  %v1119 = vadd.f32 0.0, %v1118
  %v1120 = vpop.f32.mrb[0].mxu0
  %v1121 = vpop.f32.mrb[0].mxu0
  %v1122 = vadd.f32 0.0, %v1121
  %v1123 = vpop.f32.mrb[0].mxu0
  %1124 = vmatprep.mubr.bf16.mxu0 0
  %1125 = vmatmul.mubr.bf16.gmra.mrb[0].mxu0 %v985
  %v1126 = vpop.f32.mrb[0].mxu0
  %v1127 = vadd.f32 0.0, %v1126
  %v1128 = vpop.f32.mrb[0].mxu0
  %v1129 = vpop.f32.mrb[0].mxu0
  %v1130 = vadd.f32 0.0, %v1129
  %v1131 = vpop.f32.mrb[0].mxu0
  %1132 = vmatprep.mubr.bf16.mxu0 0
  %1133 = vmatmul.mubr.bf16.gmra.mrb[0].mxu0 %v986
  %v1134 = vpop.f32.mrb[0].mxu0
  %v1135 = vadd.f32 0.0, %v1134
  %v1136 = vpop.f32.mrb[0].mxu0
  %v1137 = vpop.f32.mrb[0].mxu0
  %v1138 = vadd.f32 0.0, %v1137
  %v1139 = vpop.f32.mrb[0].mxu0
  %1140 = vmatprep.mubr.bf16.mxu0 0
  %1141 = vmatmul.mubr.bf16.gmra.mrb[0].mxu0 %v987
  %v1142 = vpop.f32.mrb[0].mxu0
  %v1143 = vadd.f32 0.0, %v1142
  %v1144 = vpop.f32.mrb[0].mxu0
  %v1145 = vpop.f32.mrb[0].mxu0
  %v1146 = vadd.f32 0.0, %v1145
  %v1147 = vpop.f32.mrb[0].mxu0
  %1148 = vdwg.mxu0
  %s1149 = scalar_lea.vmem %s2, 16
  %v1150 = vld [vmem:[%s1149] sm:$0xff]
  %v1151 = vadd.f32 %v1023, %v1026
  %v1152 = vadd.f32 %v1151, %v1031
  %v1153 = vadd.f32 %v1152, %v1034
  %v1154 = vadd.f32 %v1153, %v1039
  %v1155 = vadd.f32 %v1154, %v1042
  %v1156 = vadd.f32 %v1155, %v1047
  %v1157 = vadd.f32 %v1156, %v1050
  %v1158 = vadd.f32 %v1157, %v1055
  %v1159 = vadd.f32 %v1158, %v1058
  %v1160 = vadd.f32 %v1159, %v1063
  %v1161 = vadd.f32 %v1160, %v1066
  %v1162 = vadd.f32 %v1161, %v1071
  %v1163 = vadd.f32 %v1162, %v1074
  %v1164 = vadd.f32 %v1163, %v1079
  %v1165 = vadd.f32 %v1164, %v1082
  %v1166 = vadd.f32 %v1165, %v1087
  %v1167 = vadd.f32 %v1166, %v1090
  %v1168 = vadd.f32 %v1167, %v1095
  %v1169 = vadd.f32 %v1168, %v1098
  %v1170 = vadd.f32 %v1169, %v1103
  %v1171 = vadd.f32 %v1170, %v1106
  %v1172 = vadd.f32 %v1171, %v1111
  %v1173 = vadd.f32 %v1172, %v1114
  %v1174 = vadd.f32 %v1173, %v1119
  %v1175 = vadd.f32 %v1174, %v1122
  %v1176 = vadd.f32 %v1175, %v1127
  %v1177 = vadd.f32 %v1176, %v1130
  %v1178 = vadd.f32 %v1177, %v1135
  %v1179 = vadd.f32 %v1178, %v1138
  %v1180 = vadd.f32 %v1179, %v1143
  %v1181 = vadd.f32 %v1180, %v1146
  %v1182 = vrot.slane %v1181, 4
  %v1183 = vadd.f32 %v1181, %v1182
  %v1184 = vrot.slane %v1183, 2
  %v1185 = vadd.f32 %v1183, %v1184
  %v1186 = vrot.slane %v1185, 1
  %v1187 = vadd.f32 %v1185, %v1186
  %v1188 = vmul.f32 %v1023, %v1023
  %v1189 = vmul.f32 %v1026, %v1026
  %v1190 = vmul.f32 %v1031, %v1031
  %v1191 = vmul.f32 %v1034, %v1034
  %v1192 = vmul.f32 %v1039, %v1039
  %v1193 = vmul.f32 %v1042, %v1042
  %v1194 = vmul.f32 %v1047, %v1047
  %v1195 = vmul.f32 %v1050, %v1050
  %v1196 = vmul.f32 %v1055, %v1055
  %v1197 = vmul.f32 %v1058, %v1058
  %v1198 = vmul.f32 %v1063, %v1063
  %v1199 = vmul.f32 %v1066, %v1066
  %v1200 = vmul.f32 %v1071, %v1071
  %v1201 = vmul.f32 %v1074, %v1074
  %v1202 = vmul.f32 %v1079, %v1079
  %v1203 = vmul.f32 %v1082, %v1082
  %v1204 = vmul.f32 %v1087, %v1087
  %v1205 = vmul.f32 %v1090, %v1090
  %v1206 = vmul.f32 %v1095, %v1095
  %v1207 = vmul.f32 %v1098, %v1098
  %v1208 = vmul.f32 %v1103, %v1103
  %v1209 = vmul.f32 %v1106, %v1106
  %v1210 = vmul.f32 %v1111, %v1111
  %v1211 = vmul.f32 %v1114, %v1114
  %v1212 = vmul.f32 %v1119, %v1119
  %v1213 = vmul.f32 %v1122, %v1122
  %v1214 = vmul.f32 %v1127, %v1127
  %v1215 = vmul.f32 %v1130, %v1130
  %v1216 = vmul.f32 %v1135, %v1135
  %v1217 = vmul.f32 %v1138, %v1138
  %v1218 = vmul.f32 %v1143, %v1143
  %v1219 = vmul.f32 %v1146, %v1146
  %v1220 = vadd.f32 %v1188, %v1189
  %v1221 = vadd.f32 %v1220, %v1190
  %v1222 = vadd.f32 %v1221, %v1191
  %v1223 = vadd.f32 %v1222, %v1192
  %v1224 = vadd.f32 %v1223, %v1193
  %v1225 = vadd.f32 %v1224, %v1194
  %v1226 = vadd.f32 %v1225, %v1195
  %v1227 = vadd.f32 %v1226, %v1196
  %v1228 = vadd.f32 %v1227, %v1197
  %v1229 = vadd.f32 %v1228, %v1198
  %v1230 = vadd.f32 %v1229, %v1199
  %v1231 = vadd.f32 %v1230, %v1200
  %v1232 = vadd.f32 %v1231, %v1201
  %v1233 = vadd.f32 %v1232, %v1202
  %v1234 = vadd.f32 %v1233, %v1203
  %v1235 = vadd.f32 %v1234, %v1204
  %v1236 = vadd.f32 %v1235, %v1205
  %v1237 = vadd.f32 %v1236, %v1206
  %v1238 = vadd.f32 %v1237, %v1207
  %v1239 = vadd.f32 %v1238, %v1208
  %v1240 = vadd.f32 %v1239, %v1209
  %v1241 = vadd.f32 %v1240, %v1210
  %v1242 = vadd.f32 %v1241, %v1211
  %v1243 = vadd.f32 %v1242, %v1212
  %v1244 = vadd.f32 %v1243, %v1213
  %v1245 = vadd.f32 %v1244, %v1214
  %v1246 = vadd.f32 %v1245, %v1215
  %v1247 = vadd.f32 %v1246, %v1216
  %v1248 = vadd.f32 %v1247, %v1217
  %v1249 = vadd.f32 %v1248, %v1218
  %v1250 = vadd.f32 %v1249, %v1219
  %v1251 = vrot.slane %v1250, 4
  %v1252 = vadd.f32 %v1250, %v1251
  %v1253 = vrot.slane %v1252, 2
  %v1254 = vadd.f32 %v1252, %v1253
  %v1255 = vrot.slane %v1254, 1
  %v1256 = vadd.f32 %v1254, %v1255
  %v1257 = vmul.f32 %v1187, 0.00390625
  %v1258 = vmul.f32 %v1256, 0.00390625
  %v1259 = vmul.f32 %v1257, %v1257
  %v1260 = vsub.f32 %v1258, %v1259
  %v1261 = vmax.f32 %v1260, 0.0
  %v1262 = vadd.f32 %v1261, 1e-05
  %v1263 = vrsqrt.pop %v1262
  %v1264 = vmul.f32 %v1150, %v1263
  %v1265 = vmul.f32 %v1257, %v1264
  %v1267 = vrot.slane %v1265, 7
  %v1269 = vsub.f32 %v1150, %v1267
  %v1270 = vlaneseq
  %v1271 = vshrl.u32 %v1270, 7
  %v1272 = vsub.s32 1, %v1271
  %v1273 = vrot.slane %v1264, %v1272
  %v1274 = vmul.f32 %v1023, %v1273
  %v1275 = vmul.f32 %v1026, %v1273
  %v1276 = vmul.f32 %v1031, %v1273
  %v1277 = vmul.f32 %v1034, %v1273
  %v1278 = vmul.f32 %v1039, %v1273
  %v1279 = vmul.f32 %v1042, %v1273
  %v1280 = vmul.f32 %v1047, %v1273
  %v1281 = vmul.f32 %v1050, %v1273
  %v1282 = vmul.f32 %v1055, %v1273
  %v1283 = vmul.f32 %v1058, %v1273
  %v1284 = vmul.f32 %v1063, %v1273
  %v1285 = vmul.f32 %v1066, %v1273
  %v1286 = vmul.f32 %v1071, %v1273
  %v1287 = vmul.f32 %v1074, %v1273
  %v1288 = vmul.f32 %v1079, %v1273
  %v1289 = vmul.f32 %v1082, %v1273
  %v1290 = vmul.f32 %v1087, %v1273
  %v1291 = vmul.f32 %v1090, %v1273
  %v1292 = vmul.f32 %v1095, %v1273
  %v1293 = vmul.f32 %v1098, %v1273
  %v1294 = vmul.f32 %v1103, %v1273
  %v1295 = vmul.f32 %v1106, %v1273
  %v1296 = vmul.f32 %v1111, %v1273
  %v1297 = vmul.f32 %v1114, %v1273
  %v1298 = vmul.f32 %v1119, %v1273
  %v1299 = vmul.f32 %v1122, %v1273
  %v1300 = vmul.f32 %v1127, %v1273
  %v1301 = vmul.f32 %v1130, %v1273
  %v1302 = vmul.f32 %v1135, %v1273
  %v1303 = vmul.f32 %v1138, %v1273
  %v1304 = vmul.f32 %v1143, %v1273
  %v1305 = vmul.f32 %v1146, %v1273
  %v1306 = vlaneseq
  %v1307 = vshrl.u32 %v1306, 7
  %v1308 = vsub.s32 2, %v1307
  %v1309 = vrot.slane %v1269, %v1308
  %v1310 = vadd.f32 %v1274, %v1309
  %v1311 = vadd.f32 %v1275, %v1309
  %v1312 = vadd.f32 %v1276, %v1309
  %v1313 = vadd.f32 %v1277, %v1309
  %v1314 = vadd.f32 %v1278, %v1309
  %v1315 = vadd.f32 %v1279, %v1309
  %v1316 = vadd.f32 %v1280, %v1309
  %v1317 = vadd.f32 %v1281, %v1309
  %v1318 = vadd.f32 %v1282, %v1309
  %v1319 = vadd.f32 %v1283, %v1309
  %v1320 = vadd.f32 %v1284, %v1309
  %v1321 = vadd.f32 %v1285, %v1309
  %v1322 = vadd.f32 %v1286, %v1309
  %v1323 = vadd.f32 %v1287, %v1309
  %v1324 = vadd.f32 %v1288, %v1309
  %v1325 = vadd.f32 %v1289, %v1309
  %v1326 = vadd.f32 %v1290, %v1309
  %v1327 = vadd.f32 %v1291, %v1309
  %v1328 = vadd.f32 %v1292, %v1309
  %v1329 = vadd.f32 %v1293, %v1309
  %v1330 = vadd.f32 %v1294, %v1309
  %v1331 = vadd.f32 %v1295, %v1309
  %v1332 = vadd.f32 %v1296, %v1309
  %v1333 = vadd.f32 %v1297, %v1309
  %v1334 = vadd.f32 %v1298, %v1309
  %v1335 = vadd.f32 %v1299, %v1309
  %v1336 = vadd.f32 %v1300, %v1309
  %v1337 = vadd.f32 %v1301, %v1309
  %v1338 = vadd.f32 %v1302, %v1309
  %v1339 = vadd.f32 %v1303, %v1309
  %v1340 = vadd.f32 %v1304, %v1309
  %v1341 = vadd.f32 %v1305, %v1309
  %v1342 = vmax.f32 %v1310, 0.0
  %v1343 = vmax.f32 %v1311, 0.0
  %v1344 = vmax.f32 %v1312, 0.0
  %v1345 = vmax.f32 %v1313, 0.0
  %v1346 = vmax.f32 %v1314, 0.0
  %v1347 = vmax.f32 %v1315, 0.0
  %v1348 = vmax.f32 %v1316, 0.0
  %v1349 = vmax.f32 %v1317, 0.0
  %v1350 = vmax.f32 %v1318, 0.0
  %v1351 = vmax.f32 %v1319, 0.0
  %v1352 = vmax.f32 %v1320, 0.0
  %v1353 = vmax.f32 %v1321, 0.0
  %v1354 = vmax.f32 %v1322, 0.0
  %v1355 = vmax.f32 %v1323, 0.0
  %v1356 = vmax.f32 %v1324, 0.0
  %v1357 = vmax.f32 %v1325, 0.0
  %v1358 = vmax.f32 %v1326, 0.0
  %v1359 = vmax.f32 %v1327, 0.0
  %v1360 = vmax.f32 %v1328, 0.0
  %v1361 = vmax.f32 %v1329, 0.0
  %v1362 = vmax.f32 %v1330, 0.0
  %v1363 = vmax.f32 %v1331, 0.0
  %v1364 = vmax.f32 %v1332, 0.0
  %v1365 = vmax.f32 %v1333, 0.0
  %v1366 = vmax.f32 %v1334, 0.0
  %v1367 = vmax.f32 %v1335, 0.0
  %v1368 = vmax.f32 %v1336, 0.0
  %v1369 = vmax.f32 %v1337, 0.0
  %v1370 = vmax.f32 %v1338, 0.0
  %v1371 = vmax.f32 %v1339, 0.0
  %v1372 = vmax.f32 %v1340, 0.0
  %v1373 = vmax.f32 %v1341, 0.0
  %s1374 = sshll.u32 %s57, 4
  %1375 = dma.done %s62, %s1374
  %s1376 = scalar_lea.hbm %s1, 4096
  // Predicated region
  $region26: #{autoencoder_forward.1} parent=0 // pred_check
    _
  $region27: #{autoencoder_forward.1} parent=0 // pred_check_branch
    %1378 = sbr.rel target = $region29
  $region28: #{autoencoder_forward.1} parent=0 // pred_region
    %1379 = sst [smem:[#allocation6]] [#allocation15]
    %1380 = sst [smem:[#allocation7]] [#allocation14]
  $region29: #{autoencoder_forward.1} parent=0 // pred_fallthru
    _
  %1382 = shalt.err (0)
  %s1384 = sshll.u32 [#allocation2], 4
  %s1385 = int_to_ptr.vmem [resolvable:$true] %s1384
  %1387 = dma.hbm_to_vmem [thread:$0]  %s1376, 1024, %s1385, [#allocation3]
  %v1388 = vld [vmem:[%s61] sm:$0xff]
  %v1389 = vld [vmem:[%s61 + $0x8] sm:$0xff]
  %v1390 = vld [vmem:[%s61 + $0x10] sm:$0xff]
  %v1391 = vld [vmem:[%s61 + $0x18] sm:$0xff]
  %v1392 = vld [vmem:[%s61 + $0x20] sm:$0xff]
  %v1393 = vld [vmem:[%s61 + $0x28] sm:$0xff]
  %v1394 = vld [vmem:[%s61 + $0x30] sm:$0xff]
  %v1395 = vld [vmem:[%s61 + $0x38] sm:$0xff]
  %v1396 = vpack.c.bf16 %v1343, %v1342
  %v1397 = vpack.c.bf16 %v1345, %v1344
  %v1398 = vpack.c.bf16 %v1347, %v1346
  %v1399 = vpack.c.bf16 %v1349, %v1348
  %v1400 = vpack.c.bf16 %v1351, %v1350
  %v1401 = vpack.c.bf16 %v1353, %v1352
  %v1402 = vpack.c.bf16 %v1355, %v1354
  %v1403 = vpack.c.bf16 %v1357, %v1356
  %v1404 = vpack.c.bf16 %v1359, %v1358
  %v1405 = vpack.c.bf16 %v1361, %v1360
  %v1406 = vpack.c.bf16 %v1363, %v1362
  %v1407 = vpack.c.bf16 %v1365, %v1364
  %v1408 = vpack.c.bf16 %v1367, %v1366
  %v1409 = vpack.c.bf16 %v1369, %v1368
  %v1410 = vpack.c.bf16 %v1371, %v1370
  %v1411 = vpack.c.bf16 %v1373, %v1372
  %1412 = vmatprep.subr.bf16.mxu0 0
  %1413 = vmatpush1.bf16.msra.mxu0 %v1388
  %1414 = vmatprep.subr.bf16.mxu0 0
  %1415 = vmatpush1.bf16.msra.mxu0 %v1389
  %1416 = vmatprep.subr.bf16.mxu0 0
  %1417 = vmatpush1.bf16.msra.mxu0 %v1390
  %1418 = vmatprep.subr.bf16.mxu0 0
  %1419 = vmatpush1.bf16.msra.mxu0 %v1391
  %1420 = vmatprep.subr.bf16.mxu0 0
  %1421 = vmatpush1.bf16.msra.mxu0 %v1392
  %1422 = vmatprep.subr.bf16.mxu0 0
  %1423 = vmatpush1.bf16.msra.mxu0 %v1393
  %1424 = vmatprep.subr.bf16.mxu0 0
  %1425 = vmatpush1.bf16.msra.mxu0 %v1394
  %1426 = vmatprep.subr.bf16.mxu0 0
  %1427 = vmatpush1.bf16.msra.mxu0 %v1395
  %1428 = vmatprep.subr.bf16.mxu0 0
  %1429 = vmatpush1.bf16.msra.mxu0 0
  %1430 = vmatprep.subr.bf16.mxu0 0
  %1431 = vmatpush1.bf16.msra.mxu0 0
  %1432 = vmatprep.subr.bf16.mxu0 0
  %1433 = vmatpush1.bf16.msra.mxu0 0
  %1434 = vmatprep.subr.bf16.mxu0 0
  %1435 = vmatpush1.bf16.msra.mxu0 0
  %1436 = vmatprep.subr.bf16.mxu0 0
  %1437 = vmatpush1.bf16.msra.mxu0 0
  %1438 = vmatprep.subr.bf16.mxu0 0
  %1439 = vmatpush1.bf16.msra.mxu0 0
  %1440 = vmatprep.subr.bf16.mxu0 0
  %1441 = vmatpush1.bf16.msra.mxu0 0
  %1442 = vmatprep.subr.bf16.mxu0 0
  %1443 = vmatpush1.bf16.msra.mxu0 0
  %1444 = vmatprep.mubr.bf16.mxu0 0
  %1445 = vmatmul.mubr.bf16.gmra.mrb[0].mxu0 %v1396
  %v1446 = vpop.f32.mrb[0].mxu0
  %v1447 = vadd.f32 0.0, %v1446
  %v1448 = vpop.f32.mrb[0].mxu0
  %v1449 = vpop.f32.mrb[0].mxu0
  %v1450 = vadd.f32 0.0, %v1449
  %v1451 = vpop.f32.mrb[0].mxu0
  %1452 = vmatprep.mubr.bf16.mxu0 0
  %1453 = vmatmul.mubr.bf16.gmra.mrb[0].mxu0 %v1397
  %v1454 = vpop.f32.mrb[0].mxu0
  %v1455 = vadd.f32 0.0, %v1454
  %v1456 = vpop.f32.mrb[0].mxu0
  %v1457 = vpop.f32.mrb[0].mxu0
  %v1458 = vadd.f32 0.0, %v1457
  %v1459 = vpop.f32.mrb[0].mxu0
  %1460 = vmatprep.mubr.bf16.mxu0 0
  %1461 = vmatmul.mubr.bf16.gmra.mrb[0].mxu0 %v1398
  %v1462 = vpop.f32.mrb[0].mxu0
  %v1463 = vadd.f32 0.0, %v1462
  %v1464 = vpop.f32.mrb[0].mxu0
  %v1465 = vpop.f32.mrb[0].mxu0
  %v1466 = vadd.f32 0.0, %v1465
  %v1467 = vpop.f32.mrb[0].mxu0
  %1468 = vmatprep.mubr.bf16.mxu0 0
  %1469 = vmatmul.mubr.bf16.gmra.mrb[0].mxu0 %v1399
  %v1470 = vpop.f32.mrb[0].mxu0
  %v1471 = vadd.f32 0.0, %v1470
  %v1472 = vpop.f32.mrb[0].mxu0
  %v1473 = vpop.f32.mrb[0].mxu0
  %v1474 = vadd.f32 0.0, %v1473
  %v1475 = vpop.f32.mrb[0].mxu0
  %1476 = vmatprep.mubr.bf16.mxu0 0
  %1477 = vmatmul.mubr.bf16.gmra.mrb[0].mxu0 %v1400
  %v1478 = vpop.f32.mrb[0].mxu0
  %v1479 = vadd.f32 0.0, %v1478
  %v1480 = vpop.f32.mrb[0].mxu0
  %v1481 = vpop.f32.mrb[0].mxu0
  %v1482 = vadd.f32 0.0, %v1481
  %v1483 = vpop.f32.mrb[0].mxu0
  %1484 = vmatprep.mubr.bf16.mxu0 0
  %1485 = vmatmul.mubr.bf16.gmra.mrb[0].mxu0 %v1401
  %v1486 = vpop.f32.mrb[0].mxu0
  %v1487 = vadd.f32 0.0, %v1486
  %v1488 = vpop.f32.mrb[0].mxu0
  %v1489 = vpop.f32.mrb[0].mxu0
  %v1490 = vadd.f32 0.0, %v1489
  %v1491 = vpop.f32.mrb[0].mxu0
  %1492 = vmatprep.mubr.bf16.mxu0 0
  %1493 = vmatmul.mubr.bf16.gmra.mrb[0].mxu0 %v1402
  %v1494 = vpop.f32.mrb[0].mxu0
  %v1495 = vadd.f32 0.0, %v1494
  %v1496 = vpop.f32.mrb[0].mxu0
  %v1497 = vpop.f32.mrb[0].mxu0
  %v1498 = vadd.f32 0.0, %v1497
  %v1499 = vpop.f32.mrb[0].mxu0
  %1500 = vmatprep.mubr.bf16.mxu0 0
  %1501 = vmatmul.mubr.bf16.gmra.mrb[0].mxu0 %v1403
  %v1502 = vpop.f32.mrb[0].mxu0
  %v1503 = vadd.f32 0.0, %v1502
  %v1504 = vpop.f32.mrb[0].mxu0
  %v1505 = vpop.f32.mrb[0].mxu0
  %v1506 = vadd.f32 0.0, %v1505
  %v1507 = vpop.f32.mrb[0].mxu0
  %1508 = vmatprep.mubr.bf16.mxu0 0
  %1509 = vmatmul.mubr.bf16.gmra.mrb[0].mxu0 %v1404
  %v1510 = vpop.f32.mrb[0].mxu0
  %v1511 = vadd.f32 0.0, %v1510
  %v1512 = vpop.f32.mrb[0].mxu0
  %v1513 = vpop.f32.mrb[0].mxu0
  %v1514 = vadd.f32 0.0, %v1513
  %v1515 = vpop.f32.mrb[0].mxu0
  %1516 = vmatprep.mubr.bf16.mxu0 0
  %1517 = vmatmul.mubr.bf16.gmra.mrb[0].mxu0 %v1405
  %v1518 = vpop.f32.mrb[0].mxu0
  %v1519 = vadd.f32 0.0, %v1518
  %v1520 = vpop.f32.mrb[0].mxu0
  %v1521 = vpop.f32.mrb[0].mxu0
  %v1522 = vadd.f32 0.0, %v1521
  %v1523 = vpop.f32.mrb[0].mxu0
  %1524 = vmatprep.mubr.bf16.mxu0 0
  %1525 = vmatmul.mubr.bf16.gmra.mrb[0].mxu0 %v1406
  %v1526 = vpop.f32.mrb[0].mxu0
  %v1527 = vadd.f32 0.0, %v1526
  %v1528 = vpop.f32.mrb[0].mxu0
  %v1529 = vpop.f32.mrb[0].mxu0
  %v1530 = vadd.f32 0.0, %v1529
  %v1531 = vpop.f32.mrb[0].mxu0
  %1532 = vmatprep.mubr.bf16.mxu0 0
  %1533 = vmatmul.mubr.bf16.gmra.mrb[0].mxu0 %v1407
  %v1534 = vpop.f32.mrb[0].mxu0
  %v1535 = vadd.f32 0.0, %v1534
  %v1536 = vpop.f32.mrb[0].mxu0
  %v1537 = vpop.f32.mrb[0].mxu0
  %v1538 = vadd.f32 0.0, %v1537
  %v1539 = vpop.f32.mrb[0].mxu0
  %1540 = vmatprep.mubr.bf16.mxu0 0
  %1541 = vmatmul.mubr.bf16.gmra.mrb[0].mxu0 %v1408
  %v1542 = vpop.f32.mrb[0].mxu0
  %v1543 = vadd.f32 0.0, %v1542
  %v1544 = vpop.f32.mrb[0].mxu0
  %v1545 = vpop.f32.mrb[0].mxu0
  %v1546 = vadd.f32 0.0, %v1545
  %v1547 = vpop.f32.mrb[0].mxu0
  %1548 = vmatprep.mubr.bf16.mxu0 0
  %1549 = vmatmul.mubr.bf16.gmra.mrb[0].mxu0 %v1409
  %v1550 = vpop.f32.mrb[0].mxu0
  %v1551 = vadd.f32 0.0, %v1550
  %v1552 = vpop.f32.mrb[0].mxu0
  %v1553 = vpop.f32.mrb[0].mxu0
  %v1554 = vadd.f32 0.0, %v1553
  %v1555 = vpop.f32.mrb[0].mxu0
  %1556 = vmatprep.mubr.bf16.mxu0 0
  %1557 = vmatmul.mubr.bf16.gmra.mrb[0].mxu0 %v1410
  %v1558 = vpop.f32.mrb[0].mxu0
  %v1559 = vadd.f32 0.0, %v1558
  %v1560 = vpop.f32.mrb[0].mxu0
  %v1561 = vpop.f32.mrb[0].mxu0
  %v1562 = vadd.f32 0.0, %v1561
  %v1563 = vpop.f32.mrb[0].mxu0
  %1564 = vmatprep.mubr.bf16.mxu0 0
  %1565 = vmatmul.mubr.bf16.gmra.mrb[0].mxu0 %v1411
  %v1566 = vpop.f32.mrb[0].mxu0
  %v1567 = vadd.f32 0.0, %v1566
  %v1568 = vpop.f32.mrb[0].mxu0
  %v1569 = vpop.f32.mrb[0].mxu0
  %v1570 = vadd.f32 0.0, %v1569
  %v1571 = vpop.f32.mrb[0].mxu0
  %1572 = vdwg.mxu0
  %s1573 = scalar_lea.vmem %s2, 24
  %v1574 = vld [vmem:[%s1573] sm:$0xff]
  %v1575 = vadd.f32 %v1447, %v1450
  %v1576 = vadd.f32 %v1575, %v1455
  %v1577 = vadd.f32 %v1576, %v1458
  %v1578 = vadd.f32 %v1577, %v1463
  %v1579 = vadd.f32 %v1578, %v1466
  %v1580 = vadd.f32 %v1579, %v1471
  %v1581 = vadd.f32 %v1580, %v1474
  %v1582 = vadd.f32 %v1581, %v1479
  %v1583 = vadd.f32 %v1582, %v1482
  %v1584 = vadd.f32 %v1583, %v1487
  %v1585 = vadd.f32 %v1584, %v1490
  %v1586 = vadd.f32 %v1585, %v1495
  %v1587 = vadd.f32 %v1586, %v1498
  %v1588 = vadd.f32 %v1587, %v1503
  %v1589 = vadd.f32 %v1588, %v1506
  %v1590 = vadd.f32 %v1589, %v1511
  %v1591 = vadd.f32 %v1590, %v1514
  %v1592 = vadd.f32 %v1591, %v1519
  %v1593 = vadd.f32 %v1592, %v1522
  %v1594 = vadd.f32 %v1593, %v1527
  %v1595 = vadd.f32 %v1594, %v1530
  %v1596 = vadd.f32 %v1595, %v1535
  %v1597 = vadd.f32 %v1596, %v1538
  %v1598 = vadd.f32 %v1597, %v1543
  %v1599 = vadd.f32 %v1598, %v1546
  %v1600 = vadd.f32 %v1599, %v1551
  %v1601 = vadd.f32 %v1600, %v1554
  %v1602 = vadd.f32 %v1601, %v1559
  %v1603 = vadd.f32 %v1602, %v1562
  %v1604 = vadd.f32 %v1603, %v1567
  %v1605 = vadd.f32 %v1604, %v1570
  %v1606 = vrot.slane %v1605, 4
  %v1607 = vadd.f32 %v1605, %v1606
  %v1608 = vrot.slane %v1607, 2
  %v1609 = vadd.f32 %v1607, %v1608
  %v1610 = vrot.slane %v1609, 1
  %v1611 = vadd.f32 %v1609, %v1610
  %v1612 = vmul.f32 %v1447, %v1447
  %v1613 = vmul.f32 %v1450, %v1450
  %v1614 = vmul.f32 %v1455, %v1455
  %v1615 = vmul.f32 %v1458, %v1458
  %v1616 = vmul.f32 %v1463, %v1463
  %v1617 = vmul.f32 %v1466, %v1466
  %v1618 = vmul.f32 %v1471, %v1471
  %v1619 = vmul.f32 %v1474, %v1474
  %v1620 = vmul.f32 %v1479, %v1479
  %v1621 = vmul.f32 %v1482, %v1482
  %v1622 = vmul.f32 %v1487, %v1487
  %v1623 = vmul.f32 %v1490, %v1490
  %v1624 = vmul.f32 %v1495, %v1495
  %v1625 = vmul.f32 %v1498, %v1498
  %v1626 = vmul.f32 %v1503, %v1503
  %v1627 = vmul.f32 %v1506, %v1506
  %v1628 = vmul.f32 %v1511, %v1511
  %v1629 = vmul.f32 %v1514, %v1514
  %v1630 = vmul.f32 %v1519, %v1519
  %v1631 = vmul.f32 %v1522, %v1522
  %v1632 = vmul.f32 %v1527, %v1527
  %v1633 = vmul.f32 %v1530, %v1530
  %v1634 = vmul.f32 %v1535, %v1535
  %v1635 = vmul.f32 %v1538, %v1538
  %v1636 = vmul.f32 %v1543, %v1543
  %v1637 = vmul.f32 %v1546, %v1546
  %v1638 = vmul.f32 %v1551, %v1551
  %v1639 = vmul.f32 %v1554, %v1554
  %v1640 = vmul.f32 %v1559, %v1559
  %v1641 = vmul.f32 %v1562, %v1562
  %v1642 = vmul.f32 %v1567, %v1567
  %v1643 = vmul.f32 %v1570, %v1570
  %v1644 = vadd.f32 %v1612, %v1613
  %v1645 = vadd.f32 %v1644, %v1614
  %v1646 = vadd.f32 %v1645, %v1615
  %v1647 = vadd.f32 %v1646, %v1616
  %v1648 = vadd.f32 %v1647, %v1617
  %v1649 = vadd.f32 %v1648, %v1618
  %v1650 = vadd.f32 %v1649, %v1619
  %v1651 = vadd.f32 %v1650, %v1620
  %v1652 = vadd.f32 %v1651, %v1621
  %v1653 = vadd.f32 %v1652, %v1622
  %v1654 = vadd.f32 %v1653, %v1623
  %v1655 = vadd.f32 %v1654, %v1624
  %v1656 = vadd.f32 %v1655, %v1625
  %v1657 = vadd.f32 %v1656, %v1626
  %v1658 = vadd.f32 %v1657, %v1627
  %v1659 = vadd.f32 %v1658, %v1628
  %v1660 = vadd.f32 %v1659, %v1629
  %v1661 = vadd.f32 %v1660, %v1630
  %v1662 = vadd.f32 %v1661, %v1631
  %v1663 = vadd.f32 %v1662, %v1632
  %v1664 = vadd.f32 %v1663, %v1633
  %v1665 = vadd.f32 %v1664, %v1634
  %v1666 = vadd.f32 %v1665, %v1635
  %v1667 = vadd.f32 %v1666, %v1636
  %v1668 = vadd.f32 %v1667, %v1637
  %v1669 = vadd.f32 %v1668, %v1638
  %v1670 = vadd.f32 %v1669, %v1639
  %v1671 = vadd.f32 %v1670, %v1640
  %v1672 = vadd.f32 %v1671, %v1641
  %v1673 = vadd.f32 %v1672, %v1642
  %v1674 = vadd.f32 %v1673, %v1643
  %v1675 = vrot.slane %v1674, 4
  %v1676 = vadd.f32 %v1674, %v1675
  %v1677 = vrot.slane %v1676, 2
  %v1678 = vadd.f32 %v1676, %v1677
  %v1679 = vrot.slane %v1678, 1
  %v1680 = vadd.f32 %v1678, %v1679
  %v1681 = vmul.f32 %v1611, 0.00390625
  %v1682 = vmul.f32 %v1680, 0.00390625
  %v1683 = vmul.f32 %v1681, %v1681
  %v1684 = vsub.f32 %v1682, %v1683
  %v1685 = vmax.f32 %v1684, 0.0
  %v1686 = vadd.f32 %v1685, 1e-05
  %v1687 = vrsqrt.pop %v1686
  %v1688 = vmul.f32 %v1574, %v1687
  %v1689 = vmul.f32 %v1681, %v1688
  %v1691 = vrot.slane %v1689, 7
  %v1693 = vsub.f32 %v1574, %v1691
  %v1694 = vlaneseq
  %v1695 = vshrl.u32 %v1694, 7
  %v1696 = vsub.s32 1, %v1695
  %v1697 = vrot.slane %v1688, %v1696
  %v1698 = vmul.f32 %v1447, %v1697
  %v1699 = vmul.f32 %v1450, %v1697
  %v1700 = vmul.f32 %v1455, %v1697
  %v1701 = vmul.f32 %v1458, %v1697
  %v1702 = vmul.f32 %v1463, %v1697
  %v1703 = vmul.f32 %v1466, %v1697
  %v1704 = vmul.f32 %v1471, %v1697
  %v1705 = vmul.f32 %v1474, %v1697
  %v1706 = vmul.f32 %v1479, %v1697
  %v1707 = vmul.f32 %v1482, %v1697
  %v1708 = vmul.f32 %v1487, %v1697
  %v1709 = vmul.f32 %v1490, %v1697
  %v1710 = vmul.f32 %v1495, %v1697
  %v1711 = vmul.f32 %v1498, %v1697
  %v1712 = vmul.f32 %v1503, %v1697
  %v1713 = vmul.f32 %v1506, %v1697
  %v1714 = vmul.f32 %v1511, %v1697
  %v1715 = vmul.f32 %v1514, %v1697
  %v1716 = vmul.f32 %v1519, %v1697
  %v1717 = vmul.f32 %v1522, %v1697
  %v1718 = vmul.f32 %v1527, %v1697
  %v1719 = vmul.f32 %v1530, %v1697
  %v1720 = vmul.f32 %v1535, %v1697
  %v1721 = vmul.f32 %v1538, %v1697
  %v1722 = vmul.f32 %v1543, %v1697
  %v1723 = vmul.f32 %v1546, %v1697
  %v1724 = vmul.f32 %v1551, %v1697
  %v1725 = vmul.f32 %v1554, %v1697
  %v1726 = vmul.f32 %v1559, %v1697
  %v1727 = vmul.f32 %v1562, %v1697
  %v1728 = vmul.f32 %v1567, %v1697
  %v1729 = vmul.f32 %v1570, %v1697
  %v1730 = vlaneseq
  %v1731 = vshrl.u32 %v1730, 7
  %v1732 = vsub.s32 2, %v1731
  %v1733 = vrot.slane %v1693, %v1732
  %v1734 = vadd.f32 %v1698, %v1733
  %v1735 = vadd.f32 %v1699, %v1733
  %v1736 = vadd.f32 %v1700, %v1733
  %v1737 = vadd.f32 %v1701, %v1733
  %v1738 = vadd.f32 %v1702, %v1733
  %v1739 = vadd.f32 %v1703, %v1733
  %v1740 = vadd.f32 %v1704, %v1733
  %v1741 = vadd.f32 %v1705, %v1733
  %v1742 = vadd.f32 %v1706, %v1733
  %v1743 = vadd.f32 %v1707, %v1733
  %v1744 = vadd.f32 %v1708, %v1733
  %v1745 = vadd.f32 %v1709, %v1733
  %v1746 = vadd.f32 %v1710, %v1733
  %v1747 = vadd.f32 %v1711, %v1733
  %v1748 = vadd.f32 %v1712, %v1733
  %v1749 = vadd.f32 %v1713, %v1733
  %v1750 = vadd.f32 %v1714, %v1733
  %v1751 = vadd.f32 %v1715, %v1733
  %v1752 = vadd.f32 %v1716, %v1733
  %v1753 = vadd.f32 %v1717, %v1733
  %v1754 = vadd.f32 %v1718, %v1733
  %v1755 = vadd.f32 %v1719, %v1733
  %v1756 = vadd.f32 %v1720, %v1733
  %v1757 = vadd.f32 %v1721, %v1733
  %v1758 = vadd.f32 %v1722, %v1733
  %v1759 = vadd.f32 %v1723, %v1733
  %v1760 = vadd.f32 %v1724, %v1733
  %v1761 = vadd.f32 %v1725, %v1733
  %v1762 = vadd.f32 %v1726, %v1733
  %v1763 = vadd.f32 %v1727, %v1733
  %v1764 = vadd.f32 %v1728, %v1733
  %v1765 = vadd.f32 %v1729, %v1733
  %v1766 = vmax.f32 %v1734, 0.0
  %v1767 = vmax.f32 %v1735, 0.0
  %v1768 = vmax.f32 %v1736, 0.0
  %v1769 = vmax.f32 %v1737, 0.0
  %v1770 = vmax.f32 %v1738, 0.0
  %v1771 = vmax.f32 %v1739, 0.0
  %v1772 = vmax.f32 %v1740, 0.0
  %v1773 = vmax.f32 %v1741, 0.0
  %v1774 = vmax.f32 %v1742, 0.0
  %v1775 = vmax.f32 %v1743, 0.0
  %v1776 = vmax.f32 %v1744, 0.0
  %v1777 = vmax.f32 %v1745, 0.0
  %v1778 = vmax.f32 %v1746, 0.0
  %v1779 = vmax.f32 %v1747, 0.0
  %v1780 = vmax.f32 %v1748, 0.0
  %v1781 = vmax.f32 %v1749, 0.0
  %v1782 = vmax.f32 %v1750, 0.0
  %v1783 = vmax.f32 %v1751, 0.0
  %v1784 = vmax.f32 %v1752, 0.0
  %v1785 = vmax.f32 %v1753, 0.0
  %v1786 = vmax.f32 %v1754, 0.0
  %v1787 = vmax.f32 %v1755, 0.0
  %v1788 = vmax.f32 %v1756, 0.0
  %v1789 = vmax.f32 %v1757, 0.0
  %v1790 = vmax.f32 %v1758, 0.0
  %v1791 = vmax.f32 %v1759, 0.0
  %v1792 = vmax.f32 %v1760, 0.0
  %v1793 = vmax.f32 %v1761, 0.0
  %v1794 = vmax.f32 %v1762, 0.0
  %v1795 = vmax.f32 %v1763, 0.0
  %v1796 = vmax.f32 %v1764, 0.0
  %v1797 = vmax.f32 %v1765, 0.0
  %s1798 = sshll.u32 %s57, 4
  %1799 = dma.done [#allocation3], %s1798
  %s1800 = scalar_lea.hbm %s1, 5120
  // Predicated region
  $region30: #{autoencoder_forward.1} parent=0 // pred_check
    _
  $region31: #{autoencoder_forward.1} parent=0 // pred_check_branch
    %1802 = sbr.rel target = $region33
  $region32: #{autoencoder_forward.1} parent=0 // pred_region
    %1803 = sst [smem:[#allocation6]] [#allocation17]
    %1804 = sst [smem:[#allocation7]] [#allocation16]
  $region33: #{autoencoder_forward.1} parent=0 // pred_fallthru
    _
  %1806 = shalt.err (0)
  %s1808 = sshll.u32 %s61, 4
  %s1809 = int_to_ptr.vmem [resolvable:$true] %s1808
  %1811 = dma.hbm_to_vmem [thread:$0]  %s1800, 1024, %s1809, %s62
  %v1812 = vld [vmem:[#allocation2] sm:$0xff]
  %v1813 = vld [vmem:[#allocation2 + $0x8] sm:$0xff]
  %v1814 = vld [vmem:[#allocation2 + $0x10] sm:$0xff]
  %v1815 = vld [vmem:[#allocation2 + $0x18] sm:$0xff]
  %v1816 = vld [vmem:[#allocation2 + $0x20] sm:$0xff]
  %v1817 = vld [vmem:[#allocation2 + $0x28] sm:$0xff]
  %v1818 = vld [vmem:[#allocation2 + $0x30] sm:$0xff]
  %v1819 = vld [vmem:[#allocation2 + $0x38] sm:$0xff]
  %v1820 = vpack.c.bf16 %v1767, %v1766
  %v1821 = vpack.c.bf16 %v1769, %v1768
  %v1822 = vpack.c.bf16 %v1771, %v1770
  %v1823 = vpack.c.bf16 %v1773, %v1772
  %v1824 = vpack.c.bf16 %v1775, %v1774
  %v1825 = vpack.c.bf16 %v1777, %v1776
  %v1826 = vpack.c.bf16 %v1779, %v1778
  %v1827 = vpack.c.bf16 %v1781, %v1780
  %v1828 = vpack.c.bf16 %v1783, %v1782
  %v1829 = vpack.c.bf16 %v1785, %v1784
  %v1830 = vpack.c.bf16 %v1787, %v1786
  %v1831 = vpack.c.bf16 %v1789, %v1788
  %v1832 = vpack.c.bf16 %v1791, %v1790
  %v1833 = vpack.c.bf16 %v1793, %v1792
  %v1834 = vpack.c.bf16 %v1795, %v1794
  %v1835 = vpack.c.bf16 %v1797, %v1796
  %1836 = vmatprep.subr.bf16.mxu0 0
  %1837 = vmatpush1.bf16.msra.mxu0 %v1812
  %1838 = vmatprep.subr.bf16.mxu0 0
  %1839 = vmatpush1.bf16.msra.mxu0 %v1813
  %1840 = vmatprep.subr.bf16.mxu0 0
  %1841 = vmatpush1.bf16.msra.mxu0 %v1814
  %1842 = vmatprep.subr.bf16.mxu0 0
  %1843 = vmatpush1.bf16.msra.mxu0 %v1815
  %1844 = vmatprep.subr.bf16.mxu0 0
  %1845 = vmatpush1.bf16.msra.mxu0 %v1816
  %1846 = vmatprep.subr.bf16.mxu0 0
  %1847 = vmatpush1.bf16.msra.mxu0 %v1817
  %1848 = vmatprep.subr.bf16.mxu0 0
  %1849 = vmatpush1.bf16.msra.mxu0 %v1818
  %1850 = vmatprep.subr.bf16.mxu0 0
  %1851 = vmatpush1.bf16.msra.mxu0 %v1819
  %1852 = vmatprep.subr.bf16.mxu0 0
  %1853 = vmatpush1.bf16.msra.mxu0 0
  %1854 = vmatprep.subr.bf16.mxu0 0
  %1855 = vmatpush1.bf16.msra.mxu0 0
  %1856 = vmatprep.subr.bf16.mxu0 0
  %1857 = vmatpush1.bf16.msra.mxu0 0
  %1858 = vmatprep.subr.bf16.mxu0 0
  %1859 = vmatpush1.bf16.msra.mxu0 0
  %1860 = vmatprep.subr.bf16.mxu0 0
  %1861 = vmatpush1.bf16.msra.mxu0 0
  %1862 = vmatprep.subr.bf16.mxu0 0
  %1863 = vmatpush1.bf16.msra.mxu0 0
  %1864 = vmatprep.subr.bf16.mxu0 0
  %1865 = vmatpush1.bf16.msra.mxu0 0
  %1866 = vmatprep.subr.bf16.mxu0 0
  %1867 = vmatpush1.bf16.msra.mxu0 0
  %1868 = vmatprep.mubr.bf16.mxu0 0
  %1869 = vmatmul.mubr.bf16.gmra.mrb[0].mxu0 %v1820
  %v1870 = vpop.f32.mrb[0].mxu0
  %v1871 = vadd.f32 0.0, %v1870
  %v1872 = vpop.f32.mrb[0].mxu0
  %v1873 = vpop.f32.mrb[0].mxu0
  %v1874 = vadd.f32 0.0, %v1873
  %v1875 = vpop.f32.mrb[0].mxu0
  %1876 = vmatprep.mubr.bf16.mxu0 0
  %1877 = vmatmul.mubr.bf16.gmra.mrb[0].mxu0 %v1821
  %v1878 = vpop.f32.mrb[0].mxu0
  %v1879 = vadd.f32 0.0, %v1878
  %v1880 = vpop.f32.mrb[0].mxu0
  %v1881 = vpop.f32.mrb[0].mxu0
  %v1882 = vadd.f32 0.0, %v1881
  %v1883 = vpop.f32.mrb[0].mxu0
  %1884 = vmatprep.mubr.bf16.mxu0 0
  %1885 = vmatmul.mubr.bf16.gmra.mrb[0].mxu0 %v1822
  %v1886 = vpop.f32.mrb[0].mxu0
  %v1887 = vadd.f32 0.0, %v1886
  %v1888 = vpop.f32.mrb[0].mxu0
  %v1889 = vpop.f32.mrb[0].mxu0
  %v1890 = vadd.f32 0.0, %v1889
  %v1891 = vpop.f32.mrb[0].mxu0
  %1892 = vmatprep.mubr.bf16.mxu0 0
  %1893 = vmatmul.mubr.bf16.gmra.mrb[0].mxu0 %v1823
  %v1894 = vpop.f32.mrb[0].mxu0
  %v1895 = vadd.f32 0.0, %v1894
  %v1896 = vpop.f32.mrb[0].mxu0
  %v1897 = vpop.f32.mrb[0].mxu0
  %v1898 = vadd.f32 0.0, %v1897
  %v1899 = vpop.f32.mrb[0].mxu0
  %1900 = vmatprep.mubr.bf16.mxu0 0
  %1901 = vmatmul.mubr.bf16.gmra.mrb[0].mxu0 %v1824
  %v1902 = vpop.f32.mrb[0].mxu0
  %v1903 = vadd.f32 0.0, %v1902
  %v1904 = vpop.f32.mrb[0].mxu0
  %v1905 = vpop.f32.mrb[0].mxu0
  %v1906 = vadd.f32 0.0, %v1905
  %v1907 = vpop.f32.mrb[0].mxu0
  %1908 = vmatprep.mubr.bf16.mxu0 0
  %1909 = vmatmul.mubr.bf16.gmra.mrb[0].mxu0 %v1825
  %v1910 = vpop.f32.mrb[0].mxu0
  %v1911 = vadd.f32 0.0, %v1910
  %v1912 = vpop.f32.mrb[0].mxu0
  %v1913 = vpop.f32.mrb[0].mxu0
  %v1914 = vadd.f32 0.0, %v1913
  %v1915 = vpop.f32.mrb[0].mxu0
  %1916 = vmatprep.mubr.bf16.mxu0 0
  %1917 = vmatmul.mubr.bf16.gmra.mrb[0].mxu0 %v1826
  %v1918 = vpop.f32.mrb[0].mxu0
  %v1919 = vadd.f32 0.0, %v1918
  %v1920 = vpop.f32.mrb[0].mxu0
  %v1921 = vpop.f32.mrb[0].mxu0
  %v1922 = vadd.f32 0.0, %v1921
  %v1923 = vpop.f32.mrb[0].mxu0
  %1924 = vmatprep.mubr.bf16.mxu0 0
  %1925 = vmatmul.mubr.bf16.gmra.mrb[0].mxu0 %v1827
  %v1926 = vpop.f32.mrb[0].mxu0
  %v1927 = vadd.f32 0.0, %v1926
  %v1928 = vpop.f32.mrb[0].mxu0
  %v1929 = vpop.f32.mrb[0].mxu0
  %v1930 = vadd.f32 0.0, %v1929
  %v1931 = vpop.f32.mrb[0].mxu0
  %1932 = vmatprep.mubr.bf16.mxu0 0
  %1933 = vmatmul.mubr.bf16.gmra.mrb[0].mxu0 %v1828
  %v1934 = vpop.f32.mrb[0].mxu0
  %v1935 = vadd.f32 0.0, %v1934
  %v1936 = vpop.f32.mrb[0].mxu0
  %v1937 = vpop.f32.mrb[0].mxu0
  %v1938 = vadd.f32 0.0, %v1937
  %v1939 = vpop.f32.mrb[0].mxu0
  %1940 = vmatprep.mubr.bf16.mxu0 0
  %1941 = vmatmul.mubr.bf16.gmra.mrb[0].mxu0 %v1829
  %v1942 = vpop.f32.mrb[0].mxu0
  %v1943 = vadd.f32 0.0, %v1942
  %v1944 = vpop.f32.mrb[0].mxu0
  %v1945 = vpop.f32.mrb[0].mxu0
  %v1946 = vadd.f32 0.0, %v1945
  %v1947 = vpop.f32.mrb[0].mxu0
  %1948 = vmatprep.mubr.bf16.mxu0 0
  %1949 = vmatmul.mubr.bf16.gmra.mrb[0].mxu0 %v1830
  %v1950 = vpop.f32.mrb[0].mxu0
  %v1951 = vadd.f32 0.0, %v1950
  %v1952 = vpop.f32.mrb[0].mxu0
  %v1953 = vpop.f32.mrb[0].mxu0
  %v1954 = vadd.f32 0.0, %v1953
  %v1955 = vpop.f32.mrb[0].mxu0
  %1956 = vmatprep.mubr.bf16.mxu0 0
  %1957 = vmatmul.mubr.bf16.gmra.mrb[0].mxu0 %v1831
  %v1958 = vpop.f32.mrb[0].mxu0
  %v1959 = vadd.f32 0.0, %v1958
  %v1960 = vpop.f32.mrb[0].mxu0
  %v1961 = vpop.f32.mrb[0].mxu0
  %v1962 = vadd.f32 0.0, %v1961
  %v1963 = vpop.f32.mrb[0].mxu0
  %1964 = vmatprep.mubr.bf16.mxu0 0
  %1965 = vmatmul.mubr.bf16.gmra.mrb[0].mxu0 %v1832
  %v1966 = vpop.f32.mrb[0].mxu0
  %v1967 = vadd.f32 0.0, %v1966
  %v1968 = vpop.f32.mrb[0].mxu0
  %v1969 = vpop.f32.mrb[0].mxu0
  %v1970 = vadd.f32 0.0, %v1969
  %v1971 = vpop.f32.mrb[0].mxu0
  %1972 = vmatprep.mubr.bf16.mxu0 0
  %1973 = vmatmul.mubr.bf16.gmra.mrb[0].mxu0 %v1833
  %v1974 = vpop.f32.mrb[0].mxu0
  %v1975 = vadd.f32 0.0, %v1974
  %v1976 = vpop.f32.mrb[0].mxu0
  %v1977 = vpop.f32.mrb[0].mxu0
  %v1978 = vadd.f32 0.0, %v1977
  %v1979 = vpop.f32.mrb[0].mxu0
  %1980 = vmatprep.mubr.bf16.mxu0 0
  %1981 = vmatmul.mubr.bf16.gmra.mrb[0].mxu0 %v1834
  %v1982 = vpop.f32.mrb[0].mxu0
  %v1983 = vadd.f32 0.0, %v1982
  %v1984 = vpop.f32.mrb[0].mxu0
  %v1985 = vpop.f32.mrb[0].mxu0
  %v1986 = vadd.f32 0.0, %v1985
  %v1987 = vpop.f32.mrb[0].mxu0
  %1988 = vmatprep.mubr.bf16.mxu0 0
  %1989 = vmatmul.mubr.bf16.gmra.mrb[0].mxu0 %v1835
  %v1990 = vpop.f32.mrb[0].mxu0
  %v1991 = vadd.f32 0.0, %v1990
  %v1992 = vpop.f32.mrb[0].mxu0
  %v1993 = vpop.f32.mrb[0].mxu0
  %v1994 = vadd.f32 0.0, %v1993
  %v1995 = vpop.f32.mrb[0].mxu0
  %1996 = vdwg.mxu0
  %s1997 = scalar_lea.vmem %s2, 32
  %v1998 = vld [vmem:[%s1997] sm:$0xff]
  %v1999 = vadd.f32 %v1871, %v1874
  %v2000 = vadd.f32 %v1999, %v1879
  %v2001 = vadd.f32 %v2000, %v1882
  %v2002 = vadd.f32 %v2001, %v1887
  %v2003 = vadd.f32 %v2002, %v1890
  %v2004 = vadd.f32 %v2003, %v1895
  %v2005 = vadd.f32 %v2004, %v1898
  %v2006 = vadd.f32 %v2005, %v1903
  %v2007 = vadd.f32 %v2006, %v1906
  %v2008 = vadd.f32 %v2007, %v1911
  %v2009 = vadd.f32 %v2008, %v1914
  %v2010 = vadd.f32 %v2009, %v1919
  %v2011 = vadd.f32 %v2010, %v1922
  %v2012 = vadd.f32 %v2011, %v1927
  %v2013 = vadd.f32 %v2012, %v1930
  %v2014 = vadd.f32 %v2013, %v1935
  %v2015 = vadd.f32 %v2014, %v1938
  %v2016 = vadd.f32 %v2015, %v1943
  %v2017 = vadd.f32 %v2016, %v1946
  %v2018 = vadd.f32 %v2017, %v1951
  %v2019 = vadd.f32 %v2018, %v1954
  %v2020 = vadd.f32 %v2019, %v1959
  %v2021 = vadd.f32 %v2020, %v1962
  %v2022 = vadd.f32 %v2021, %v1967
  %v2023 = vadd.f32 %v2022, %v1970
  %v2024 = vadd.f32 %v2023, %v1975
  %v2025 = vadd.f32 %v2024, %v1978
  %v2026 = vadd.f32 %v2025, %v1983
  %v2027 = vadd.f32 %v2026, %v1986
  %v2028 = vadd.f32 %v2027, %v1991
  %v2029 = vadd.f32 %v2028, %v1994
  %v2030 = vrot.slane %v2029, 4
  %v2031 = vadd.f32 %v2029, %v2030
  %v2032 = vrot.slane %v2031, 2
  %v2033 = vadd.f32 %v2031, %v2032
  %v2034 = vrot.slane %v2033, 1
  %v2035 = vadd.f32 %v2033, %v2034
  %v2036 = vmul.f32 %v1871, %v1871
  %v2037 = vmul.f32 %v1874, %v1874
  %v2038 = vmul.f32 %v1879, %v1879
  %v2039 = vmul.f32 %v1882, %v1882
  %v2040 = vmul.f32 %v1887, %v1887
  %v2041 = vmul.f32 %v1890, %v1890
  %v2042 = vmul.f32 %v1895, %v1895
  %v2043 = vmul.f32 %v1898, %v1898
  %v2044 = vmul.f32 %v1903, %v1903
  %v2045 = vmul.f32 %v1906, %v1906
  %v2046 = vmul.f32 %v1911, %v1911
  %v2047 = vmul.f32 %v1914, %v1914
  %v2048 = vmul.f32 %v1919, %v1919
  %v2049 = vmul.f32 %v1922, %v1922
  %v2050 = vmul.f32 %v1927, %v1927
  %v2051 = vmul.f32 %v1930, %v1930
  %v2052 = vmul.f32 %v1935, %v1935
  %v2053 = vmul.f32 %v1938, %v1938
  %v2054 = vmul.f32 %v1943, %v1943
  %v2055 = vmul.f32 %v1946, %v1946
  %v2056 = vmul.f32 %v1951, %v1951
  %v2057 = vmul.f32 %v1954, %v1954
  %v2058 = vmul.f32 %v1959, %v1959
  %v2059 = vmul.f32 %v1962, %v1962
  %v2060 = vmul.f32 %v1967, %v1967
  %v2061 = vmul.f32 %v1970, %v1970
  %v2062 = vmul.f32 %v1975, %v1975
  %v2063 = vmul.f32 %v1978, %v1978
  %v2064 = vmul.f32 %v1983, %v1983
  %v2065 = vmul.f32 %v1986, %v1986
  %v2066 = vmul.f32 %v1991, %v1991
  %v2067 = vmul.f32 %v1994, %v1994
  %v2068 = vadd.f32 %v2036, %v2037
  %v2069 = vadd.f32 %v2068, %v2038
  %v2070 = vadd.f32 %v2069, %v2039
  %v2071 = vadd.f32 %v2070, %v2040
  %v2072 = vadd.f32 %v2071, %v2041
  %v2073 = vadd.f32 %v2072, %v2042
  %v2074 = vadd.f32 %v2073, %v2043
  %v2075 = vadd.f32 %v2074, %v2044
  %v2076 = vadd.f32 %v2075, %v2045
  %v2077 = vadd.f32 %v2076, %v2046
  %v2078 = vadd.f32 %v2077, %v2047
  %v2079 = vadd.f32 %v2078, %v2048
  %v2080 = vadd.f32 %v2079, %v2049
  %v2081 = vadd.f32 %v2080, %v2050
  %v2082 = vadd.f32 %v2081, %v2051
  %v2083 = vadd.f32 %v2082, %v2052
  %v2084 = vadd.f32 %v2083, %v2053
  %v2085 = vadd.f32 %v2084, %v2054
  %v2086 = vadd.f32 %v2085, %v2055
  %v2087 = vadd.f32 %v2086, %v2056
  %v2088 = vadd.f32 %v2087, %v2057
  %v2089 = vadd.f32 %v2088, %v2058
  %v2090 = vadd.f32 %v2089, %v2059
  %v2091 = vadd.f32 %v2090, %v2060
  %v2092 = vadd.f32 %v2091, %v2061
  %v2093 = vadd.f32 %v2092, %v2062
  %v2094 = vadd.f32 %v2093, %v2063
  %v2095 = vadd.f32 %v2094, %v2064
  %v2096 = vadd.f32 %v2095, %v2065
  %v2097 = vadd.f32 %v2096, %v2066
  %v2098 = vadd.f32 %v2097, %v2067
  %v2099 = vrot.slane %v2098, 4
  %v2100 = vadd.f32 %v2098, %v2099
  %v2101 = vrot.slane %v2100, 2
  %v2102 = vadd.f32 %v2100, %v2101
  %v2103 = vrot.slane %v2102, 1
  %v2104 = vadd.f32 %v2102, %v2103
  %v2105 = vmul.f32 %v2035, 0.00390625
  %v2106 = vmul.f32 %v2104, 0.00390625
  %v2107 = vmul.f32 %v2105, %v2105
  %v2108 = vsub.f32 %v2106, %v2107
  %v2109 = vmax.f32 %v2108, 0.0
  %v2110 = vadd.f32 %v2109, 1e-05
  %v2111 = vrsqrt.pop %v2110
  %v2112 = vmul.f32 %v1998, %v2111
  %v2113 = vmul.f32 %v2105, %v2112
  %v2115 = vrot.slane %v2113, 7
  %v2117 = vsub.f32 %v1998, %v2115
  %v2118 = vlaneseq
  %v2119 = vshrl.u32 %v2118, 7
  %v2120 = vsub.s32 1, %v2119
  %v2121 = vrot.slane %v2112, %v2120
  %v2122 = vmul.f32 %v1871, %v2121
  %v2123 = vmul.f32 %v1874, %v2121
  %v2124 = vmul.f32 %v1879, %v2121
  %v2125 = vmul.f32 %v1882, %v2121
  %v2126 = vmul.f32 %v1887, %v2121
  %v2127 = vmul.f32 %v1890, %v2121
  %v2128 = vmul.f32 %v1895, %v2121
  %v2129 = vmul.f32 %v1898, %v2121
  %v2130 = vmul.f32 %v1903, %v2121
  %v2131 = vmul.f32 %v1906, %v2121
  %v2132 = vmul.f32 %v1911, %v2121
  %v2133 = vmul.f32 %v1914, %v2121
  %v2134 = vmul.f32 %v1919, %v2121
  %v2135 = vmul.f32 %v1922, %v2121
  %v2136 = vmul.f32 %v1927, %v2121
  %v2137 = vmul.f32 %v1930, %v2121
  %v2138 = vmul.f32 %v1935, %v2121
  %v2139 = vmul.f32 %v1938, %v2121
  %v2140 = vmul.f32 %v1943, %v2121
  %v2141 = vmul.f32 %v1946, %v2121
  %v2142 = vmul.f32 %v1951, %v2121
  %v2143 = vmul.f32 %v1954, %v2121
  %v2144 = vmul.f32 %v1959, %v2121
  %v2145 = vmul.f32 %v1962, %v2121
  %v2146 = vmul.f32 %v1967, %v2121
  %v2147 = vmul.f32 %v1970, %v2121
  %v2148 = vmul.f32 %v1975, %v2121
  %v2149 = vmul.f32 %v1978, %v2121
  %v2150 = vmul.f32 %v1983, %v2121
  %v2151 = vmul.f32 %v1986, %v2121
  %v2152 = vmul.f32 %v1991, %v2121
  %v2153 = vmul.f32 %v1994, %v2121
  %v2154 = vlaneseq
  %v2155 = vshrl.u32 %v2154, 7
  %v2156 = vsub.s32 2, %v2155
  %v2157 = vrot.slane %v2117, %v2156
  %v2158 = vadd.f32 %v2122, %v2157
  %v2159 = vadd.f32 %v2123, %v2157
  %v2160 = vadd.f32 %v2124, %v2157
  %v2161 = vadd.f32 %v2125, %v2157
  %v2162 = vadd.f32 %v2126, %v2157
  %v2163 = vadd.f32 %v2127, %v2157
  %v2164 = vadd.f32 %v2128, %v2157
  %v2165 = vadd.f32 %v2129, %v2157
  %v2166 = vadd.f32 %v2130, %v2157
  %v2167 = vadd.f32 %v2131, %v2157
  %v2168 = vadd.f32 %v2132, %v2157
  %v2169 = vadd.f32 %v2133, %v2157
  %v2170 = vadd.f32 %v2134, %v2157
  %v2171 = vadd.f32 %v2135, %v2157
  %v2172 = vadd.f32 %v2136, %v2157
  %v2173 = vadd.f32 %v2137, %v2157
  %v2174 = vadd.f32 %v2138, %v2157
  %v2175 = vadd.f32 %v2139, %v2157
  %v2176 = vadd.f32 %v2140, %v2157
  %v2177 = vadd.f32 %v2141, %v2157
  %v2178 = vadd.f32 %v2142, %v2157
  %v2179 = vadd.f32 %v2143, %v2157
  %v2180 = vadd.f32 %v2144, %v2157
  %v2181 = vadd.f32 %v2145, %v2157
  %v2182 = vadd.f32 %v2146, %v2157
  %v2183 = vadd.f32 %v2147, %v2157
  %v2184 = vadd.f32 %v2148, %v2157
  %v2185 = vadd.f32 %v2149, %v2157
  %v2186 = vadd.f32 %v2150, %v2157
  %v2187 = vadd.f32 %v2151, %v2157
  %v2188 = vadd.f32 %v2152, %v2157
  %v2189 = vadd.f32 %v2153, %v2157
  %v2190 = vmax.f32 %v2158, 0.0
  %v2191 = vmax.f32 %v2159, 0.0
  %v2192 = vmax.f32 %v2160, 0.0
  %v2193 = vmax.f32 %v2161, 0.0
  %v2194 = vmax.f32 %v2162, 0.0
  %v2195 = vmax.f32 %v2163, 0.0
  %v2196 = vmax.f32 %v2164, 0.0
  %v2197 = vmax.f32 %v2165, 0.0
  %v2198 = vmax.f32 %v2166, 0.0
  %v2199 = vmax.f32 %v2167, 0.0
  %v2200 = vmax.f32 %v2168, 0.0
  %v2201 = vmax.f32 %v2169, 0.0
  %v2202 = vmax.f32 %v2170, 0.0
  %v2203 = vmax.f32 %v2171, 0.0
  %v2204 = vmax.f32 %v2172, 0.0
  %v2205 = vmax.f32 %v2173, 0.0
  %v2206 = vmax.f32 %v2174, 0.0
  %v2207 = vmax.f32 %v2175, 0.0
  %v2208 = vmax.f32 %v2176, 0.0
  %v2209 = vmax.f32 %v2177, 0.0
  %v2210 = vmax.f32 %v2178, 0.0
  %v2211 = vmax.f32 %v2179, 0.0
  %v2212 = vmax.f32 %v2180, 0.0
  %v2213 = vmax.f32 %v2181, 0.0
  %v2214 = vmax.f32 %v2182, 0.0
  %v2215 = vmax.f32 %v2183, 0.0
  %v2216 = vmax.f32 %v2184, 0.0
  %v2217 = vmax.f32 %v2185, 0.0
  %v2218 = vmax.f32 %v2186, 0.0
  %v2219 = vmax.f32 %v2187, 0.0
  %v2220 = vmax.f32 %v2188, 0.0
  %v2221 = vmax.f32 %v2189, 0.0
  %s2222 = sshll.u32 %s57, 4
  %2223 = dma.done %s62, %s2222
  %s2224 = scalar_lea.hbm %s1, 6144
  // Predicated region
  $region34: #{autoencoder_forward.1} parent=0 // pred_check
    _
  $region35: #{autoencoder_forward.1} parent=0 // pred_check_branch
    %2226 = sbr.rel target = $region37
  $region36: #{autoencoder_forward.1} parent=0 // pred_region
    %2227 = sst [smem:[#allocation6]] [#allocation19]
    %2228 = sst [smem:[#allocation7]] [#allocation18]
  $region37: #{autoencoder_forward.1} parent=0 // pred_fallthru
    _
  %2230 = shalt.err (0)
  %s2232 = sshll.u32 [#allocation2], 4
  %s2233 = int_to_ptr.vmem [resolvable:$true] %s2232
  %2235 = dma.hbm_to_vmem [thread:$0]  %s2224, 1024, %s2233, [#allocation3]
  %v2236 = vld [vmem:[%s61] sm:$0xff]
  %v2237 = vld [vmem:[%s61 + $0x8] sm:$0xff]
  %v2238 = vld [vmem:[%s61 + $0x10] sm:$0xff]
  %v2239 = vld [vmem:[%s61 + $0x18] sm:$0xff]
  %v2240 = vld [vmem:[%s61 + $0x20] sm:$0xff]
  %v2241 = vld [vmem:[%s61 + $0x28] sm:$0xff]
  %v2242 = vld [vmem:[%s61 + $0x30] sm:$0xff]
  %v2243 = vld [vmem:[%s61 + $0x38] sm:$0xff]
  %v2244 = vpack.c.bf16 %v2191, %v2190
  %v2245 = vpack.c.bf16 %v2193, %v2192
  %v2246 = vpack.c.bf16 %v2195, %v2194
  %v2247 = vpack.c.bf16 %v2197, %v2196
  %v2248 = vpack.c.bf16 %v2199, %v2198
  %v2249 = vpack.c.bf16 %v2201, %v2200
  %v2250 = vpack.c.bf16 %v2203, %v2202
  %v2251 = vpack.c.bf16 %v2205, %v2204
  %v2252 = vpack.c.bf16 %v2207, %v2206
  %v2253 = vpack.c.bf16 %v2209, %v2208
  %v2254 = vpack.c.bf16 %v2211, %v2210
  %v2255 = vpack.c.bf16 %v2213, %v2212
  %v2256 = vpack.c.bf16 %v2215, %v2214
  %v2257 = vpack.c.bf16 %v2217, %v2216
  %v2258 = vpack.c.bf16 %v2219, %v2218
  %v2259 = vpack.c.bf16 %v2221, %v2220
  %2260 = vmatprep.subr.bf16.mxu0 0
  %2261 = vmatpush1.bf16.msra.mxu0 %v2236
  %2262 = vmatprep.subr.bf16.mxu0 0
  %2263 = vmatpush1.bf16.msra.mxu0 %v2237
  %2264 = vmatprep.subr.bf16.mxu0 0
  %2265 = vmatpush1.bf16.msra.mxu0 %v2238
  %2266 = vmatprep.subr.bf16.mxu0 0
  %2267 = vmatpush1.bf16.msra.mxu0 %v2239
  %2268 = vmatprep.subr.bf16.mxu0 0
  %2269 = vmatpush1.bf16.msra.mxu0 %v2240
  %2270 = vmatprep.subr.bf16.mxu0 0
  %2271 = vmatpush1.bf16.msra.mxu0 %v2241
  %2272 = vmatprep.subr.bf16.mxu0 0
  %2273 = vmatpush1.bf16.msra.mxu0 %v2242
  %2274 = vmatprep.subr.bf16.mxu0 0
  %2275 = vmatpush1.bf16.msra.mxu0 %v2243
  %2276 = vmatprep.subr.bf16.mxu0 0
  %2277 = vmatpush1.bf16.msra.mxu0 0
  %2278 = vmatprep.subr.bf16.mxu0 0
  %2279 = vmatpush1.bf16.msra.mxu0 0
  %2280 = vmatprep.subr.bf16.mxu0 0
  %2281 = vmatpush1.bf16.msra.mxu0 0
  %2282 = vmatprep.subr.bf16.mxu0 0
  %2283 = vmatpush1.bf16.msra.mxu0 0
  %2284 = vmatprep.subr.bf16.mxu0 0
  %2285 = vmatpush1.bf16.msra.mxu0 0
  %2286 = vmatprep.subr.bf16.mxu0 0
  %2287 = vmatpush1.bf16.msra.mxu0 0
  %2288 = vmatprep.subr.bf16.mxu0 0
  %2289 = vmatpush1.bf16.msra.mxu0 0
  %2290 = vmatprep.subr.bf16.mxu0 0
  %2291 = vmatpush1.bf16.msra.mxu0 0
  %2292 = vmatprep.mubr.bf16.mxu0 0
  %2293 = vmatmul.mubr.bf16.gmra.mrb[0].mxu0 %v2244
  %v2294 = vpop.f32.mrb[0].mxu0
  %v2295 = vadd.f32 0.0, %v2294
  %v2296 = vpop.f32.mrb[0].mxu0
  %v2297 = vpop.f32.mrb[0].mxu0
  %v2298 = vadd.f32 0.0, %v2297
  %v2299 = vpop.f32.mrb[0].mxu0
  %2300 = vmatprep.mubr.bf16.mxu0 0
  %2301 = vmatmul.mubr.bf16.gmra.mrb[0].mxu0 %v2245
  %v2302 = vpop.f32.mrb[0].mxu0
  %v2303 = vadd.f32 0.0, %v2302
  %v2304 = vpop.f32.mrb[0].mxu0
  %v2305 = vpop.f32.mrb[0].mxu0
  %v2306 = vadd.f32 0.0, %v2305
  %v2307 = vpop.f32.mrb[0].mxu0
  %2308 = vmatprep.mubr.bf16.mxu0 0
  %2309 = vmatmul.mubr.bf16.gmra.mrb[0].mxu0 %v2246
  %v2310 = vpop.f32.mrb[0].mxu0
  %v2311 = vadd.f32 0.0, %v2310
  %v2312 = vpop.f32.mrb[0].mxu0
  %v2313 = vpop.f32.mrb[0].mxu0
  %v2314 = vadd.f32 0.0, %v2313
  %v2315 = vpop.f32.mrb[0].mxu0
  %2316 = vmatprep.mubr.bf16.mxu0 0
  %2317 = vmatmul.mubr.bf16.gmra.mrb[0].mxu0 %v2247
  %v2318 = vpop.f32.mrb[0].mxu0
  %v2319 = vadd.f32 0.0, %v2318
  %v2320 = vpop.f32.mrb[0].mxu0
  %v2321 = vpop.f32.mrb[0].mxu0
  %v2322 = vadd.f32 0.0, %v2321
  %v2323 = vpop.f32.mrb[0].mxu0
  %2324 = vmatprep.mubr.bf16.mxu0 0
  %2325 = vmatmul.mubr.bf16.gmra.mrb[0].mxu0 %v2248
  %v2326 = vpop.f32.mrb[0].mxu0
  %v2327 = vadd.f32 0.0, %v2326
  %v2328 = vpop.f32.mrb[0].mxu0
  %v2329 = vpop.f32.mrb[0].mxu0
  %v2330 = vadd.f32 0.0, %v2329
  %v2331 = vpop.f32.mrb[0].mxu0
  %2332 = vmatprep.mubr.bf16.mxu0 0
  %2333 = vmatmul.mubr.bf16.gmra.mrb[0].mxu0 %v2249
  %v2334 = vpop.f32.mrb[0].mxu0
  %v2335 = vadd.f32 0.0, %v2334
  %v2336 = vpop.f32.mrb[0].mxu0
  %v2337 = vpop.f32.mrb[0].mxu0
  %v2338 = vadd.f32 0.0, %v2337
  %v2339 = vpop.f32.mrb[0].mxu0
  %2340 = vmatprep.mubr.bf16.mxu0 0
  %2341 = vmatmul.mubr.bf16.gmra.mrb[0].mxu0 %v2250
  %v2342 = vpop.f32.mrb[0].mxu0
  %v2343 = vadd.f32 0.0, %v2342
  %v2344 = vpop.f32.mrb[0].mxu0
  %v2345 = vpop.f32.mrb[0].mxu0
  %v2346 = vadd.f32 0.0, %v2345
  %v2347 = vpop.f32.mrb[0].mxu0
  %2348 = vmatprep.mubr.bf16.mxu0 0
  %2349 = vmatmul.mubr.bf16.gmra.mrb[0].mxu0 %v2251
  %v2350 = vpop.f32.mrb[0].mxu0
  %v2351 = vadd.f32 0.0, %v2350
  %v2352 = vpop.f32.mrb[0].mxu0
  %v2353 = vpop.f32.mrb[0].mxu0
  %v2354 = vadd.f32 0.0, %v2353
  %v2355 = vpop.f32.mrb[0].mxu0
  %2356 = vmatprep.mubr.bf16.mxu0 0
  %2357 = vmatmul.mubr.bf16.gmra.mrb[0].mxu0 %v2252
  %v2358 = vpop.f32.mrb[0].mxu0
  %v2359 = vadd.f32 0.0, %v2358
  %v2360 = vpop.f32.mrb[0].mxu0
  %v2361 = vpop.f32.mrb[0].mxu0
  %v2362 = vadd.f32 0.0, %v2361
  %v2363 = vpop.f32.mrb[0].mxu0
  %2364 = vmatprep.mubr.bf16.mxu0 0
  %2365 = vmatmul.mubr.bf16.gmra.mrb[0].mxu0 %v2253
  %v2366 = vpop.f32.mrb[0].mxu0
  %v2367 = vadd.f32 0.0, %v2366
  %v2368 = vpop.f32.mrb[0].mxu0
  %v2369 = vpop.f32.mrb[0].mxu0
  %v2370 = vadd.f32 0.0, %v2369
  %v2371 = vpop.f32.mrb[0].mxu0
  %2372 = vmatprep.mubr.bf16.mxu0 0
  %2373 = vmatmul.mubr.bf16.gmra.mrb[0].mxu0 %v2254
  %v2374 = vpop.f32.mrb[0].mxu0
  %v2375 = vadd.f32 0.0, %v2374
  %v2376 = vpop.f32.mrb[0].mxu0
  %v2377 = vpop.f32.mrb[0].mxu0
  %v2378 = vadd.f32 0.0, %v2377
  %v2379 = vpop.f32.mrb[0].mxu0
  %2380 = vmatprep.mubr.bf16.mxu0 0
  %2381 = vmatmul.mubr.bf16.gmra.mrb[0].mxu0 %v2255
  %v2382 = vpop.f32.mrb[0].mxu0
  %v2383 = vadd.f32 0.0, %v2382
  %v2384 = vpop.f32.mrb[0].mxu0
  %v2385 = vpop.f32.mrb[0].mxu0
  %v2386 = vadd.f32 0.0, %v2385
  %v2387 = vpop.f32.mrb[0].mxu0
  %2388 = vmatprep.mubr.bf16.mxu0 0
  %2389 = vmatmul.mubr.bf16.gmra.mrb[0].mxu0 %v2256
  %v2390 = vpop.f32.mrb[0].mxu0
  %v2391 = vadd.f32 0.0, %v2390
  %v2392 = vpop.f32.mrb[0].mxu0
  %v2393 = vpop.f32.mrb[0].mxu0
  %v2394 = vadd.f32 0.0, %v2393
  %v2395 = vpop.f32.mrb[0].mxu0
  %2396 = vmatprep.mubr.bf16.mxu0 0
  %2397 = vmatmul.mubr.bf16.gmra.mrb[0].mxu0 %v2257
  %v2398 = vpop.f32.mrb[0].mxu0
  %v2399 = vadd.f32 0.0, %v2398
  %v2400 = vpop.f32.mrb[0].mxu0
  %v2401 = vpop.f32.mrb[0].mxu0
  %v2402 = vadd.f32 0.0, %v2401
  %v2403 = vpop.f32.mrb[0].mxu0
  %2404 = vmatprep.mubr.bf16.mxu0 0
  %2405 = vmatmul.mubr.bf16.gmra.mrb[0].mxu0 %v2258
  %v2406 = vpop.f32.mrb[0].mxu0
  %v2407 = vadd.f32 0.0, %v2406
  %v2408 = vpop.f32.mrb[0].mxu0
  %v2409 = vpop.f32.mrb[0].mxu0
  %v2410 = vadd.f32 0.0, %v2409
  %v2411 = vpop.f32.mrb[0].mxu0
  %2412 = vmatprep.mubr.bf16.mxu0 0
  %2413 = vmatmul.mubr.bf16.gmra.mrb[0].mxu0 %v2259
  %v2414 = vpop.f32.mrb[0].mxu0
  %v2415 = vadd.f32 0.0, %v2414
  %v2416 = vpop.f32.mrb[0].mxu0
  %v2417 = vpop.f32.mrb[0].mxu0
  %v2418 = vadd.f32 0.0, %v2417
  %v2419 = vpop.f32.mrb[0].mxu0
  %2420 = vdwg.mxu0
  %s2421 = scalar_lea.vmem %s2, 40
  %v2422 = vld [vmem:[%s2421] sm:$0xff]
  %v2423 = vadd.f32 %v2295, %v2298
  %v2424 = vadd.f32 %v2423, %v2303
  %v2425 = vadd.f32 %v2424, %v2306
  %v2426 = vadd.f32 %v2425, %v2311
  %v2427 = vadd.f32 %v2426, %v2314
  %v2428 = vadd.f32 %v2427, %v2319
  %v2429 = vadd.f32 %v2428, %v2322
  %v2430 = vadd.f32 %v2429, %v2327
  %v2431 = vadd.f32 %v2430, %v2330
  %v2432 = vadd.f32 %v2431, %v2335
  %v2433 = vadd.f32 %v2432, %v2338
  %v2434 = vadd.f32 %v2433, %v2343
  %v2435 = vadd.f32 %v2434, %v2346
  %v2436 = vadd.f32 %v2435, %v2351
  %v2437 = vadd.f32 %v2436, %v2354
  %v2438 = vadd.f32 %v2437, %v2359
  %v2439 = vadd.f32 %v2438, %v2362
  %v2440 = vadd.f32 %v2439, %v2367
  %v2441 = vadd.f32 %v2440, %v2370
  %v2442 = vadd.f32 %v2441, %v2375
  %v2443 = vadd.f32 %v2442, %v2378
  %v2444 = vadd.f32 %v2443, %v2383
  %v2445 = vadd.f32 %v2444, %v2386
  %v2446 = vadd.f32 %v2445, %v2391
  %v2447 = vadd.f32 %v2446, %v2394
  %v2448 = vadd.f32 %v2447, %v2399
  %v2449 = vadd.f32 %v2448, %v2402
  %v2450 = vadd.f32 %v2449, %v2407
  %v2451 = vadd.f32 %v2450, %v2410
  %v2452 = vadd.f32 %v2451, %v2415
  %v2453 = vadd.f32 %v2452, %v2418
  %v2454 = vrot.slane %v2453, 4
  %v2455 = vadd.f32 %v2453, %v2454
  %v2456 = vrot.slane %v2455, 2
  %v2457 = vadd.f32 %v2455, %v2456
  %v2458 = vrot.slane %v2457, 1
  %v2459 = vadd.f32 %v2457, %v2458
  %v2460 = vmul.f32 %v2295, %v2295
  %v2461 = vmul.f32 %v2298, %v2298
  %v2462 = vmul.f32 %v2303, %v2303
  %v2463 = vmul.f32 %v2306, %v2306
  %v2464 = vmul.f32 %v2311, %v2311
  %v2465 = vmul.f32 %v2314, %v2314
  %v2466 = vmul.f32 %v2319, %v2319
  %v2467 = vmul.f32 %v2322, %v2322
  %v2468 = vmul.f32 %v2327, %v2327
  %v2469 = vmul.f32 %v2330, %v2330
  %v2470 = vmul.f32 %v2335, %v2335
  %v2471 = vmul.f32 %v2338, %v2338
  %v2472 = vmul.f32 %v2343, %v2343
  %v2473 = vmul.f32 %v2346, %v2346
  %v2474 = vmul.f32 %v2351, %v2351
  %v2475 = vmul.f32 %v2354, %v2354
  %v2476 = vmul.f32 %v2359, %v2359
  %v2477 = vmul.f32 %v2362, %v2362
  %v2478 = vmul.f32 %v2367, %v2367
  %v2479 = vmul.f32 %v2370, %v2370
  %v2480 = vmul.f32 %v2375, %v2375
  %v2481 = vmul.f32 %v2378, %v2378
  %v2482 = vmul.f32 %v2383, %v2383
  %v2483 = vmul.f32 %v2386, %v2386
  %v2484 = vmul.f32 %v2391, %v2391
  %v2485 = vmul.f32 %v2394, %v2394
  %v2486 = vmul.f32 %v2399, %v2399
  %v2487 = vmul.f32 %v2402, %v2402
  %v2488 = vmul.f32 %v2407, %v2407
  %v2489 = vmul.f32 %v2410, %v2410
  %v2490 = vmul.f32 %v2415, %v2415
  %v2491 = vmul.f32 %v2418, %v2418
  %v2492 = vadd.f32 %v2460, %v2461
  %v2493 = vadd.f32 %v2492, %v2462
  %v2494 = vadd.f32 %v2493, %v2463
  %v2495 = vadd.f32 %v2494, %v2464
  %v2496 = vadd.f32 %v2495, %v2465
  %v2497 = vadd.f32 %v2496, %v2466
  %v2498 = vadd.f32 %v2497, %v2467
  %v2499 = vadd.f32 %v2498, %v2468
  %v2500 = vadd.f32 %v2499, %v2469
  %v2501 = vadd.f32 %v2500, %v2470
  %v2502 = vadd.f32 %v2501, %v2471
  %v2503 = vadd.f32 %v2502, %v2472
  %v2504 = vadd.f32 %v2503, %v2473
  %v2505 = vadd.f32 %v2504, %v2474
  %v2506 = vadd.f32 %v2505, %v2475
  %v2507 = vadd.f32 %v2506, %v2476
  %v2508 = vadd.f32 %v2507, %v2477
  %v2509 = vadd.f32 %v2508, %v2478
  %v2510 = vadd.f32 %v2509, %v2479
  %v2511 = vadd.f32 %v2510, %v2480
  %v2512 = vadd.f32 %v2511, %v2481
  %v2513 = vadd.f32 %v2512, %v2482
  %v2514 = vadd.f32 %v2513, %v2483
  %v2515 = vadd.f32 %v2514, %v2484
  %v2516 = vadd.f32 %v2515, %v2485
  %v2517 = vadd.f32 %v2516, %v2486
  %v2518 = vadd.f32 %v2517, %v2487
  %v2519 = vadd.f32 %v2518, %v2488
  %v2520 = vadd.f32 %v2519, %v2489
  %v2521 = vadd.f32 %v2520, %v2490
  %v2522 = vadd.f32 %v2521, %v2491
  %v2523 = vrot.slane %v2522, 4
  %v2524 = vadd.f32 %v2522, %v2523
  %v2525 = vrot.slane %v2524, 2
  %v2526 = vadd.f32 %v2524, %v2525
  %v2527 = vrot.slane %v2526, 1
  %v2528 = vadd.f32 %v2526, %v2527
  %v2529 = vmul.f32 %v2459, 0.00390625
  %v2530 = vmul.f32 %v2528, 0.00390625
  %v2531 = vmul.f32 %v2529, %v2529
  %v2532 = vsub.f32 %v2530, %v2531
  %v2533 = vmax.f32 %v2532, 0.0
  %v2534 = vadd.f32 %v2533, 1e-05
  %v2535 = vrsqrt.pop %v2534
  %v2536 = vmul.f32 %v2422, %v2535
  %v2537 = vmul.f32 %v2529, %v2536
  %v2539 = vrot.slane %v2537, 7
  %v2541 = vsub.f32 %v2422, %v2539
  %v2542 = vlaneseq
  %v2543 = vshrl.u32 %v2542, 7
  %v2544 = vsub.s32 1, %v2543
  %v2545 = vrot.slane %v2536, %v2544
  %v2546 = vmul.f32 %v2295, %v2545
  %v2547 = vmul.f32 %v2298, %v2545
  %v2548 = vmul.f32 %v2303, %v2545
  %v2549 = vmul.f32 %v2306, %v2545
  %v2550 = vmul.f32 %v2311, %v2545
  %v2551 = vmul.f32 %v2314, %v2545
  %v2552 = vmul.f32 %v2319, %v2545
  %v2553 = vmul.f32 %v2322, %v2545
  %v2554 = vmul.f32 %v2327, %v2545
  %v2555 = vmul.f32 %v2330, %v2545
  %v2556 = vmul.f32 %v2335, %v2545
  %v2557 = vmul.f32 %v2338, %v2545
  %v2558 = vmul.f32 %v2343, %v2545
  %v2559 = vmul.f32 %v2346, %v2545
  %v2560 = vmul.f32 %v2351, %v2545
  %v2561 = vmul.f32 %v2354, %v2545
  %v2562 = vmul.f32 %v2359, %v2545
  %v2563 = vmul.f32 %v2362, %v2545
  %v2564 = vmul.f32 %v2367, %v2545
  %v2565 = vmul.f32 %v2370, %v2545
  %v2566 = vmul.f32 %v2375, %v2545
  %v2567 = vmul.f32 %v2378, %v2545
  %v2568 = vmul.f32 %v2383, %v2545
  %v2569 = vmul.f32 %v2386, %v2545
  %v2570 = vmul.f32 %v2391, %v2545
  %v2571 = vmul.f32 %v2394, %v2545
  %v2572 = vmul.f32 %v2399, %v2545
  %v2573 = vmul.f32 %v2402, %v2545
  %v2574 = vmul.f32 %v2407, %v2545
  %v2575 = vmul.f32 %v2410, %v2545
  %v2576 = vmul.f32 %v2415, %v2545
  %v2577 = vmul.f32 %v2418, %v2545
  %v2578 = vlaneseq
  %v2579 = vshrl.u32 %v2578, 7
  %v2580 = vsub.s32 2, %v2579
  %v2581 = vrot.slane %v2541, %v2580
  %v2582 = vadd.f32 %v2546, %v2581
  %v2583 = vadd.f32 %v2547, %v2581
  %v2584 = vadd.f32 %v2548, %v2581
  %v2585 = vadd.f32 %v2549, %v2581
  %v2586 = vadd.f32 %v2550, %v2581
  %v2587 = vadd.f32 %v2551, %v2581
  %v2588 = vadd.f32 %v2552, %v2581
  %v2589 = vadd.f32 %v2553, %v2581
  %v2590 = vadd.f32 %v2554, %v2581
  %v2591 = vadd.f32 %v2555, %v2581
  %v2592 = vadd.f32 %v2556, %v2581
  %v2593 = vadd.f32 %v2557, %v2581
  %v2594 = vadd.f32 %v2558, %v2581
  %v2595 = vadd.f32 %v2559, %v2581
  %v2596 = vadd.f32 %v2560, %v2581
  %v2597 = vadd.f32 %v2561, %v2581
  %v2598 = vadd.f32 %v2562, %v2581
  %v2599 = vadd.f32 %v2563, %v2581
  %v2600 = vadd.f32 %v2564, %v2581
  %v2601 = vadd.f32 %v2565, %v2581
  %v2602 = vadd.f32 %v2566, %v2581
  %v2603 = vadd.f32 %v2567, %v2581
  %v2604 = vadd.f32 %v2568, %v2581
  %v2605 = vadd.f32 %v2569, %v2581
  %v2606 = vadd.f32 %v2570, %v2581
  %v2607 = vadd.f32 %v2571, %v2581
  %v2608 = vadd.f32 %v2572, %v2581
  %v2609 = vadd.f32 %v2573, %v2581
  %v2610 = vadd.f32 %v2574, %v2581
  %v2611 = vadd.f32 %v2575, %v2581
  %v2612 = vadd.f32 %v2576, %v2581
  %v2613 = vadd.f32 %v2577, %v2581
  %v2614 = vmax.f32 %v2582, 0.0
  %v2615 = vmax.f32 %v2583, 0.0
  %v2616 = vmax.f32 %v2584, 0.0
  %v2617 = vmax.f32 %v2585, 0.0
  %v2618 = vmax.f32 %v2586, 0.0
  %v2619 = vmax.f32 %v2587, 0.0
  %v2620 = vmax.f32 %v2588, 0.0
  %v2621 = vmax.f32 %v2589, 0.0
  %v2622 = vmax.f32 %v2590, 0.0
  %v2623 = vmax.f32 %v2591, 0.0
  %v2624 = vmax.f32 %v2592, 0.0
  %v2625 = vmax.f32 %v2593, 0.0
  %v2626 = vmax.f32 %v2594, 0.0
  %v2627 = vmax.f32 %v2595, 0.0
  %v2628 = vmax.f32 %v2596, 0.0
  %v2629 = vmax.f32 %v2597, 0.0
  %v2630 = vmax.f32 %v2598, 0.0
  %v2631 = vmax.f32 %v2599, 0.0
  %v2632 = vmax.f32 %v2600, 0.0
  %v2633 = vmax.f32 %v2601, 0.0
  %v2634 = vmax.f32 %v2602, 0.0
  %v2635 = vmax.f32 %v2603, 0.0
  %v2636 = vmax.f32 %v2604, 0.0
  %v2637 = vmax.f32 %v2605, 0.0
  %v2638 = vmax.f32 %v2606, 0.0
  %v2639 = vmax.f32 %v2607, 0.0
  %v2640 = vmax.f32 %v2608, 0.0
  %v2641 = vmax.f32 %v2609, 0.0
  %v2642 = vmax.f32 %v2610, 0.0
  %v2643 = vmax.f32 %v2611, 0.0
  %v2644 = vmax.f32 %v2612, 0.0
  %v2645 = vmax.f32 %v2613, 0.0
  %s2646 = sshll.u32 %s57, 4
  %2647 = dma.done [#allocation3], %s2646
  %s2648 = scalar_lea.hbm %s1, 7168
  // Predicated region
  $region38: #{autoencoder_forward.1} parent=0 // pred_check
    _
  $region39: #{autoencoder_forward.1} parent=0 // pred_check_branch
    %2650 = sbr.rel target = $region41
  $region40: #{autoencoder_forward.1} parent=0 // pred_region
    %2651 = sst [smem:[#allocation6]] [#allocation21]
    %2652 = sst [smem:[#allocation7]] [#allocation20]
  $region41: #{autoencoder_forward.1} parent=0 // pred_fallthru
    _
  %2654 = shalt.err (0)
  %s2656 = sshll.u32 %s61, 4
  %s2657 = int_to_ptr.vmem [resolvable:$true] %s2656
  %2659 = dma.hbm_to_vmem [thread:$0]  %s2648, 1024, %s2657, %s62
  %v2660 = vld [vmem:[#allocation2] sm:$0xff]
  %v2661 = vld [vmem:[#allocation2 + $0x8] sm:$0xff]
  %v2662 = vld [vmem:[#allocation2 + $0x10] sm:$0xff]
  %v2663 = vld [vmem:[#allocation2 + $0x18] sm:$0xff]
  %v2664 = vld [vmem:[#allocation2 + $0x20] sm:$0xff]
  %v2665 = vld [vmem:[#allocation2 + $0x28] sm:$0xff]
  %v2666 = vld [vmem:[#allocation2 + $0x30] sm:$0xff]
  %v2667 = vld [vmem:[#allocation2 + $0x38] sm:$0xff]
  %v2668 = vpack.c.bf16 %v2615, %v2614
  %v2669 = vpack.c.bf16 %v2617, %v2616
  %v2670 = vpack.c.bf16 %v2619, %v2618
  %v2671 = vpack.c.bf16 %v2621, %v2620
  %v2672 = vpack.c.bf16 %v2623, %v2622
  %v2673 = vpack.c.bf16 %v2625, %v2624
  %v2674 = vpack.c.bf16 %v2627, %v2626
  %v2675 = vpack.c.bf16 %v2629, %v2628
  %v2676 = vpack.c.bf16 %v2631, %v2630
  %v2677 = vpack.c.bf16 %v2633, %v2632
  %v2678 = vpack.c.bf16 %v2635, %v2634
  %v2679 = vpack.c.bf16 %v2637, %v2636
  %v2680 = vpack.c.bf16 %v2639, %v2638
  %v2681 = vpack.c.bf16 %v2641, %v2640
  %v2682 = vpack.c.bf16 %v2643, %v2642
  %v2683 = vpack.c.bf16 %v2645, %v2644
  %2684 = vmatprep.subr.bf16.mxu0 0
  %2685 = vmatpush1.bf16.msra.mxu0 %v2660
  %2686 = vmatprep.subr.bf16.mxu0 0
  %2687 = vmatpush1.bf16.msra.mxu0 %v2661
  %2688 = vmatprep.subr.bf16.mxu0 0
  %2689 = vmatpush1.bf16.msra.mxu0 %v2662
  %2690 = vmatprep.subr.bf16.mxu0 0
  %2691 = vmatpush1.bf16.msra.mxu0 %v2663
  %2692 = vmatprep.subr.bf16.mxu0 0
  %2693 = vmatpush1.bf16.msra.mxu0 %v2664
  %2694 = vmatprep.subr.bf16.mxu0 0
  %2695 = vmatpush1.bf16.msra.mxu0 %v2665
  %2696 = vmatprep.subr.bf16.mxu0 0
  %2697 = vmatpush1.bf16.msra.mxu0 %v2666
  %2698 = vmatprep.subr.bf16.mxu0 0
  %2699 = vmatpush1.bf16.msra.mxu0 %v2667
  %2700 = vmatprep.subr.bf16.mxu0 0
  %2701 = vmatpush1.bf16.msra.mxu0 0
  %2702 = vmatprep.subr.bf16.mxu0 0
  %2703 = vmatpush1.bf16.msra.mxu0 0
  %2704 = vmatprep.subr.bf16.mxu0 0
  %2705 = vmatpush1.bf16.msra.mxu0 0
  %2706 = vmatprep.subr.bf16.mxu0 0
  %2707 = vmatpush1.bf16.msra.mxu0 0
  %2708 = vmatprep.subr.bf16.mxu0 0
  %2709 = vmatpush1.bf16.msra.mxu0 0
  %2710 = vmatprep.subr.bf16.mxu0 0
  %2711 = vmatpush1.bf16.msra.mxu0 0
  %2712 = vmatprep.subr.bf16.mxu0 0
  %2713 = vmatpush1.bf16.msra.mxu0 0
  %2714 = vmatprep.subr.bf16.mxu0 0
  %2715 = vmatpush1.bf16.msra.mxu0 0
  %2716 = vmatprep.mubr.bf16.mxu0 0
  %2717 = vmatmul.mubr.bf16.gmra.mrb[0].mxu0 %v2668
  %v2718 = vpop.f32.mrb[0].mxu0
  %v2719 = vadd.f32 0.0, %v2718
  %v2720 = vpop.f32.mrb[0].mxu0
  %v2721 = vpop.f32.mrb[0].mxu0
  %v2722 = vadd.f32 0.0, %v2721
  %v2723 = vpop.f32.mrb[0].mxu0
  %2724 = vmatprep.mubr.bf16.mxu0 0
  %2725 = vmatmul.mubr.bf16.gmra.mrb[0].mxu0 %v2669
  %v2726 = vpop.f32.mrb[0].mxu0
  %v2727 = vadd.f32 0.0, %v2726
  %v2728 = vpop.f32.mrb[0].mxu0
  %v2729 = vpop.f32.mrb[0].mxu0
  %v2730 = vadd.f32 0.0, %v2729
  %v2731 = vpop.f32.mrb[0].mxu0
  %2732 = vmatprep.mubr.bf16.mxu0 0
  %2733 = vmatmul.mubr.bf16.gmra.mrb[0].mxu0 %v2670
  %v2734 = vpop.f32.mrb[0].mxu0
  %v2735 = vadd.f32 0.0, %v2734
  %v2736 = vpop.f32.mrb[0].mxu0
  %v2737 = vpop.f32.mrb[0].mxu0
  %v2738 = vadd.f32 0.0, %v2737
  %v2739 = vpop.f32.mrb[0].mxu0
  %2740 = vmatprep.mubr.bf16.mxu0 0
  %2741 = vmatmul.mubr.bf16.gmra.mrb[0].mxu0 %v2671
  %v2742 = vpop.f32.mrb[0].mxu0
  %v2743 = vadd.f32 0.0, %v2742
  %v2744 = vpop.f32.mrb[0].mxu0
  %v2745 = vpop.f32.mrb[0].mxu0
  %v2746 = vadd.f32 0.0, %v2745
  %v2747 = vpop.f32.mrb[0].mxu0
  %2748 = vmatprep.mubr.bf16.mxu0 0
  %2749 = vmatmul.mubr.bf16.gmra.mrb[0].mxu0 %v2672
  %v2750 = vpop.f32.mrb[0].mxu0
  %v2751 = vadd.f32 0.0, %v2750
  %v2752 = vpop.f32.mrb[0].mxu0
  %v2753 = vpop.f32.mrb[0].mxu0
  %v2754 = vadd.f32 0.0, %v2753
  %v2755 = vpop.f32.mrb[0].mxu0
  %2756 = vmatprep.mubr.bf16.mxu0 0
  %2757 = vmatmul.mubr.bf16.gmra.mrb[0].mxu0 %v2673
  %v2758 = vpop.f32.mrb[0].mxu0
  %v2759 = vadd.f32 0.0, %v2758
  %v2760 = vpop.f32.mrb[0].mxu0
  %v2761 = vpop.f32.mrb[0].mxu0
  %v2762 = vadd.f32 0.0, %v2761
  %v2763 = vpop.f32.mrb[0].mxu0
  %2764 = vmatprep.mubr.bf16.mxu0 0
  %2765 = vmatmul.mubr.bf16.gmra.mrb[0].mxu0 %v2674
  %v2766 = vpop.f32.mrb[0].mxu0
  %v2767 = vadd.f32 0.0, %v2766
  %v2768 = vpop.f32.mrb[0].mxu0
  %v2769 = vpop.f32.mrb[0].mxu0
  %v2770 = vadd.f32 0.0, %v2769
  %v2771 = vpop.f32.mrb[0].mxu0
  %2772 = vmatprep.mubr.bf16.mxu0 0
  %2773 = vmatmul.mubr.bf16.gmra.mrb[0].mxu0 %v2675
  %v2774 = vpop.f32.mrb[0].mxu0
  %v2775 = vadd.f32 0.0, %v2774
  %v2776 = vpop.f32.mrb[0].mxu0
  %v2777 = vpop.f32.mrb[0].mxu0
  %v2778 = vadd.f32 0.0, %v2777
  %v2779 = vpop.f32.mrb[0].mxu0
  %2780 = vmatprep.mubr.bf16.mxu0 0
  %2781 = vmatmul.mubr.bf16.gmra.mrb[0].mxu0 %v2676
  %v2782 = vpop.f32.mrb[0].mxu0
  %v2783 = vadd.f32 0.0, %v2782
  %v2784 = vpop.f32.mrb[0].mxu0
  %v2785 = vpop.f32.mrb[0].mxu0
  %v2786 = vadd.f32 0.0, %v2785
  %v2787 = vpop.f32.mrb[0].mxu0
  %2788 = vmatprep.mubr.bf16.mxu0 0
  %2789 = vmatmul.mubr.bf16.gmra.mrb[0].mxu0 %v2677
  %v2790 = vpop.f32.mrb[0].mxu0
  %v2791 = vadd.f32 0.0, %v2790
  %v2792 = vpop.f32.mrb[0].mxu0
  %v2793 = vpop.f32.mrb[0].mxu0
  %v2794 = vadd.f32 0.0, %v2793
  %v2795 = vpop.f32.mrb[0].mxu0
  %2796 = vmatprep.mubr.bf16.mxu0 0
  %2797 = vmatmul.mubr.bf16.gmra.mrb[0].mxu0 %v2678
  %v2798 = vpop.f32.mrb[0].mxu0
  %v2799 = vadd.f32 0.0, %v2798
  %v2800 = vpop.f32.mrb[0].mxu0
  %v2801 = vpop.f32.mrb[0].mxu0
  %v2802 = vadd.f32 0.0, %v2801
  %v2803 = vpop.f32.mrb[0].mxu0
  %2804 = vmatprep.mubr.bf16.mxu0 0
  %2805 = vmatmul.mubr.bf16.gmra.mrb[0].mxu0 %v2679
  %v2806 = vpop.f32.mrb[0].mxu0
  %v2807 = vadd.f32 0.0, %v2806
  %v2808 = vpop.f32.mrb[0].mxu0
  %v2809 = vpop.f32.mrb[0].mxu0
  %v2810 = vadd.f32 0.0, %v2809
  %v2811 = vpop.f32.mrb[0].mxu0
  %2812 = vmatprep.mubr.bf16.mxu0 0
  %2813 = vmatmul.mubr.bf16.gmra.mrb[0].mxu0 %v2680
  %v2814 = vpop.f32.mrb[0].mxu0
  %v2815 = vadd.f32 0.0, %v2814
  %v2816 = vpop.f32.mrb[0].mxu0
  %v2817 = vpop.f32.mrb[0].mxu0
  %v2818 = vadd.f32 0.0, %v2817
  %v2819 = vpop.f32.mrb[0].mxu0
  %2820 = vmatprep.mubr.bf16.mxu0 0
  %2821 = vmatmul.mubr.bf16.gmra.mrb[0].mxu0 %v2681
  %v2822 = vpop.f32.mrb[0].mxu0
  %v2823 = vadd.f32 0.0, %v2822
  %v2824 = vpop.f32.mrb[0].mxu0
  %v2825 = vpop.f32.mrb[0].mxu0
  %v2826 = vadd.f32 0.0, %v2825
  %v2827 = vpop.f32.mrb[0].mxu0
  %2828 = vmatprep.mubr.bf16.mxu0 0
  %2829 = vmatmul.mubr.bf16.gmra.mrb[0].mxu0 %v2682
  %v2830 = vpop.f32.mrb[0].mxu0
  %v2831 = vadd.f32 0.0, %v2830
  %v2832 = vpop.f32.mrb[0].mxu0
  %v2833 = vpop.f32.mrb[0].mxu0
  %v2834 = vadd.f32 0.0, %v2833
  %v2835 = vpop.f32.mrb[0].mxu0
  %2836 = vmatprep.mubr.bf16.mxu0 0
  %2837 = vmatmul.mubr.bf16.gmra.mrb[0].mxu0 %v2683
  %v2838 = vpop.f32.mrb[0].mxu0
  %v2839 = vadd.f32 0.0, %v2838
  %v2840 = vpop.f32.mrb[0].mxu0
  %v2841 = vpop.f32.mrb[0].mxu0
  %v2842 = vadd.f32 0.0, %v2841
  %v2843 = vpop.f32.mrb[0].mxu0
  %2844 = vdwg.mxu0
  %s2845 = scalar_lea.vmem %s2, 48
  %v2846 = vld [vmem:[%s2845] sm:$0xff]
  %v2847 = vadd.f32 %v2719, %v2722
  %v2848 = vadd.f32 %v2847, %v2727
  %v2849 = vadd.f32 %v2848, %v2730
  %v2850 = vadd.f32 %v2849, %v2735
  %v2851 = vadd.f32 %v2850, %v2738
  %v2852 = vadd.f32 %v2851, %v2743
  %v2853 = vadd.f32 %v2852, %v2746
  %v2854 = vadd.f32 %v2853, %v2751
  %v2855 = vadd.f32 %v2854, %v2754
  %v2856 = vadd.f32 %v2855, %v2759
  %v2857 = vadd.f32 %v2856, %v2762
  %v2858 = vadd.f32 %v2857, %v2767
  %v2859 = vadd.f32 %v2858, %v2770
  %v2860 = vadd.f32 %v2859, %v2775
  %v2861 = vadd.f32 %v2860, %v2778
  %v2862 = vadd.f32 %v2861, %v2783
  %v2863 = vadd.f32 %v2862, %v2786
  %v2864 = vadd.f32 %v2863, %v2791
  %v2865 = vadd.f32 %v2864, %v2794
  %v2866 = vadd.f32 %v2865, %v2799
  %v2867 = vadd.f32 %v2866, %v2802
  %v2868 = vadd.f32 %v2867, %v2807
  %v2869 = vadd.f32 %v2868, %v2810
  %v2870 = vadd.f32 %v2869, %v2815
  %v2871 = vadd.f32 %v2870, %v2818
  %v2872 = vadd.f32 %v2871, %v2823
  %v2873 = vadd.f32 %v2872, %v2826
  %v2874 = vadd.f32 %v2873, %v2831
  %v2875 = vadd.f32 %v2874, %v2834
  %v2876 = vadd.f32 %v2875, %v2839
  %v2877 = vadd.f32 %v2876, %v2842
  %v2878 = vrot.slane %v2877, 4
  %v2879 = vadd.f32 %v2877, %v2878
  %v2880 = vrot.slane %v2879, 2
  %v2881 = vadd.f32 %v2879, %v2880
  %v2882 = vrot.slane %v2881, 1
  %v2883 = vadd.f32 %v2881, %v2882
  %v2884 = vmul.f32 %v2719, %v2719
  %v2885 = vmul.f32 %v2722, %v2722
  %v2886 = vmul.f32 %v2727, %v2727
  %v2887 = vmul.f32 %v2730, %v2730
  %v2888 = vmul.f32 %v2735, %v2735
  %v2889 = vmul.f32 %v2738, %v2738
  %v2890 = vmul.f32 %v2743, %v2743
  %v2891 = vmul.f32 %v2746, %v2746
  %v2892 = vmul.f32 %v2751, %v2751
  %v2893 = vmul.f32 %v2754, %v2754
  %v2894 = vmul.f32 %v2759, %v2759
  %v2895 = vmul.f32 %v2762, %v2762
  %v2896 = vmul.f32 %v2767, %v2767
  %v2897 = vmul.f32 %v2770, %v2770
  %v2898 = vmul.f32 %v2775, %v2775
  %v2899 = vmul.f32 %v2778, %v2778
  %v2900 = vmul.f32 %v2783, %v2783
  %v2901 = vmul.f32 %v2786, %v2786
  %v2902 = vmul.f32 %v2791, %v2791
  %v2903 = vmul.f32 %v2794, %v2794
  %v2904 = vmul.f32 %v2799, %v2799
  %v2905 = vmul.f32 %v2802, %v2802
  %v2906 = vmul.f32 %v2807, %v2807
  %v2907 = vmul.f32 %v2810, %v2810
  %v2908 = vmul.f32 %v2815, %v2815
  %v2909 = vmul.f32 %v2818, %v2818
  %v2910 = vmul.f32 %v2823, %v2823
  %v2911 = vmul.f32 %v2826, %v2826
  %v2912 = vmul.f32 %v2831, %v2831
  %v2913 = vmul.f32 %v2834, %v2834
  %v2914 = vmul.f32 %v2839, %v2839
  %v2915 = vmul.f32 %v2842, %v2842
  %v2916 = vadd.f32 %v2884, %v2885
  %v2917 = vadd.f32 %v2916, %v2886
  %v2918 = vadd.f32 %v2917, %v2887
  %v2919 = vadd.f32 %v2918, %v2888
  %v2920 = vadd.f32 %v2919, %v2889
  %v2921 = vadd.f32 %v2920, %v2890
  %v2922 = vadd.f32 %v2921, %v2891
  %v2923 = vadd.f32 %v2922, %v2892
  %v2924 = vadd.f32 %v2923, %v2893
  %v2925 = vadd.f32 %v2924, %v2894
  %v2926 = vadd.f32 %v2925, %v2895
  %v2927 = vadd.f32 %v2926, %v2896
  %v2928 = vadd.f32 %v2927, %v2897
  %v2929 = vadd.f32 %v2928, %v2898
  %v2930 = vadd.f32 %v2929, %v2899
  %v2931 = vadd.f32 %v2930, %v2900
  %v2932 = vadd.f32 %v2931, %v2901
  %v2933 = vadd.f32 %v2932, %v2902
  %v2934 = vadd.f32 %v2933, %v2903
  %v2935 = vadd.f32 %v2934, %v2904
  %v2936 = vadd.f32 %v2935, %v2905
  %v2937 = vadd.f32 %v2936, %v2906
  %v2938 = vadd.f32 %v2937, %v2907
  %v2939 = vadd.f32 %v2938, %v2908
  %v2940 = vadd.f32 %v2939, %v2909
  %v2941 = vadd.f32 %v2940, %v2910
  %v2942 = vadd.f32 %v2941, %v2911
  %v2943 = vadd.f32 %v2942, %v2912
  %v2944 = vadd.f32 %v2943, %v2913
  %v2945 = vadd.f32 %v2944, %v2914
  %v2946 = vadd.f32 %v2945, %v2915
  %v2947 = vrot.slane %v2946, 4
  %v2948 = vadd.f32 %v2946, %v2947
  %v2949 = vrot.slane %v2948, 2
  %v2950 = vadd.f32 %v2948, %v2949
  %v2951 = vrot.slane %v2950, 1
  %v2952 = vadd.f32 %v2950, %v2951
  %v2953 = vmul.f32 %v2883, 0.00390625
  %v2954 = vmul.f32 %v2952, 0.00390625
  %v2955 = vmul.f32 %v2953, %v2953
  %v2956 = vsub.f32 %v2954, %v2955
  %v2957 = vmax.f32 %v2956, 0.0
  %v2958 = vadd.f32 %v2957, 1e-05
  %v2959 = vrsqrt.pop %v2958
  %v2960 = vmul.f32 %v2846, %v2959
  %v2961 = vmul.f32 %v2953, %v2960
  %v2963 = vrot.slane %v2961, 7
  %v2965 = vsub.f32 %v2846, %v2963
  %v2966 = vlaneseq
  %v2967 = vshrl.u32 %v2966, 7
  %v2968 = vsub.s32 1, %v2967
  %v2969 = vrot.slane %v2960, %v2968
  %v2970 = vmul.f32 %v2719, %v2969
  %v2971 = vmul.f32 %v2722, %v2969
  %v2972 = vmul.f32 %v2727, %v2969
  %v2973 = vmul.f32 %v2730, %v2969
  %v2974 = vmul.f32 %v2735, %v2969
  %v2975 = vmul.f32 %v2738, %v2969
  %v2976 = vmul.f32 %v2743, %v2969
  %v2977 = vmul.f32 %v2746, %v2969
  %v2978 = vmul.f32 %v2751, %v2969
  %v2979 = vmul.f32 %v2754, %v2969
  %v2980 = vmul.f32 %v2759, %v2969
  %v2981 = vmul.f32 %v2762, %v2969
  %v2982 = vmul.f32 %v2767, %v2969
  %v2983 = vmul.f32 %v2770, %v2969
  %v2984 = vmul.f32 %v2775, %v2969
  %v2985 = vmul.f32 %v2778, %v2969
  %v2986 = vmul.f32 %v2783, %v2969
  %v2987 = vmul.f32 %v2786, %v2969
  %v2988 = vmul.f32 %v2791, %v2969
  %v2989 = vmul.f32 %v2794, %v2969
  %v2990 = vmul.f32 %v2799, %v2969
  %v2991 = vmul.f32 %v2802, %v2969
  %v2992 = vmul.f32 %v2807, %v2969
  %v2993 = vmul.f32 %v2810, %v2969
  %v2994 = vmul.f32 %v2815, %v2969
  %v2995 = vmul.f32 %v2818, %v2969
  %v2996 = vmul.f32 %v2823, %v2969
  %v2997 = vmul.f32 %v2826, %v2969
  %v2998 = vmul.f32 %v2831, %v2969
  %v2999 = vmul.f32 %v2834, %v2969
  %v3000 = vmul.f32 %v2839, %v2969
  %v3001 = vmul.f32 %v2842, %v2969
  %v3002 = vlaneseq
  %v3003 = vshrl.u32 %v3002, 7
  %v3004 = vsub.s32 2, %v3003
  %v3005 = vrot.slane %v2965, %v3004
  %v3006 = vadd.f32 %v2970, %v3005
  %v3007 = vadd.f32 %v2971, %v3005
  %v3008 = vadd.f32 %v2972, %v3005
  %v3009 = vadd.f32 %v2973, %v3005
  %v3010 = vadd.f32 %v2974, %v3005
  %v3011 = vadd.f32 %v2975, %v3005
  %v3012 = vadd.f32 %v2976, %v3005
  %v3013 = vadd.f32 %v2977, %v3005
  %v3014 = vadd.f32 %v2978, %v3005
  %v3015 = vadd.f32 %v2979, %v3005
  %v3016 = vadd.f32 %v2980, %v3005
  %v3017 = vadd.f32 %v2981, %v3005
  %v3018 = vadd.f32 %v2982, %v3005
  %v3019 = vadd.f32 %v2983, %v3005
  %v3020 = vadd.f32 %v2984, %v3005
  %v3021 = vadd.f32 %v2985, %v3005
  %v3022 = vadd.f32 %v2986, %v3005
  %v3023 = vadd.f32 %v2987, %v3005
  %v3024 = vadd.f32 %v2988, %v3005
  %v3025 = vadd.f32 %v2989, %v3005
  %v3026 = vadd.f32 %v2990, %v3005
  %v3027 = vadd.f32 %v2991, %v3005
  %v3028 = vadd.f32 %v2992, %v3005
  %v3029 = vadd.f32 %v2993, %v3005
  %v3030 = vadd.f32 %v2994, %v3005
  %v3031 = vadd.f32 %v2995, %v3005
  %v3032 = vadd.f32 %v2996, %v3005
  %v3033 = vadd.f32 %v2997, %v3005
  %v3034 = vadd.f32 %v2998, %v3005
  %v3035 = vadd.f32 %v2999, %v3005
  %v3036 = vadd.f32 %v3000, %v3005
  %v3037 = vadd.f32 %v3001, %v3005
  %v3038 = vmax.f32 %v3006, 0.0
  %v3039 = vmax.f32 %v3007, 0.0
  %v3040 = vmax.f32 %v3008, 0.0
  %v3041 = vmax.f32 %v3009, 0.0
  %v3042 = vmax.f32 %v3010, 0.0
  %v3043 = vmax.f32 %v3011, 0.0
  %v3044 = vmax.f32 %v3012, 0.0
  %v3045 = vmax.f32 %v3013, 0.0
  %v3046 = vmax.f32 %v3014, 0.0
  %v3047 = vmax.f32 %v3015, 0.0
  %v3048 = vmax.f32 %v3016, 0.0
  %v3049 = vmax.f32 %v3017, 0.0
  %v3050 = vmax.f32 %v3018, 0.0
  %v3051 = vmax.f32 %v3019, 0.0
  %v3052 = vmax.f32 %v3020, 0.0
  %v3053 = vmax.f32 %v3021, 0.0
  %v3054 = vmax.f32 %v3022, 0.0
  %v3055 = vmax.f32 %v3023, 0.0
  %v3056 = vmax.f32 %v3024, 0.0
  %v3057 = vmax.f32 %v3025, 0.0
  %v3058 = vmax.f32 %v3026, 0.0
  %v3059 = vmax.f32 %v3027, 0.0
  %v3060 = vmax.f32 %v3028, 0.0
  %v3061 = vmax.f32 %v3029, 0.0
  %v3062 = vmax.f32 %v3030, 0.0
  %v3063 = vmax.f32 %v3031, 0.0
  %v3064 = vmax.f32 %v3032, 0.0
  %v3065 = vmax.f32 %v3033, 0.0
  %v3066 = vmax.f32 %v3034, 0.0
  %v3067 = vmax.f32 %v3035, 0.0
  %v3068 = vmax.f32 %v3036, 0.0
  %v3069 = vmax.f32 %v3037, 0.0
  %s3070 = sshll.u32 %s57, 4
  %3071 = dma.done %s62, %s3070
  %s3072 = scalar_lea.hbm %s1, 8192
  // Predicated region
  $region42: #{autoencoder_forward.1} parent=0 // pred_check
    _
  $region43: #{autoencoder_forward.1} parent=0 // pred_check_branch
    %3074 = sbr.rel target = $region45
  $region44: #{autoencoder_forward.1} parent=0 // pred_region
    %3075 = sst [smem:[#allocation6]] [#allocation23]
    %3076 = sst [smem:[#allocation7]] [#allocation22]
  $region45: #{autoencoder_forward.1} parent=0 // pred_fallthru
    _
  %3078 = shalt.err (0)
  %s3080 = sshll.u32 [#allocation2], 4
  %s3081 = int_to_ptr.vmem [resolvable:$true] %s3080
  %3083 = dma.hbm_to_vmem [thread:$0]  %s3072, 1024, %s3081, [#allocation3]
  %v3084 = vld [vmem:[%s61] sm:$0xff]
  %v3085 = vld [vmem:[%s61 + $0x8] sm:$0xff]
  %v3086 = vld [vmem:[%s61 + $0x10] sm:$0xff]
  %v3087 = vld [vmem:[%s61 + $0x18] sm:$0xff]
  %v3088 = vld [vmem:[%s61 + $0x20] sm:$0xff]
  %v3089 = vld [vmem:[%s61 + $0x28] sm:$0xff]
  %v3090 = vld [vmem:[%s61 + $0x30] sm:$0xff]
  %v3091 = vld [vmem:[%s61 + $0x38] sm:$0xff]
  %v3092 = vpack.c.bf16 %v3039, %v3038
  %v3093 = vpack.c.bf16 %v3041, %v3040
  %v3094 = vpack.c.bf16 %v3043, %v3042
  %v3095 = vpack.c.bf16 %v3045, %v3044
  %v3096 = vpack.c.bf16 %v3047, %v3046
  %v3097 = vpack.c.bf16 %v3049, %v3048
  %v3098 = vpack.c.bf16 %v3051, %v3050
  %v3099 = vpack.c.bf16 %v3053, %v3052
  %v3100 = vpack.c.bf16 %v3055, %v3054
  %v3101 = vpack.c.bf16 %v3057, %v3056
  %v3102 = vpack.c.bf16 %v3059, %v3058
  %v3103 = vpack.c.bf16 %v3061, %v3060
  %v3104 = vpack.c.bf16 %v3063, %v3062
  %v3105 = vpack.c.bf16 %v3065, %v3064
  %v3106 = vpack.c.bf16 %v3067, %v3066
  %v3107 = vpack.c.bf16 %v3069, %v3068
  %3108 = vmatprep.subr.bf16.mxu0 0
  %3109 = vmatpush1.bf16.msra.mxu0 %v3084
  %3110 = vmatprep.subr.bf16.mxu0 0
  %3111 = vmatpush1.bf16.msra.mxu0 %v3085
  %3112 = vmatprep.subr.bf16.mxu0 0
  %3113 = vmatpush1.bf16.msra.mxu0 %v3086
  %3114 = vmatprep.subr.bf16.mxu0 0
  %3115 = vmatpush1.bf16.msra.mxu0 %v3087
  %3116 = vmatprep.subr.bf16.mxu0 0
  %3117 = vmatpush1.bf16.msra.mxu0 %v3088
  %3118 = vmatprep.subr.bf16.mxu0 0
  %3119 = vmatpush1.bf16.msra.mxu0 %v3089
  %3120 = vmatprep.subr.bf16.mxu0 0
  %3121 = vmatpush1.bf16.msra.mxu0 %v3090
  %3122 = vmatprep.subr.bf16.mxu0 0
  %3123 = vmatpush1.bf16.msra.mxu0 %v3091
  %3124 = vmatprep.subr.bf16.mxu0 0
  %3125 = vmatpush1.bf16.msra.mxu0 0
  %3126 = vmatprep.subr.bf16.mxu0 0
  %3127 = vmatpush1.bf16.msra.mxu0 0
  %3128 = vmatprep.subr.bf16.mxu0 0
  %3129 = vmatpush1.bf16.msra.mxu0 0
  %3130 = vmatprep.subr.bf16.mxu0 0
  %3131 = vmatpush1.bf16.msra.mxu0 0
  %3132 = vmatprep.subr.bf16.mxu0 0
  %3133 = vmatpush1.bf16.msra.mxu0 0
  %3134 = vmatprep.subr.bf16.mxu0 0
  %3135 = vmatpush1.bf16.msra.mxu0 0
  %3136 = vmatprep.subr.bf16.mxu0 0
  %3137 = vmatpush1.bf16.msra.mxu0 0
  %3138 = vmatprep.subr.bf16.mxu0 0
  %3139 = vmatpush1.bf16.msra.mxu0 0
  %3140 = vmatprep.mubr.bf16.mxu0 0
  %3141 = vmatmul.mubr.bf16.gmra.mrb[0].mxu0 %v3092
  %v3142 = vpop.f32.mrb[0].mxu0
  %v3143 = vadd.f32 0.0, %v3142
  %v3144 = vpop.f32.mrb[0].mxu0
  %v3145 = vpop.f32.mrb[0].mxu0
  %v3146 = vadd.f32 0.0, %v3145
  %v3147 = vpop.f32.mrb[0].mxu0
  %3148 = vmatprep.mubr.bf16.mxu0 0
  %3149 = vmatmul.mubr.bf16.gmra.mrb[0].mxu0 %v3093
  %v3150 = vpop.f32.mrb[0].mxu0
  %v3151 = vadd.f32 0.0, %v3150
  %v3152 = vpop.f32.mrb[0].mxu0
  %v3153 = vpop.f32.mrb[0].mxu0
  %v3154 = vadd.f32 0.0, %v3153
  %v3155 = vpop.f32.mrb[0].mxu0
  %3156 = vmatprep.mubr.bf16.mxu0 0
  %3157 = vmatmul.mubr.bf16.gmra.mrb[0].mxu0 %v3094
  %v3158 = vpop.f32.mrb[0].mxu0
  %v3159 = vadd.f32 0.0, %v3158
  %v3160 = vpop.f32.mrb[0].mxu0
  %v3161 = vpop.f32.mrb[0].mxu0
  %v3162 = vadd.f32 0.0, %v3161
  %v3163 = vpop.f32.mrb[0].mxu0
  %3164 = vmatprep.mubr.bf16.mxu0 0
  %3165 = vmatmul.mubr.bf16.gmra.mrb[0].mxu0 %v3095
  %v3166 = vpop.f32.mrb[0].mxu0
  %v3167 = vadd.f32 0.0, %v3166
  %v3168 = vpop.f32.mrb[0].mxu0
  %v3169 = vpop.f32.mrb[0].mxu0
  %v3170 = vadd.f32 0.0, %v3169
  %v3171 = vpop.f32.mrb[0].mxu0
  %3172 = vmatprep.mubr.bf16.mxu0 0
  %3173 = vmatmul.mubr.bf16.gmra.mrb[0].mxu0 %v3096
  %v3174 = vpop.f32.mrb[0].mxu0
  %v3175 = vadd.f32 0.0, %v3174
  %v3176 = vpop.f32.mrb[0].mxu0
  %v3177 = vpop.f32.mrb[0].mxu0
  %v3178 = vadd.f32 0.0, %v3177
  %v3179 = vpop.f32.mrb[0].mxu0
  %3180 = vmatprep.mubr.bf16.mxu0 0
  %3181 = vmatmul.mubr.bf16.gmra.mrb[0].mxu0 %v3097
  %v3182 = vpop.f32.mrb[0].mxu0
  %v3183 = vadd.f32 0.0, %v3182
  %v3184 = vpop.f32.mrb[0].mxu0
  %v3185 = vpop.f32.mrb[0].mxu0
  %v3186 = vadd.f32 0.0, %v3185
  %v3187 = vpop.f32.mrb[0].mxu0
  %3188 = vmatprep.mubr.bf16.mxu0 0
  %3189 = vmatmul.mubr.bf16.gmra.mrb[0].mxu0 %v3098
  %v3190 = vpop.f32.mrb[0].mxu0
  %v3191 = vadd.f32 0.0, %v3190
  %v3192 = vpop.f32.mrb[0].mxu0
  %v3193 = vpop.f32.mrb[0].mxu0
  %v3194 = vadd.f32 0.0, %v3193
  %v3195 = vpop.f32.mrb[0].mxu0
  %3196 = vmatprep.mubr.bf16.mxu0 0
  %3197 = vmatmul.mubr.bf16.gmra.mrb[0].mxu0 %v3099
  %v3198 = vpop.f32.mrb[0].mxu0
  %v3199 = vadd.f32 0.0, %v3198
  %v3200 = vpop.f32.mrb[0].mxu0
  %v3201 = vpop.f32.mrb[0].mxu0
  %v3202 = vadd.f32 0.0, %v3201
  %v3203 = vpop.f32.mrb[0].mxu0
  %3204 = vmatprep.mubr.bf16.mxu0 0
  %3205 = vmatmul.mubr.bf16.gmra.mrb[0].mxu0 %v3100
  %v3206 = vpop.f32.mrb[0].mxu0
  %v3207 = vadd.f32 0.0, %v3206
  %v3208 = vpop.f32.mrb[0].mxu0
  %v3209 = vpop.f32.mrb[0].mxu0
  %v3210 = vadd.f32 0.0, %v3209
  %v3211 = vpop.f32.mrb[0].mxu0
  %3212 = vmatprep.mubr.bf16.mxu0 0
  %3213 = vmatmul.mubr.bf16.gmra.mrb[0].mxu0 %v3101
  %v3214 = vpop.f32.mrb[0].mxu0
  %v3215 = vadd.f32 0.0, %v3214
  %v3216 = vpop.f32.mrb[0].mxu0
  %v3217 = vpop.f32.mrb[0].mxu0
  %v3218 = vadd.f32 0.0, %v3217
  %v3219 = vpop.f32.mrb[0].mxu0
  %3220 = vmatprep.mubr.bf16.mxu0 0
  %3221 = vmatmul.mubr.bf16.gmra.mrb[0].mxu0 %v3102
  %v3222 = vpop.f32.mrb[0].mxu0
  %v3223 = vadd.f32 0.0, %v3222
  %v3224 = vpop.f32.mrb[0].mxu0
  %v3225 = vpop.f32.mrb[0].mxu0
  %v3226 = vadd.f32 0.0, %v3225
  %v3227 = vpop.f32.mrb[0].mxu0
  %3228 = vmatprep.mubr.bf16.mxu0 0
  %3229 = vmatmul.mubr.bf16.gmra.mrb[0].mxu0 %v3103
  %v3230 = vpop.f32.mrb[0].mxu0
  %v3231 = vadd.f32 0.0, %v3230
  %v3232 = vpop.f32.mrb[0].mxu0
  %v3233 = vpop.f32.mrb[0].mxu0
  %v3234 = vadd.f32 0.0, %v3233
  %v3235 = vpop.f32.mrb[0].mxu0
  %3236 = vmatprep.mubr.bf16.mxu0 0
  %3237 = vmatmul.mubr.bf16.gmra.mrb[0].mxu0 %v3104
  %v3238 = vpop.f32.mrb[0].mxu0
  %v3239 = vadd.f32 0.0, %v3238
  %v3240 = vpop.f32.mrb[0].mxu0
  %v3241 = vpop.f32.mrb[0].mxu0
  %v3242 = vadd.f32 0.0, %v3241
  %v3243 = vpop.f32.mrb[0].mxu0
  %3244 = vmatprep.mubr.bf16.mxu0 0
  %3245 = vmatmul.mubr.bf16.gmra.mrb[0].mxu0 %v3105
  %v3246 = vpop.f32.mrb[0].mxu0
  %v3247 = vadd.f32 0.0, %v3246
  %v3248 = vpop.f32.mrb[0].mxu0
  %v3249 = vpop.f32.mrb[0].mxu0
  %v3250 = vadd.f32 0.0, %v3249
  %v3251 = vpop.f32.mrb[0].mxu0
  %3252 = vmatprep.mubr.bf16.mxu0 0
  %3253 = vmatmul.mubr.bf16.gmra.mrb[0].mxu0 %v3106
  %v3254 = vpop.f32.mrb[0].mxu0
  %v3255 = vadd.f32 0.0, %v3254
  %v3256 = vpop.f32.mrb[0].mxu0
  %v3257 = vpop.f32.mrb[0].mxu0
  %v3258 = vadd.f32 0.0, %v3257
  %v3259 = vpop.f32.mrb[0].mxu0
  %3260 = vmatprep.mubr.bf16.mxu0 0
  %3261 = vmatmul.mubr.bf16.gmra.mrb[0].mxu0 %v3107
  %v3262 = vpop.f32.mrb[0].mxu0
  %v3263 = vadd.f32 0.0, %v3262
  %v3264 = vpop.f32.mrb[0].mxu0
  %v3265 = vpop.f32.mrb[0].mxu0
  %v3266 = vadd.f32 0.0, %v3265
  %v3267 = vpop.f32.mrb[0].mxu0
  %3268 = vdwg.mxu0
  %s3269 = scalar_lea.vmem %s2, 56
  %v3270 = vld [vmem:[%s3269] sm:$0xff]
  %v3271 = vadd.f32 %v3143, %v3146
  %v3272 = vadd.f32 %v3271, %v3151
  %v3273 = vadd.f32 %v3272, %v3154
  %v3274 = vadd.f32 %v3273, %v3159
  %v3275 = vadd.f32 %v3274, %v3162
  %v3276 = vadd.f32 %v3275, %v3167
  %v3277 = vadd.f32 %v3276, %v3170
  %v3278 = vadd.f32 %v3277, %v3175
  %v3279 = vadd.f32 %v3278, %v3178
  %v3280 = vadd.f32 %v3279, %v3183
  %v3281 = vadd.f32 %v3280, %v3186
  %v3282 = vadd.f32 %v3281, %v3191
  %v3283 = vadd.f32 %v3282, %v3194
  %v3284 = vadd.f32 %v3283, %v3199
  %v3285 = vadd.f32 %v3284, %v3202
  %v3286 = vadd.f32 %v3285, %v3207
  %v3287 = vadd.f32 %v3286, %v3210
  %v3288 = vadd.f32 %v3287, %v3215
  %v3289 = vadd.f32 %v3288, %v3218
  %v3290 = vadd.f32 %v3289, %v3223
  %v3291 = vadd.f32 %v3290, %v3226
  %v3292 = vadd.f32 %v3291, %v3231
  %v3293 = vadd.f32 %v3292, %v3234
  %v3294 = vadd.f32 %v3293, %v3239
  %v3295 = vadd.f32 %v3294, %v3242
  %v3296 = vadd.f32 %v3295, %v3247
  %v3297 = vadd.f32 %v3296, %v3250
  %v3298 = vadd.f32 %v3297, %v3255
  %v3299 = vadd.f32 %v3298, %v3258
  %v3300 = vadd.f32 %v3299, %v3263
  %v3301 = vadd.f32 %v3300, %v3266
  %v3302 = vrot.slane %v3301, 4
  %v3303 = vadd.f32 %v3301, %v3302
  %v3304 = vrot.slane %v3303, 2
  %v3305 = vadd.f32 %v3303, %v3304
  %v3306 = vrot.slane %v3305, 1
  %v3307 = vadd.f32 %v3305, %v3306
  %v3308 = vmul.f32 %v3143, %v3143
  %v3309 = vmul.f32 %v3146, %v3146
  %v3310 = vmul.f32 %v3151, %v3151
  %v3311 = vmul.f32 %v3154, %v3154
  %v3312 = vmul.f32 %v3159, %v3159
  %v3313 = vmul.f32 %v3162, %v3162
  %v3314 = vmul.f32 %v3167, %v3167
  %v3315 = vmul.f32 %v3170, %v3170
  %v3316 = vmul.f32 %v3175, %v3175
  %v3317 = vmul.f32 %v3178, %v3178
  %v3318 = vmul.f32 %v3183, %v3183
  %v3319 = vmul.f32 %v3186, %v3186
  %v3320 = vmul.f32 %v3191, %v3191
  %v3321 = vmul.f32 %v3194, %v3194
  %v3322 = vmul.f32 %v3199, %v3199
  %v3323 = vmul.f32 %v3202, %v3202
  %v3324 = vmul.f32 %v3207, %v3207
  %v3325 = vmul.f32 %v3210, %v3210
  %v3326 = vmul.f32 %v3215, %v3215
  %v3327 = vmul.f32 %v3218, %v3218
  %v3328 = vmul.f32 %v3223, %v3223
  %v3329 = vmul.f32 %v3226, %v3226
  %v3330 = vmul.f32 %v3231, %v3231
  %v3331 = vmul.f32 %v3234, %v3234
  %v3332 = vmul.f32 %v3239, %v3239
  %v3333 = vmul.f32 %v3242, %v3242
  %v3334 = vmul.f32 %v3247, %v3247
  %v3335 = vmul.f32 %v3250, %v3250
  %v3336 = vmul.f32 %v3255, %v3255
  %v3337 = vmul.f32 %v3258, %v3258
  %v3338 = vmul.f32 %v3263, %v3263
  %v3339 = vmul.f32 %v3266, %v3266
  %v3340 = vadd.f32 %v3308, %v3309
  %v3341 = vadd.f32 %v3340, %v3310
  %v3342 = vadd.f32 %v3341, %v3311
  %v3343 = vadd.f32 %v3342, %v3312
  %v3344 = vadd.f32 %v3343, %v3313
  %v3345 = vadd.f32 %v3344, %v3314
  %v3346 = vadd.f32 %v3345, %v3315
  %v3347 = vadd.f32 %v3346, %v3316
  %v3348 = vadd.f32 %v3347, %v3317
  %v3349 = vadd.f32 %v3348, %v3318
  %v3350 = vadd.f32 %v3349, %v3319
  %v3351 = vadd.f32 %v3350, %v3320
  %v3352 = vadd.f32 %v3351, %v3321
  %v3353 = vadd.f32 %v3352, %v3322
  %v3354 = vadd.f32 %v3353, %v3323
  %v3355 = vadd.f32 %v3354, %v3324
  %v3356 = vadd.f32 %v3355, %v3325
  %v3357 = vadd.f32 %v3356, %v3326
  %v3358 = vadd.f32 %v3357, %v3327
  %v3359 = vadd.f32 %v3358, %v3328
  %v3360 = vadd.f32 %v3359, %v3329
  %v3361 = vadd.f32 %v3360, %v3330
  %v3362 = vadd.f32 %v3361, %v3331
  %v3363 = vadd.f32 %v3362, %v3332
  %v3364 = vadd.f32 %v3363, %v3333
  %v3365 = vadd.f32 %v3364, %v3334
  %v3366 = vadd.f32 %v3365, %v3335
  %v3367 = vadd.f32 %v3366, %v3336
  %v3368 = vadd.f32 %v3367, %v3337
  %v3369 = vadd.f32 %v3368, %v3338
  %v3370 = vadd.f32 %v3369, %v3339
  %v3371 = vrot.slane %v3370, 4
  %v3372 = vadd.f32 %v3370, %v3371
  %v3373 = vrot.slane %v3372, 2
  %v3374 = vadd.f32 %v3372, %v3373
  %v3375 = vrot.slane %v3374, 1
  %v3376 = vadd.f32 %v3374, %v3375
  %v3377 = vmul.f32 %v3307, 0.00390625
  %v3378 = vmul.f32 %v3376, 0.00390625
  %v3379 = vmul.f32 %v3377, %v3377
  %v3380 = vsub.f32 %v3378, %v3379
  %v3381 = vmax.f32 %v3380, 0.0
  %v3382 = vadd.f32 %v3381, 1e-05
  %v3383 = vrsqrt.pop %v3382
  %v3384 = vmul.f32 %v3270, %v3383
  %v3385 = vmul.f32 %v3377, %v3384
  %v3387 = vrot.slane %v3385, 7
  %v3389 = vsub.f32 %v3270, %v3387
  %v3390 = vlaneseq
  %v3391 = vshrl.u32 %v3390, 7
  %v3392 = vsub.s32 1, %v3391
  %v3393 = vrot.slane %v3384, %v3392
  %v3394 = vmul.f32 %v3143, %v3393
  %v3395 = vmul.f32 %v3146, %v3393
  %v3396 = vmul.f32 %v3151, %v3393
  %v3397 = vmul.f32 %v3154, %v3393
  %v3398 = vmul.f32 %v3159, %v3393
  %v3399 = vmul.f32 %v3162, %v3393
  %v3400 = vmul.f32 %v3167, %v3393
  %v3401 = vmul.f32 %v3170, %v3393
  %v3402 = vmul.f32 %v3175, %v3393
  %v3403 = vmul.f32 %v3178, %v3393
  %v3404 = vmul.f32 %v3183, %v3393
  %v3405 = vmul.f32 %v3186, %v3393
  %v3406 = vmul.f32 %v3191, %v3393
  %v3407 = vmul.f32 %v3194, %v3393
  %v3408 = vmul.f32 %v3199, %v3393
  %v3409 = vmul.f32 %v3202, %v3393
  %v3410 = vmul.f32 %v3207, %v3393
  %v3411 = vmul.f32 %v3210, %v3393
  %v3412 = vmul.f32 %v3215, %v3393
  %v3413 = vmul.f32 %v3218, %v3393
  %v3414 = vmul.f32 %v3223, %v3393
  %v3415 = vmul.f32 %v3226, %v3393
  %v3416 = vmul.f32 %v3231, %v3393
  %v3417 = vmul.f32 %v3234, %v3393
  %v3418 = vmul.f32 %v3239, %v3393
  %v3419 = vmul.f32 %v3242, %v3393
  %v3420 = vmul.f32 %v3247, %v3393
  %v3421 = vmul.f32 %v3250, %v3393
  %v3422 = vmul.f32 %v3255, %v3393
  %v3423 = vmul.f32 %v3258, %v3393
  %v3424 = vmul.f32 %v3263, %v3393
  %v3425 = vmul.f32 %v3266, %v3393
  %v3426 = vlaneseq
  %v3427 = vshrl.u32 %v3426, 7
  %v3428 = vsub.s32 2, %v3427
  %v3429 = vrot.slane %v3389, %v3428
  %v3430 = vadd.f32 %v3394, %v3429
  %v3431 = vadd.f32 %v3395, %v3429
  %v3432 = vadd.f32 %v3396, %v3429
  %v3433 = vadd.f32 %v3397, %v3429
  %v3434 = vadd.f32 %v3398, %v3429
  %v3435 = vadd.f32 %v3399, %v3429
  %v3436 = vadd.f32 %v3400, %v3429
  %v3437 = vadd.f32 %v3401, %v3429
  %v3438 = vadd.f32 %v3402, %v3429
  %v3439 = vadd.f32 %v3403, %v3429
  %v3440 = vadd.f32 %v3404, %v3429
  %v3441 = vadd.f32 %v3405, %v3429
  %v3442 = vadd.f32 %v3406, %v3429
  %v3443 = vadd.f32 %v3407, %v3429
  %v3444 = vadd.f32 %v3408, %v3429
  %v3445 = vadd.f32 %v3409, %v3429
  %v3446 = vadd.f32 %v3410, %v3429
  %v3447 = vadd.f32 %v3411, %v3429
  %v3448 = vadd.f32 %v3412, %v3429
  %v3449 = vadd.f32 %v3413, %v3429
  %v3450 = vadd.f32 %v3414, %v3429
  %v3451 = vadd.f32 %v3415, %v3429
  %v3452 = vadd.f32 %v3416, %v3429
  %v3453 = vadd.f32 %v3417, %v3429
  %v3454 = vadd.f32 %v3418, %v3429
  %v3455 = vadd.f32 %v3419, %v3429
  %v3456 = vadd.f32 %v3420, %v3429
  %v3457 = vadd.f32 %v3421, %v3429
  %v3458 = vadd.f32 %v3422, %v3429
  %v3459 = vadd.f32 %v3423, %v3429
  %v3460 = vadd.f32 %v3424, %v3429
  %v3461 = vadd.f32 %v3425, %v3429
  %v3462 = vmax.f32 %v3430, 0.0
  %v3463 = vmax.f32 %v3431, 0.0
  %v3464 = vmax.f32 %v3432, 0.0
  %v3465 = vmax.f32 %v3433, 0.0
  %v3466 = vmax.f32 %v3434, 0.0
  %v3467 = vmax.f32 %v3435, 0.0
  %v3468 = vmax.f32 %v3436, 0.0
  %v3469 = vmax.f32 %v3437, 0.0
  %v3470 = vmax.f32 %v3438, 0.0
  %v3471 = vmax.f32 %v3439, 0.0
  %v3472 = vmax.f32 %v3440, 0.0
  %v3473 = vmax.f32 %v3441, 0.0
  %v3474 = vmax.f32 %v3442, 0.0
  %v3475 = vmax.f32 %v3443, 0.0
  %v3476 = vmax.f32 %v3444, 0.0
  %v3477 = vmax.f32 %v3445, 0.0
  %v3478 = vmax.f32 %v3446, 0.0
  %v3479 = vmax.f32 %v3447, 0.0
  %v3480 = vmax.f32 %v3448, 0.0
  %v3481 = vmax.f32 %v3449, 0.0
  %v3482 = vmax.f32 %v3450, 0.0
  %v3483 = vmax.f32 %v3451, 0.0
  %v3484 = vmax.f32 %v3452, 0.0
  %v3485 = vmax.f32 %v3453, 0.0
  %v3486 = vmax.f32 %v3454, 0.0
  %v3487 = vmax.f32 %v3455, 0.0
  %v3488 = vmax.f32 %v3456, 0.0
  %v3489 = vmax.f32 %v3457, 0.0
  %v3490 = vmax.f32 %v3458, 0.0
  %v3491 = vmax.f32 %v3459, 0.0
  %v3492 = vmax.f32 %v3460, 0.0
  %v3493 = vmax.f32 %v3461, 0.0
  %s3494 = sshll.u32 %s57, 4
  %3495 = dma.done [#allocation3], %s3494
  %s3496 = scalar_lea.hbm %s1, 9216
  // Predicated region
  $region46: #{autoencoder_forward.1} parent=0 // pred_check
    _
  $region47: #{autoencoder_forward.1} parent=0 // pred_check_branch
    %3498 = sbr.rel target = $region49
  $region48: #{autoencoder_forward.1} parent=0 // pred_region
    %3499 = sst [smem:[#allocation6]] [#allocation25]
    %3500 = sst [smem:[#allocation7]] [#allocation24]
  $region49: #{autoencoder_forward.1} parent=0 // pred_fallthru
    _
  %3502 = shalt.err (0)
  %s3504 = sshll.u32 %s61, 4
  %s3505 = int_to_ptr.vmem [resolvable:$true] %s3504
  %3507 = dma.hbm_to_vmem [thread:$0]  %s3496, 1024, %s3505, %s62
  %v3508 = vld [vmem:[#allocation2] sm:$0xff]
  %v3509 = vld [vmem:[#allocation2 + $0x8] sm:$0xff]
  %v3510 = vld [vmem:[#allocation2 + $0x10] sm:$0xff]
  %v3511 = vld [vmem:[#allocation2 + $0x18] sm:$0xff]
  %v3512 = vld [vmem:[#allocation2 + $0x20] sm:$0xff]
  %v3513 = vld [vmem:[#allocation2 + $0x28] sm:$0xff]
  %v3514 = vld [vmem:[#allocation2 + $0x30] sm:$0xff]
  %v3515 = vld [vmem:[#allocation2 + $0x38] sm:$0xff]
  %v3516 = vpack.c.bf16 %v3463, %v3462
  %v3517 = vpack.c.bf16 %v3465, %v3464
  %v3518 = vpack.c.bf16 %v3467, %v3466
  %v3519 = vpack.c.bf16 %v3469, %v3468
  %v3520 = vpack.c.bf16 %v3471, %v3470
  %v3521 = vpack.c.bf16 %v3473, %v3472
  %v3522 = vpack.c.bf16 %v3475, %v3474
  %v3523 = vpack.c.bf16 %v3477, %v3476
  %v3524 = vpack.c.bf16 %v3479, %v3478
  %v3525 = vpack.c.bf16 %v3481, %v3480
  %v3526 = vpack.c.bf16 %v3483, %v3482
  %v3527 = vpack.c.bf16 %v3485, %v3484
  %v3528 = vpack.c.bf16 %v3487, %v3486
  %v3529 = vpack.c.bf16 %v3489, %v3488
  %v3530 = vpack.c.bf16 %v3491, %v3490
  %v3531 = vpack.c.bf16 %v3493, %v3492
  %3532 = vmatprep.subr.bf16.mxu0 0
  %3533 = vmatpush1.bf16.msra.mxu0 %v3508
  %3534 = vmatprep.subr.bf16.mxu0 0
  %3535 = vmatpush1.bf16.msra.mxu0 %v3509
  %3536 = vmatprep.subr.bf16.mxu0 0
  %3537 = vmatpush1.bf16.msra.mxu0 %v3510
  %3538 = vmatprep.subr.bf16.mxu0 0
  %3539 = vmatpush1.bf16.msra.mxu0 %v3511
  %3540 = vmatprep.subr.bf16.mxu0 0
  %3541 = vmatpush1.bf16.msra.mxu0 %v3512
  %3542 = vmatprep.subr.bf16.mxu0 0
  %3543 = vmatpush1.bf16.msra.mxu0 %v3513
  %3544 = vmatprep.subr.bf16.mxu0 0
  %3545 = vmatpush1.bf16.msra.mxu0 %v3514
  %3546 = vmatprep.subr.bf16.mxu0 0
  %3547 = vmatpush1.bf16.msra.mxu0 %v3515
  %3548 = vmatprep.subr.bf16.mxu0 0
  %3549 = vmatpush1.bf16.msra.mxu0 0
  %3550 = vmatprep.subr.bf16.mxu0 0
  %3551 = vmatpush1.bf16.msra.mxu0 0
  %3552 = vmatprep.subr.bf16.mxu0 0
  %3553 = vmatpush1.bf16.msra.mxu0 0
  %3554 = vmatprep.subr.bf16.mxu0 0
  %3555 = vmatpush1.bf16.msra.mxu0 0
  %3556 = vmatprep.subr.bf16.mxu0 0
  %3557 = vmatpush1.bf16.msra.mxu0 0
  %3558 = vmatprep.subr.bf16.mxu0 0
  %3559 = vmatpush1.bf16.msra.mxu0 0
  %3560 = vmatprep.subr.bf16.mxu0 0
  %3561 = vmatpush1.bf16.msra.mxu0 0
  %3562 = vmatprep.subr.bf16.mxu0 0
  %3563 = vmatpush1.bf16.msra.mxu0 0
  %3564 = vmatprep.mubr.bf16.mxu0 0
  %3565 = vmatmul.mubr.bf16.gmra.mrb[0].mxu0 %v3516
  %v3566 = vpop.f32.mrb[0].mxu0
  %v3567 = vadd.f32 0.0, %v3566
  %v3568 = vpop.f32.mrb[0].mxu0
  %v3569 = vpop.f32.mrb[0].mxu0
  %v3570 = vadd.f32 0.0, %v3569
  %v3571 = vpop.f32.mrb[0].mxu0
  %3572 = vmatprep.mubr.bf16.mxu0 0
  %3573 = vmatmul.mubr.bf16.gmra.mrb[0].mxu0 %v3517
  %v3574 = vpop.f32.mrb[0].mxu0
  %v3575 = vadd.f32 0.0, %v3574
  %v3576 = vpop.f32.mrb[0].mxu0
  %v3577 = vpop.f32.mrb[0].mxu0
  %v3578 = vadd.f32 0.0, %v3577
  %v3579 = vpop.f32.mrb[0].mxu0
  %3580 = vmatprep.mubr.bf16.mxu0 0
  %3581 = vmatmul.mubr.bf16.gmra.mrb[0].mxu0 %v3518
  %v3582 = vpop.f32.mrb[0].mxu0
  %v3583 = vadd.f32 0.0, %v3582
  %v3584 = vpop.f32.mrb[0].mxu0
  %v3585 = vpop.f32.mrb[0].mxu0
  %v3586 = vadd.f32 0.0, %v3585
  %v3587 = vpop.f32.mrb[0].mxu0
  %3588 = vmatprep.mubr.bf16.mxu0 0
  %3589 = vmatmul.mubr.bf16.gmra.mrb[0].mxu0 %v3519
  %v3590 = vpop.f32.mrb[0].mxu0
  %v3591 = vadd.f32 0.0, %v3590
  %v3592 = vpop.f32.mrb[0].mxu0
  %v3593 = vpop.f32.mrb[0].mxu0
  %v3594 = vadd.f32 0.0, %v3593
  %v3595 = vpop.f32.mrb[0].mxu0
  %3596 = vmatprep.mubr.bf16.mxu0 0
  %3597 = vmatmul.mubr.bf16.gmra.mrb[0].mxu0 %v3520
  %v3598 = vpop.f32.mrb[0].mxu0
  %v3599 = vadd.f32 0.0, %v3598
  %v3600 = vpop.f32.mrb[0].mxu0
  %v3601 = vpop.f32.mrb[0].mxu0
  %v3602 = vadd.f32 0.0, %v3601
  %v3603 = vpop.f32.mrb[0].mxu0
  %3604 = vmatprep.mubr.bf16.mxu0 0
  %3605 = vmatmul.mubr.bf16.gmra.mrb[0].mxu0 %v3521
  %v3606 = vpop.f32.mrb[0].mxu0
  %v3607 = vadd.f32 0.0, %v3606
  %v3608 = vpop.f32.mrb[0].mxu0
  %v3609 = vpop.f32.mrb[0].mxu0
  %v3610 = vadd.f32 0.0, %v3609
  %v3611 = vpop.f32.mrb[0].mxu0
  %3612 = vmatprep.mubr.bf16.mxu0 0
  %3613 = vmatmul.mubr.bf16.gmra.mrb[0].mxu0 %v3522
  %v3614 = vpop.f32.mrb[0].mxu0
  %v3615 = vadd.f32 0.0, %v3614
  %v3616 = vpop.f32.mrb[0].mxu0
  %v3617 = vpop.f32.mrb[0].mxu0
  %v3618 = vadd.f32 0.0, %v3617
  %v3619 = vpop.f32.mrb[0].mxu0
  %3620 = vmatprep.mubr.bf16.mxu0 0
  %3621 = vmatmul.mubr.bf16.gmra.mrb[0].mxu0 %v3523
  %v3622 = vpop.f32.mrb[0].mxu0
  %v3623 = vadd.f32 0.0, %v3622
  %v3624 = vpop.f32.mrb[0].mxu0
  %v3625 = vpop.f32.mrb[0].mxu0
  %v3626 = vadd.f32 0.0, %v3625
  %v3627 = vpop.f32.mrb[0].mxu0
  %3628 = vmatprep.mubr.bf16.mxu0 0
  %3629 = vmatmul.mubr.bf16.gmra.mrb[0].mxu0 %v3524
  %v3630 = vpop.f32.mrb[0].mxu0
  %v3631 = vadd.f32 0.0, %v3630
  %v3632 = vpop.f32.mrb[0].mxu0
  %v3633 = vpop.f32.mrb[0].mxu0
  %v3634 = vadd.f32 0.0, %v3633
  %v3635 = vpop.f32.mrb[0].mxu0
  %3636 = vmatprep.mubr.bf16.mxu0 0
  %3637 = vmatmul.mubr.bf16.gmra.mrb[0].mxu0 %v3525
  %v3638 = vpop.f32.mrb[0].mxu0
  %v3639 = vadd.f32 0.0, %v3638
  %v3640 = vpop.f32.mrb[0].mxu0
  %v3641 = vpop.f32.mrb[0].mxu0
  %v3642 = vadd.f32 0.0, %v3641
  %v3643 = vpop.f32.mrb[0].mxu0
  %3644 = vmatprep.mubr.bf16.mxu0 0
  %3645 = vmatmul.mubr.bf16.gmra.mrb[0].mxu0 %v3526
  %v3646 = vpop.f32.mrb[0].mxu0
  %v3647 = vadd.f32 0.0, %v3646
  %v3648 = vpop.f32.mrb[0].mxu0
  %v3649 = vpop.f32.mrb[0].mxu0
  %v3650 = vadd.f32 0.0, %v3649
  %v3651 = vpop.f32.mrb[0].mxu0
  %3652 = vmatprep.mubr.bf16.mxu0 0
  %3653 = vmatmul.mubr.bf16.gmra.mrb[0].mxu0 %v3527
  %v3654 = vpop.f32.mrb[0].mxu0
  %v3655 = vadd.f32 0.0, %v3654
  %v3656 = vpop.f32.mrb[0].mxu0
  %v3657 = vpop.f32.mrb[0].mxu0
  %v3658 = vadd.f32 0.0, %v3657
  %v3659 = vpop.f32.mrb[0].mxu0
  %3660 = vmatprep.mubr.bf16.mxu0 0
  %3661 = vmatmul.mubr.bf16.gmra.mrb[0].mxu0 %v3528
  %v3662 = vpop.f32.mrb[0].mxu0
  %v3663 = vadd.f32 0.0, %v3662
  %v3664 = vpop.f32.mrb[0].mxu0
  %v3665 = vpop.f32.mrb[0].mxu0
  %v3666 = vadd.f32 0.0, %v3665
  %v3667 = vpop.f32.mrb[0].mxu0
  %3668 = vmatprep.mubr.bf16.mxu0 0
  %3669 = vmatmul.mubr.bf16.gmra.mrb[0].mxu0 %v3529
  %v3670 = vpop.f32.mrb[0].mxu0
  %v3671 = vadd.f32 0.0, %v3670
  %v3672 = vpop.f32.mrb[0].mxu0
  %v3673 = vpop.f32.mrb[0].mxu0
  %v3674 = vadd.f32 0.0, %v3673
  %v3675 = vpop.f32.mrb[0].mxu0
  %3676 = vmatprep.mubr.bf16.mxu0 0
  %3677 = vmatmul.mubr.bf16.gmra.mrb[0].mxu0 %v3530
  %v3678 = vpop.f32.mrb[0].mxu0
  %v3679 = vadd.f32 0.0, %v3678
  %v3680 = vpop.f32.mrb[0].mxu0
  %v3681 = vpop.f32.mrb[0].mxu0
  %v3682 = vadd.f32 0.0, %v3681
  %v3683 = vpop.f32.mrb[0].mxu0
  %3684 = vmatprep.mubr.bf16.mxu0 0
  %3685 = vmatmul.mubr.bf16.gmra.mrb[0].mxu0 %v3531
  %v3686 = vpop.f32.mrb[0].mxu0
  %v3687 = vadd.f32 0.0, %v3686
  %v3688 = vpop.f32.mrb[0].mxu0
  %v3689 = vpop.f32.mrb[0].mxu0
  %v3690 = vadd.f32 0.0, %v3689
  %v3691 = vpop.f32.mrb[0].mxu0
  %3692 = vdwg.mxu0
  %s3693 = scalar_lea.vmem %s2, 64
  %v3694 = vld [vmem:[%s3693] sm:$0xff]
  %v3695 = vadd.f32 %v3567, %v3570
  %v3696 = vadd.f32 %v3695, %v3575
  %v3697 = vadd.f32 %v3696, %v3578
  %v3698 = vadd.f32 %v3697, %v3583
  %v3699 = vadd.f32 %v3698, %v3586
  %v3700 = vadd.f32 %v3699, %v3591
  %v3701 = vadd.f32 %v3700, %v3594
  %v3702 = vadd.f32 %v3701, %v3599
  %v3703 = vadd.f32 %v3702, %v3602
  %v3704 = vadd.f32 %v3703, %v3607
  %v3705 = vadd.f32 %v3704, %v3610
  %v3706 = vadd.f32 %v3705, %v3615
  %v3707 = vadd.f32 %v3706, %v3618
  %v3708 = vadd.f32 %v3707, %v3623
  %v3709 = vadd.f32 %v3708, %v3626
  %v3710 = vadd.f32 %v3709, %v3631
  %v3711 = vadd.f32 %v3710, %v3634
  %v3712 = vadd.f32 %v3711, %v3639
  %v3713 = vadd.f32 %v3712, %v3642
  %v3714 = vadd.f32 %v3713, %v3647
  %v3715 = vadd.f32 %v3714, %v3650
  %v3716 = vadd.f32 %v3715, %v3655
  %v3717 = vadd.f32 %v3716, %v3658
  %v3718 = vadd.f32 %v3717, %v3663
  %v3719 = vadd.f32 %v3718, %v3666
  %v3720 = vadd.f32 %v3719, %v3671
  %v3721 = vadd.f32 %v3720, %v3674
  %v3722 = vadd.f32 %v3721, %v3679
  %v3723 = vadd.f32 %v3722, %v3682
  %v3724 = vadd.f32 %v3723, %v3687
  %v3725 = vadd.f32 %v3724, %v3690
  %v3726 = vrot.slane %v3725, 4
  %v3727 = vadd.f32 %v3725, %v3726
  %v3728 = vrot.slane %v3727, 2
  %v3729 = vadd.f32 %v3727, %v3728
  %v3730 = vrot.slane %v3729, 1
  %v3731 = vadd.f32 %v3729, %v3730
  %v3732 = vmul.f32 %v3567, %v3567
  %v3733 = vmul.f32 %v3570, %v3570
  %v3734 = vmul.f32 %v3575, %v3575
  %v3735 = vmul.f32 %v3578, %v3578
  %v3736 = vmul.f32 %v3583, %v3583
  %v3737 = vmul.f32 %v3586, %v3586
  %v3738 = vmul.f32 %v3591, %v3591
  %v3739 = vmul.f32 %v3594, %v3594
  %v3740 = vmul.f32 %v3599, %v3599
  %v3741 = vmul.f32 %v3602, %v3602
  %v3742 = vmul.f32 %v3607, %v3607
  %v3743 = vmul.f32 %v3610, %v3610
  %v3744 = vmul.f32 %v3615, %v3615
  %v3745 = vmul.f32 %v3618, %v3618
  %v3746 = vmul.f32 %v3623, %v3623
  %v3747 = vmul.f32 %v3626, %v3626
  %v3748 = vmul.f32 %v3631, %v3631
  %v3749 = vmul.f32 %v3634, %v3634
  %v3750 = vmul.f32 %v3639, %v3639
  %v3751 = vmul.f32 %v3642, %v3642
  %v3752 = vmul.f32 %v3647, %v3647
  %v3753 = vmul.f32 %v3650, %v3650
  %v3754 = vmul.f32 %v3655, %v3655
  %v3755 = vmul.f32 %v3658, %v3658
  %v3756 = vmul.f32 %v3663, %v3663
  %v3757 = vmul.f32 %v3666, %v3666
  %v3758 = vmul.f32 %v3671, %v3671
  %v3759 = vmul.f32 %v3674, %v3674
  %v3760 = vmul.f32 %v3679, %v3679
  %v3761 = vmul.f32 %v3682, %v3682
  %v3762 = vmul.f32 %v3687, %v3687
  %v3763 = vmul.f32 %v3690, %v3690
  %v3764 = vadd.f32 %v3732, %v3733
  %v3765 = vadd.f32 %v3764, %v3734
  %v3766 = vadd.f32 %v3765, %v3735
  %v3767 = vadd.f32 %v3766, %v3736
  %v3768 = vadd.f32 %v3767, %v3737
  %v3769 = vadd.f32 %v3768, %v3738
  %v3770 = vadd.f32 %v3769, %v3739
  %v3771 = vadd.f32 %v3770, %v3740
  %v3772 = vadd.f32 %v3771, %v3741
  %v3773 = vadd.f32 %v3772, %v3742
  %v3774 = vadd.f32 %v3773, %v3743
  %v3775 = vadd.f32 %v3774, %v3744
  %v3776 = vadd.f32 %v3775, %v3745
  %v3777 = vadd.f32 %v3776, %v3746
  %v3778 = vadd.f32 %v3777, %v3747
  %v3779 = vadd.f32 %v3778, %v3748
  %v3780 = vadd.f32 %v3779, %v3749
  %v3781 = vadd.f32 %v3780, %v3750
  %v3782 = vadd.f32 %v3781, %v3751
  %v3783 = vadd.f32 %v3782, %v3752
  %v3784 = vadd.f32 %v3783, %v3753
  %v3785 = vadd.f32 %v3784, %v3754
  %v3786 = vadd.f32 %v3785, %v3755
  %v3787 = vadd.f32 %v3786, %v3756
  %v3788 = vadd.f32 %v3787, %v3757
  %v3789 = vadd.f32 %v3788, %v3758
  %v3790 = vadd.f32 %v3789, %v3759
  %v3791 = vadd.f32 %v3790, %v3760
  %v3792 = vadd.f32 %v3791, %v3761
  %v3793 = vadd.f32 %v3792, %v3762
  %v3794 = vadd.f32 %v3793, %v3763
  %v3795 = vrot.slane %v3794, 4
  %v3796 = vadd.f32 %v3794, %v3795
  %v3797 = vrot.slane %v3796, 2
  %v3798 = vadd.f32 %v3796, %v3797
  %v3799 = vrot.slane %v3798, 1
  %v3800 = vadd.f32 %v3798, %v3799
  %v3801 = vmul.f32 %v3731, 0.00390625
  %v3802 = vmul.f32 %v3800, 0.00390625
  %v3803 = vmul.f32 %v3801, %v3801
  %v3804 = vsub.f32 %v3802, %v3803
  %v3805 = vmax.f32 %v3804, 0.0
  %v3806 = vadd.f32 %v3805, 1e-05
  %v3807 = vrsqrt.pop %v3806
  %v3808 = vmul.f32 %v3694, %v3807
  %v3809 = vmul.f32 %v3801, %v3808
  %v3811 = vrot.slane %v3809, 7
  %v3813 = vsub.f32 %v3694, %v3811
  %v3814 = vlaneseq
  %v3815 = vshrl.u32 %v3814, 7
  %v3816 = vsub.s32 1, %v3815
  %v3817 = vrot.slane %v3808, %v3816
  %v3818 = vmul.f32 %v3567, %v3817
  %v3819 = vmul.f32 %v3570, %v3817
  %v3820 = vmul.f32 %v3575, %v3817
  %v3821 = vmul.f32 %v3578, %v3817
  %v3822 = vmul.f32 %v3583, %v3817
  %v3823 = vmul.f32 %v3586, %v3817
  %v3824 = vmul.f32 %v3591, %v3817
  %v3825 = vmul.f32 %v3594, %v3817
  %v3826 = vmul.f32 %v3599, %v3817
  %v3827 = vmul.f32 %v3602, %v3817
  %v3828 = vmul.f32 %v3607, %v3817
  %v3829 = vmul.f32 %v3610, %v3817
  %v3830 = vmul.f32 %v3615, %v3817
  %v3831 = vmul.f32 %v3618, %v3817
  %v3832 = vmul.f32 %v3623, %v3817
  %v3833 = vmul.f32 %v3626, %v3817
  %v3834 = vmul.f32 %v3631, %v3817
  %v3835 = vmul.f32 %v3634, %v3817
  %v3836 = vmul.f32 %v3639, %v3817
  %v3837 = vmul.f32 %v3642, %v3817
  %v3838 = vmul.f32 %v3647, %v3817
  %v3839 = vmul.f32 %v3650, %v3817
  %v3840 = vmul.f32 %v3655, %v3817
  %v3841 = vmul.f32 %v3658, %v3817
  %v3842 = vmul.f32 %v3663, %v3817
  %v3843 = vmul.f32 %v3666, %v3817
  %v3844 = vmul.f32 %v3671, %v3817
  %v3845 = vmul.f32 %v3674, %v3817
  %v3846 = vmul.f32 %v3679, %v3817
  %v3847 = vmul.f32 %v3682, %v3817
  %v3848 = vmul.f32 %v3687, %v3817
  %v3849 = vmul.f32 %v3690, %v3817
  %v3850 = vlaneseq
  %v3851 = vshrl.u32 %v3850, 7
  %v3852 = vsub.s32 2, %v3851
  %v3853 = vrot.slane %v3813, %v3852
  %v3854 = vadd.f32 %v3818, %v3853
  %v3855 = vadd.f32 %v3819, %v3853
  %v3856 = vadd.f32 %v3820, %v3853
  %v3857 = vadd.f32 %v3821, %v3853
  %v3858 = vadd.f32 %v3822, %v3853
  %v3859 = vadd.f32 %v3823, %v3853
  %v3860 = vadd.f32 %v3824, %v3853
  %v3861 = vadd.f32 %v3825, %v3853
  %v3862 = vadd.f32 %v3826, %v3853
  %v3863 = vadd.f32 %v3827, %v3853
  %v3864 = vadd.f32 %v3828, %v3853
  %v3865 = vadd.f32 %v3829, %v3853
  %v3866 = vadd.f32 %v3830, %v3853
  %v3867 = vadd.f32 %v3831, %v3853
  %v3868 = vadd.f32 %v3832, %v3853
  %v3869 = vadd.f32 %v3833, %v3853
  %v3870 = vadd.f32 %v3834, %v3853
  %v3871 = vadd.f32 %v3835, %v3853
  %v3872 = vadd.f32 %v3836, %v3853
  %v3873 = vadd.f32 %v3837, %v3853
  %v3874 = vadd.f32 %v3838, %v3853
  %v3875 = vadd.f32 %v3839, %v3853
  %v3876 = vadd.f32 %v3840, %v3853
  %v3877 = vadd.f32 %v3841, %v3853
  %v3878 = vadd.f32 %v3842, %v3853
  %v3879 = vadd.f32 %v3843, %v3853
  %v3880 = vadd.f32 %v3844, %v3853
  %v3881 = vadd.f32 %v3845, %v3853
  %v3882 = vadd.f32 %v3846, %v3853
  %v3883 = vadd.f32 %v3847, %v3853
  %v3884 = vadd.f32 %v3848, %v3853
  %v3885 = vadd.f32 %v3849, %v3853
  %v3886 = vmax.f32 %v3854, 0.0
  %v3887 = vmax.f32 %v3855, 0.0
  %v3888 = vmax.f32 %v3856, 0.0
  %v3889 = vmax.f32 %v3857, 0.0
  %v3890 = vmax.f32 %v3858, 0.0
  %v3891 = vmax.f32 %v3859, 0.0
  %v3892 = vmax.f32 %v3860, 0.0
  %v3893 = vmax.f32 %v3861, 0.0
  %v3894 = vmax.f32 %v3862, 0.0
  %v3895 = vmax.f32 %v3863, 0.0
  %v3896 = vmax.f32 %v3864, 0.0
  %v3897 = vmax.f32 %v3865, 0.0
  %v3898 = vmax.f32 %v3866, 0.0
  %v3899 = vmax.f32 %v3867, 0.0
  %v3900 = vmax.f32 %v3868, 0.0
  %v3901 = vmax.f32 %v3869, 0.0
  %v3902 = vmax.f32 %v3870, 0.0
  %v3903 = vmax.f32 %v3871, 0.0
  %v3904 = vmax.f32 %v3872, 0.0
  %v3905 = vmax.f32 %v3873, 0.0
  %v3906 = vmax.f32 %v3874, 0.0
  %v3907 = vmax.f32 %v3875, 0.0
  %v3908 = vmax.f32 %v3876, 0.0
  %v3909 = vmax.f32 %v3877, 0.0
  %v3910 = vmax.f32 %v3878, 0.0
  %v3911 = vmax.f32 %v3879, 0.0
  %v3912 = vmax.f32 %v3880, 0.0
  %v3913 = vmax.f32 %v3881, 0.0
  %v3914 = vmax.f32 %v3882, 0.0
  %v3915 = vmax.f32 %v3883, 0.0
  %v3916 = vmax.f32 %v3884, 0.0
  %v3917 = vmax.f32 %v3885, 0.0
  %s3918 = sshll.u32 %s57, 4
  %3919 = dma.done %s62, %s3918
  %v3920 = vld [vmem:[%s61] sm:$0xff]
  %v3921 = vld [vmem:[%s61 + $0x8] sm:$0xff]
  %v3922 = vld [vmem:[%s61 + $0x10] sm:$0xff]
  %v3923 = vld [vmem:[%s61 + $0x18] sm:$0xff]
  %v3924 = vld [vmem:[%s61 + $0x20] sm:$0xff]
  %v3925 = vld [vmem:[%s61 + $0x28] sm:$0xff]
  %v3926 = vld [vmem:[%s61 + $0x30] sm:$0xff]
  %v3927 = vld [vmem:[%s61 + $0x38] sm:$0xff]
  %v3928 = vpack.c.bf16 %v3887, %v3886
  %v3929 = vpack.c.bf16 %v3889, %v3888
  %v3930 = vpack.c.bf16 %v3891, %v3890
  %v3931 = vpack.c.bf16 %v3893, %v3892
  %v3932 = vpack.c.bf16 %v3895, %v3894
  %v3933 = vpack.c.bf16 %v3897, %v3896
  %v3934 = vpack.c.bf16 %v3899, %v3898
  %v3935 = vpack.c.bf16 %v3901, %v3900
  %v3936 = vpack.c.bf16 %v3903, %v3902
  %v3937 = vpack.c.bf16 %v3905, %v3904
  %v3938 = vpack.c.bf16 %v3907, %v3906
  %v3939 = vpack.c.bf16 %v3909, %v3908
  %v3940 = vpack.c.bf16 %v3911, %v3910
  %v3941 = vpack.c.bf16 %v3913, %v3912
  %v3942 = vpack.c.bf16 %v3915, %v3914
  %v3943 = vpack.c.bf16 %v3917, %v3916
  %3944 = vmatprep.subr.bf16.mxu0 0
  %3945 = vmatpush1.bf16.msra.mxu0 %v3920
  %3946 = vmatprep.subr.bf16.mxu0 0
  %3947 = vmatpush1.bf16.msra.mxu0 %v3921
  %3948 = vmatprep.subr.bf16.mxu0 0
  %3949 = vmatpush1.bf16.msra.mxu0 %v3922
  %3950 = vmatprep.subr.bf16.mxu0 0
  %3951 = vmatpush1.bf16.msra.mxu0 %v3923
  %3952 = vmatprep.subr.bf16.mxu0 0
  %3953 = vmatpush1.bf16.msra.mxu0 %v3924
  %3954 = vmatprep.subr.bf16.mxu0 0
  %3955 = vmatpush1.bf16.msra.mxu0 %v3925
  %3956 = vmatprep.subr.bf16.mxu0 0
  %3957 = vmatpush1.bf16.msra.mxu0 %v3926
  %3958 = vmatprep.subr.bf16.mxu0 0
  %3959 = vmatpush1.bf16.msra.mxu0 %v3927
  %3960 = vmatprep.subr.bf16.mxu0 0
  %3961 = vmatpush1.bf16.msra.mxu0 0
  %3962 = vmatprep.subr.bf16.mxu0 0
  %3963 = vmatpush1.bf16.msra.mxu0 0
  %3964 = vmatprep.subr.bf16.mxu0 0
  %3965 = vmatpush1.bf16.msra.mxu0 0
  %3966 = vmatprep.subr.bf16.mxu0 0
  %3967 = vmatpush1.bf16.msra.mxu0 0
  %3968 = vmatprep.subr.bf16.mxu0 0
  %3969 = vmatpush1.bf16.msra.mxu0 0
  %3970 = vmatprep.subr.bf16.mxu0 0
  %3971 = vmatpush1.bf16.msra.mxu0 0
  %3972 = vmatprep.subr.bf16.mxu0 0
  %3973 = vmatpush1.bf16.msra.mxu0 0
  %3974 = vmatprep.subr.bf16.mxu0 0
  %3975 = vmatpush1.bf16.msra.mxu0 0
  %3976 = vmatprep.mubr.bf16.mxu0 0
  %3977 = vmatmul.mubr.bf16.gmra.mrb[0].mxu0 %v3928
  %v3978 = vpop.f32.mrb[0].mxu0
  %v3979 = vadd.f32 0.0, %v3978
  %v3980 = vpop.f32.mrb[0].mxu0
  %v3981 = vpop.f32.mrb[0].mxu0
  %v3982 = vadd.f32 0.0, %v3981
  %v3983 = vpop.f32.mrb[0].mxu0
  %3984 = vmatprep.mubr.bf16.mxu0 0
  %3985 = vmatmul.mubr.bf16.gmra.mrb[0].mxu0 %v3929
  %v3986 = vpop.f32.mrb[0].mxu0
  %v3987 = vadd.f32 0.0, %v3986
  %v3988 = vpop.f32.mrb[0].mxu0
  %v3989 = vpop.f32.mrb[0].mxu0
  %v3990 = vadd.f32 0.0, %v3989
  %v3991 = vpop.f32.mrb[0].mxu0
  %3992 = vmatprep.mubr.bf16.mxu0 0
  %3993 = vmatmul.mubr.bf16.gmra.mrb[0].mxu0 %v3930
  %v3994 = vpop.f32.mrb[0].mxu0
  %v3995 = vadd.f32 0.0, %v3994
  %v3996 = vpop.f32.mrb[0].mxu0
  %v3997 = vpop.f32.mrb[0].mxu0
  %v3998 = vadd.f32 0.0, %v3997
  %v3999 = vpop.f32.mrb[0].mxu0
  %4000 = vmatprep.mubr.bf16.mxu0 0
  %4001 = vmatmul.mubr.bf16.gmra.mrb[0].mxu0 %v3931
  %v4002 = vpop.f32.mrb[0].mxu0
  %v4003 = vadd.f32 0.0, %v4002
  %v4004 = vpop.f32.mrb[0].mxu0
  %v4005 = vpop.f32.mrb[0].mxu0
  %v4006 = vadd.f32 0.0, %v4005
  %v4007 = vpop.f32.mrb[0].mxu0
  %4008 = vmatprep.mubr.bf16.mxu0 0
  %4009 = vmatmul.mubr.bf16.gmra.mrb[0].mxu0 %v3932
  %v4010 = vpop.f32.mrb[0].mxu0
  %v4011 = vadd.f32 0.0, %v4010
  %v4012 = vpop.f32.mrb[0].mxu0
  %v4013 = vpop.f32.mrb[0].mxu0
  %v4014 = vadd.f32 0.0, %v4013
  %v4015 = vpop.f32.mrb[0].mxu0
  %4016 = vmatprep.mubr.bf16.mxu0 0
  %4017 = vmatmul.mubr.bf16.gmra.mrb[0].mxu0 %v3933
  %v4018 = vpop.f32.mrb[0].mxu0
  %v4019 = vadd.f32 0.0, %v4018
  %v4020 = vpop.f32.mrb[0].mxu0
  %v4021 = vpop.f32.mrb[0].mxu0
  %v4022 = vadd.f32 0.0, %v4021
  %v4023 = vpop.f32.mrb[0].mxu0
  %4024 = vmatprep.mubr.bf16.mxu0 0
  %4025 = vmatmul.mubr.bf16.gmra.mrb[0].mxu0 %v3934
  %v4026 = vpop.f32.mrb[0].mxu0
  %v4027 = vadd.f32 0.0, %v4026
  %v4028 = vpop.f32.mrb[0].mxu0
  %v4029 = vpop.f32.mrb[0].mxu0
  %v4030 = vadd.f32 0.0, %v4029
  %v4031 = vpop.f32.mrb[0].mxu0
  %4032 = vmatprep.mubr.bf16.mxu0 0
  %4033 = vmatmul.mubr.bf16.gmra.mrb[0].mxu0 %v3935
  %v4034 = vpop.f32.mrb[0].mxu0
  %v4035 = vadd.f32 0.0, %v4034
  %v4036 = vpop.f32.mrb[0].mxu0
  %v4037 = vpop.f32.mrb[0].mxu0
  %v4038 = vadd.f32 0.0, %v4037
  %v4039 = vpop.f32.mrb[0].mxu0
  %4040 = vmatprep.mubr.bf16.mxu0 0
  %4041 = vmatmul.mubr.bf16.gmra.mrb[0].mxu0 %v3936
  %v4042 = vpop.f32.mrb[0].mxu0
  %v4043 = vadd.f32 0.0, %v4042
  %v4044 = vpop.f32.mrb[0].mxu0
  %v4045 = vpop.f32.mrb[0].mxu0
  %v4046 = vadd.f32 0.0, %v4045
  %v4047 = vpop.f32.mrb[0].mxu0
  %4048 = vmatprep.mubr.bf16.mxu0 0
  %4049 = vmatmul.mubr.bf16.gmra.mrb[0].mxu0 %v3937
  %v4050 = vpop.f32.mrb[0].mxu0
  %v4051 = vadd.f32 0.0, %v4050
  %v4052 = vpop.f32.mrb[0].mxu0
  %v4053 = vpop.f32.mrb[0].mxu0
  %v4054 = vadd.f32 0.0, %v4053
  %v4055 = vpop.f32.mrb[0].mxu0
  %4056 = vmatprep.mubr.bf16.mxu0 0
  %4057 = vmatmul.mubr.bf16.gmra.mrb[0].mxu0 %v3938
  %v4058 = vpop.f32.mrb[0].mxu0
  %v4059 = vadd.f32 0.0, %v4058
  %v4060 = vpop.f32.mrb[0].mxu0
  %v4061 = vpop.f32.mrb[0].mxu0
  %v4062 = vadd.f32 0.0, %v4061
  %v4063 = vpop.f32.mrb[0].mxu0
  %4064 = vmatprep.mubr.bf16.mxu0 0
  %4065 = vmatmul.mubr.bf16.gmra.mrb[0].mxu0 %v3939
  %v4066 = vpop.f32.mrb[0].mxu0
  %v4067 = vadd.f32 0.0, %v4066
  %v4068 = vpop.f32.mrb[0].mxu0
  %v4069 = vpop.f32.mrb[0].mxu0
  %v4070 = vadd.f32 0.0, %v4069
  %v4071 = vpop.f32.mrb[0].mxu0
  %4072 = vmatprep.mubr.bf16.mxu0 0
  %4073 = vmatmul.mubr.bf16.gmra.mrb[0].mxu0 %v3940
  %v4074 = vpop.f32.mrb[0].mxu0
  %v4075 = vadd.f32 0.0, %v4074
  %v4076 = vpop.f32.mrb[0].mxu0
  %v4077 = vpop.f32.mrb[0].mxu0
  %v4078 = vadd.f32 0.0, %v4077
  %v4079 = vpop.f32.mrb[0].mxu0
  %4080 = vmatprep.mubr.bf16.mxu0 0
  %4081 = vmatmul.mubr.bf16.gmra.mrb[0].mxu0 %v3941
  %v4082 = vpop.f32.mrb[0].mxu0
  %v4083 = vadd.f32 0.0, %v4082
  %v4084 = vpop.f32.mrb[0].mxu0
  %v4085 = vpop.f32.mrb[0].mxu0
  %v4086 = vadd.f32 0.0, %v4085
  %v4087 = vpop.f32.mrb[0].mxu0
  %4088 = vmatprep.mubr.bf16.mxu0 0
  %4089 = vmatmul.mubr.bf16.gmra.mrb[0].mxu0 %v3942
  %v4090 = vpop.f32.mrb[0].mxu0
  %v4091 = vadd.f32 0.0, %v4090
  %v4092 = vpop.f32.mrb[0].mxu0
  %v4093 = vpop.f32.mrb[0].mxu0
  %v4094 = vadd.f32 0.0, %v4093
  %v4095 = vpop.f32.mrb[0].mxu0
  %4096 = vmatprep.mubr.bf16.mxu0 0
  %4097 = vmatmul.mubr.bf16.gmra.mrb[0].mxu0 %v3943
  %v4098 = vpop.f32.mrb[0].mxu0
  %v4099 = vadd.f32 0.0, %v4098
  %v4100 = vpop.f32.mrb[0].mxu0
  %v4101 = vpop.f32.mrb[0].mxu0
  %v4102 = vadd.f32 0.0, %v4101
  %v4103 = vpop.f32.mrb[0].mxu0
  %4104 = vdwg.mxu0
  %s4105 = scalar_lea.vmem %s2, 72
  %v4106 = vld [vmem:[%s4105] sm:$0xff]
  %v4107 = vlaneseq
  %v4108 = vshrl.u32 %v4107, 7
  %v4109 = vsub.s32 0, %v4108
  %v4110 = vrot.slane %v4106, %v4109
  %v4111 = vadd.f32 %v3979, %v4110
  %v4112 = vadd.f32 %v3982, %v4110
  %v4113 = vadd.f32 %v3987, %v4110
  %v4114 = vadd.f32 %v3990, %v4110
  %v4115 = vadd.f32 %v3995, %v4110
  %v4116 = vadd.f32 %v3998, %v4110
  %v4117 = vadd.f32 %v4003, %v4110
  %v4118 = vadd.f32 %v4006, %v4110
  %v4119 = vadd.f32 %v4011, %v4110
  %v4120 = vadd.f32 %v4014, %v4110
  %v4121 = vadd.f32 %v4019, %v4110
  %v4122 = vadd.f32 %v4022, %v4110
  %v4123 = vadd.f32 %v4027, %v4110
  %v4124 = vadd.f32 %v4030, %v4110
  %v4125 = vadd.f32 %v4035, %v4110
  %v4126 = vadd.f32 %v4038, %v4110
  %v4127 = vadd.f32 %v4043, %v4110
  %v4128 = vadd.f32 %v4046, %v4110
  %v4129 = vadd.f32 %v4051, %v4110
  %v4130 = vadd.f32 %v4054, %v4110
  %v4131 = vadd.f32 %v4059, %v4110
  %v4132 = vadd.f32 %v4062, %v4110
  %v4133 = vadd.f32 %v4067, %v4110
  %v4134 = vadd.f32 %v4070, %v4110
  %v4135 = vadd.f32 %v4075, %v4110
  %v4136 = vadd.f32 %v4078, %v4110
  %v4137 = vadd.f32 %v4083, %v4110
  %v4138 = vadd.f32 %v4086, %v4110
  %v4139 = vadd.f32 %v4091, %v4110
  %v4140 = vadd.f32 %v4094, %v4110
  %v4141 = vadd.f32 %v4099, %v4110
  %v4142 = vadd.f32 %v4102, %v4110
  %4143 = vst.msk [vmem:[%s3] sm:$0xff] %vm92, %v4111
  %4144 = vst.msk [vmem:[%s3 + $0x8] sm:$0xff] %vm92, %v4112
  %4145 = vst.msk [vmem:[%s3 + $0x10] sm:$0xff] %vm92, %v4113
  %4146 = vst.msk [vmem:[%s3 + $0x18] sm:$0xff] %vm92, %v4114
  %4147 = vst.msk [vmem:[%s3 + $0x20] sm:$0xff] %vm92, %v4115
  %4148 = vst.msk [vmem:[%s3 + $0x28] sm:$0xff] %vm92, %v4116
  %4149 = vst.msk [vmem:[%s3 + $0x30] sm:$0xff] %vm92, %v4117
  %4150 = vst.msk [vmem:[%s3 + $0x38] sm:$0xff] %vm92, %v4118
  %4151 = vst.msk [vmem:[%s3 + $0x40] sm:$0xff] %vm92, %v4119
  %4152 = vst.msk [vmem:[%s3 + $0x48] sm:$0xff] %vm92, %v4120
  %4153 = vst.msk [vmem:[%s3 + $0x50] sm:$0xff] %vm92, %v4121
  %4154 = vst.msk [vmem:[%s3 + $0x58] sm:$0xff] %vm92, %v4122
  %4155 = vst.msk [vmem:[%s3 + $0x60] sm:$0xff] %vm92, %v4123
  %4156 = vst.msk [vmem:[%s3 + $0x68] sm:$0xff] %vm92, %v4124
  %4157 = vst.msk [vmem:[%s3 + $0x70] sm:$0xff] %vm92, %v4125
  %4158 = vst.msk [vmem:[%s3 + $0x78] sm:$0xff] %vm92, %v4126
  %4159 = vst.msk [vmem:[%s3 + $0x80] sm:$0xff] %vm92, %v4127
  %4160 = vst.msk [vmem:[%s3 + $0x88] sm:$0xff] %vm92, %v4128
  %4161 = vst.msk [vmem:[%s3 + $0x90] sm:$0xff] %vm92, %v4129
  %4162 = vst.msk [vmem:[%s3 + $0x98] sm:$0xff] %vm92, %v4130
  %4163 = vst.msk [vmem:[%s3 + $0xa0] sm:$0xff] %vm92, %v4131
  %4164 = vst.msk [vmem:[%s3 + $0xa8] sm:$0xff] %vm92, %v4132
  %4165 = vst.msk [vmem:[%s3 + $0xb0] sm:$0xff] %vm92, %v4133
  %4166 = vst.msk [vmem:[%s3 + $0xb8] sm:$0xff] %vm92, %v4134
  %4167 = vst.msk [vmem:[%s3 + $0xc0] sm:$0xff] %vm92, %v4135
  %4168 = vst.msk [vmem:[%s3 + $0xc8] sm:$0xff] %vm92, %v4136
  %4169 = vst.msk [vmem:[%s3 + $0xd0] sm:$0xff] %vm92, %v4137
  %4170 = vst.msk [vmem:[%s3 + $0xd8] sm:$0xff] %vm92, %v4138
  %4171 = vst.msk [vmem:[%s3 + $0xe0] sm:$0xff] %vm92, %v4139
  %4172 = vst.msk [vmem:[%s3 + $0xe8] sm:$0xff] %vm92, %v4140
  %4173 = vst.msk [vmem:[%s3 + $0xf0] sm:$0xff] %vm92, %v4141
  %4174 = vst.msk [vmem:[%s3 + $0xf8] sm:$0xff] %vm92, %v4142
  // Predicated region
  $region50: #{autoencoder_forward.1} parent=0 // pred_check
    _
  $region51: #{autoencoder_forward.1} parent=0 // pred_check_branch
    %4176 = sbr.rel (0) target = $region53
  $region52: #{autoencoder_forward.1} parent=0 // pred_region
    _
  $region53: #{autoencoder_forward.1} parent=0 // pred_fallthru
    _
  // Predicated region
  $region54: #{autoencoder_forward.1} parent=0 // pred_check
    _
  $region55: #{autoencoder_forward.1} parent=0 // pred_check_branch
    %4178 = sbr.rel (0) target = $region57
  $region56: #{autoencoder_forward.1} parent=0 // pred_region
    _
  $region57: #{autoencoder_forward.1} parent=0 // pred_fallthru
    _
  %4179 = vsyncmov [#allocation3]
  %s4180 = vpop.sfrf %4179
  %p4181 = scmp.eq.s32.totalorder %s4180, 0
  %p4182 = pneg %p4181
  %4184 = shalt.err (%p4182)
  %s4185 = scalar_lea.sflag [#allocation3], 1
  %4186 = vsyncmov %s4185
  %s4187 = vpop.sfrf %4186
  %p4188 = scmp.eq.s32.totalorder %s4187, 0
  %p4189 = pneg %p4188
  %4191 = shalt.err (%p4189)

</llo_original>
